<compile_context>
chip_gen: v6e
topology: v6e:2x2x1
jax: 0.10.0
libtpu: 0.0.40
codegen_flags: <defaults>
</compile_context>

<pallas_src>
import functools
import math

import jax
import jax.numpy as jnp
from jax.experimental import pallas as pl
from jax.experimental.pallas import tpu as pltpu

# ---- small synthetic DistilBERT config (structure preserved, sizes shrunk) ----
VOCAB = 50
MAX_POS = 16
HIDDEN = 32
N_HEADS = 4
HEAD_DIM = HIDDEN // N_HEADS
FFN = 64
N_LAYERS = 2
NUM_LABELS = 4
LN_EPS = 1e-12

_LAYER_PARAM_ORDER = (
    "wq", "bq", "wk", "bk", "wv", "bv", "wo", "bo",
    "ln1_g", "ln1_b", "w1", "b1", "w2", "b2", "ln2_g", "ln2_b",
)
_PER_LAYER = len(_LAYER_PARAM_ORDER)   # 16


# ---------------- in-kernel helpers ----------------
def _layer_norm(x, g, b, eps=LN_EPS):
    mu = jnp.mean(x, axis=-1, keepdims=True)
    var = jnp.mean((x - mu) ** 2, axis=-1, keepdims=True)
    return (x - mu) * jax.lax.rsqrt(var + eps) * g + b


def _gelu_exact(x):
    # matches torch.nn.functional.gelu (erf-based, non-approximate); kept exact
    # for HF parity (tanh-approx would route to EUP but changes numerics).
    return 0.5 * x * (1.0 + jax.lax.erf(x * (1.0 / math.sqrt(2.0))))


# ---------------- fused forward kernel (one sequence per grid step) ----------------
def fused_forward_kernel(*refs, n_layers, n_heads, seq):
    """refs: ids(SMEM), mask, word_emb, pos_emb, emb_ln_g, emb_ln_b,
             [16 per-layer params]*n_layers, cls_w, cls_b | logits_out | emb scratch."""
    n_fixed = 6
    ids_ref, mask_ref, wemb_ref, pemb_ref, eg_ref, eb_ref = refs[:n_fixed]
    layer_refs = [
        refs[n_fixed + i * _PER_LAYER: n_fixed + (i + 1) * _PER_LAYER]
        for i in range(n_layers)
    ]
    base = n_fixed + n_layers * _PER_LAYER
    cls_w_ref, cls_b_ref = refs[base], refs[base + 1]
    o_ref, emb_ref = refs[base + 2], refs[base + 3]

    S = seq
    H = wemb_ref.shape[1]
    hd = H // n_heads
    inv_sqrt = 1.0 / math.sqrt(hd)
    neg = jnp.finfo(jnp.float32).min
    b = pl.program_id(0)

    def dense(v, w_bf16, bias_f32):
        # bf16 MXU matmul with f32 accumulation; bias added in f32.
        return (jnp.dot(v.astype(jnp.bfloat16), w_bf16,
                        preferred_element_type=jnp.float32) + bias_f32)

    # --- embedding lookup: dynamic row gather from VMEM table (no one-hot) ---
    for t in range(S):                                   # static, S=8
        tok = ids_ref[b * S + t]                         # scalar from SMEM
        emb_ref[pl.ds(t, 1), :] = wemb_ref[pl.ds(tok, 1), :]
    word = emb_ref[...]                                  # (S, H) f32
    pos = pemb_ref[pl.ds(0, S), :]                       # (S, H) f32
    x = _layer_norm(word + pos, eg_ref[...], eb_ref[...])

    # hoisted once; shared by every layer and head (masked_fill(mask==0, finfo.min))
    mask0 = mask_ref[0] == 0.0                           # (1, S) bool

    # --- transformer layers (weights VMEM-resident, hiddens stay in vregs) ---
    for lr in layer_refs:
        (wq_r, bq_r, wk_r, bk_r, wv_r, bv_r, wo_r, bo_r,
         g1_r, b1_r, fw1_r, fb1_r, fw2_r, fb2_r, g2_r, b2_r) = lr

        x_b = x.astype(jnp.bfloat16)
        attn = jnp.zeros((S, H), jnp.float32)
        for h in range(n_heads):                         # static head loop, no lane slicing
            qh = jnp.dot(x_b, wq_r[h], preferred_element_type=jnp.float32) + bq_r[h]
            kh = jnp.dot(x_b, wk_r[h], preferred_element_type=jnp.float32) + bk_r[h]
            vh = jnp.dot(x_b, wv_r[h], preferred_element_type=jnp.float32) + bv_r[h]
            sc = jax.lax.dot_general(
                (qh * inv_sqrt).astype(jnp.bfloat16), kh.astype(jnp.bfloat16),
                (((1,), (1,)), ((), ())),
                preferred_element_type=jnp.float32)      # (S, S), f32
            sc = jnp.where(mask0, neg, sc)
            sc = sc - jnp.max(sc, axis=-1, keepdims=True)
            e = jnp.exp(sc)
            p = e * pl.reciprocal(jnp.sum(e, axis=-1, keepdims=True), approx=True)
            ctx = jnp.dot(p.astype(jnp.bfloat16), vh.astype(jnp.bfloat16),
                          preferred_element_type=jnp.float32)        # (S, hd)
            # fold head directly into the output projection (no concat)
            attn = attn + jnp.dot(ctx.astype(jnp.bfloat16), wo_r[h],
                                  preferred_element_type=jnp.float32)
        attn = attn + bo_r[...]

        h1 = _layer_norm(x + attn, g1_r[...], b1_r[...])              # sa_layer_norm
        ff = dense(_gelu_exact(dense(h1, fw1_r[...], fb1_r[...])), fw2_r[...], fb2_r[...])
        x = _layer_norm(h1 + ff, g2_r[...], b2_r[...])                # output_layer_norm

    # --- [CLS] token (row 0 of this sequence) -> classifier head ---
    logits = dense(x[0:1, :], cls_w_ref[...], cls_b_ref[...])         # (1, NUM_LABELS)
    o_ref[0] = logits.astype(o_ref.dtype)


# ---------------- wrapper ----------------
def distilbert_classifier_forward(params, input_ids, attention_mask):
    B, S = input_ids.shape
    ids = input_ids.reshape(B * S).astype(jnp.int32)                 # scalar-prefetch (SMEM)
    mask = attention_mask.astype(jnp.float32).reshape(B, 1, S)

    bf = jnp.bfloat16

    # layout plumbing (done outside the kernel, once per call):
    #   (H, H) -> (nh, H, hd) per-head QKV weights; (H, H) -> (nh, hd, H) Wo rows.
    def split_qkv_w(w):
        return w.reshape(HIDDEN, N_HEADS, HEAD_DIM).transpose(1, 0, 2).astype(bf)

    def split_qkv_b(bb):
        return bb.reshape(1, N_HEADS, HEAD_DIM).transpose(1, 0, 2)   # f32

    def split_o_w(w):
        return w.reshape(N_HEADS, HEAD_DIM, HIDDEN).astype(bf)

    flat_layer_params = []
    for lp in params["layers"]:
        flat_layer_params.extend([
            split_qkv_w(lp["wq"]), split_qkv_b(lp["bq"]),
            split_qkv_w(lp["wk"]), split_qkv_b(lp["bk"]),
            split_qkv_w(lp["wv"]), split_qkv_b(lp["bv"]),
            split_o_w(lp["wo"]), lp["bo"],
            lp["ln1_g"], lp["ln1_b"],
            lp["w1"].astype(bf), lp["b1"],
            lp["w2"].astype(bf), lp["b2"],
            lp["ln2_g"], lp["ln2_b"],
        ])

    tensor_inputs = [
        params["word_emb"], params["pos_emb"],
        params["emb_ln_g"], params["emb_ln_b"],
        *flat_layer_params,
        params["cls_w"].astype(bf), params["cls_b"],
    ]

    def full_spec(a):
        nd = a.ndim
        return pl.BlockSpec(a.shape, lambda b, ids, _nd=nd: (0,) * _nd)

    in_specs = ([pl.BlockSpec((1, 1, S), lambda b, ids: (b, 0, 0))]   # mask, per-sequence
                + [full_spec(a) for a in tensor_inputs])              # weights, constant block

    grid_spec = pltpu.PrefetchScalarGridSpec(
        num_scalar_prefetch=1,
        grid=(B,),
        in_specs=in_specs,
        out_specs=pl.BlockSpec((1, 1, NUM_LABELS), lambda b, ids: (b, 0, 0)),
        scratch_shapes=[pltpu.VMEM((S, HIDDEN), jnp.float32)],        # gathered embeddings
    )

    kernel = functools.partial(
        fused_forward_kernel, n_layers=N_LAYERS, n_heads=N_HEADS, seq=S)

    out = pl.pallas_call(
        kernel,
        grid_spec=grid_spec,
        out_shape=jax.ShapeDtypeStruct((B, 1, NUM_LABELS), jnp.float32),
        compiler_params=pltpu.CompilerParams(dimension_semantics=("parallel",)),
    )(ids, mask, *tensor_inputs)
    return out.reshape(B, NUM_LABELS)


# ---------------- parameters (deterministic, synthetic, f32 "torch-like") ----------------
def _dense_init(key, fan_in, fan_out):
    w = jax.random.normal(key, (fan_in, fan_out), jnp.float32) * 0.02
    b = jnp.zeros((1, fan_out), jnp.float32)
    return w, b


def init_params(key):
    keys = jax.random.split(key, 3 + N_LAYERS)
    params = {
        "word_emb": jax.random.normal(keys[0], (VOCAB, HIDDEN), jnp.float32) * 0.02,
        "pos_emb": jax.random.normal(keys[1], (MAX_POS, HIDDEN), jnp.float32) * 0.02,
        "emb_ln_g": jnp.ones((1, HIDDEN), jnp.float32),
        "emb_ln_b": jnp.zeros((1, HIDDEN), jnp.float32),
    }
    cw, cb = _dense_init(keys[2], HIDDEN, NUM_LABELS)
    params["cls_w"], params["cls_b"] = cw, cb

    layers = []
    for i in range(N_LAYERS):
        lk = jax.random.split(keys[3 + i], 6)
        wq, bq = _dense_init(lk[0], HIDDEN, HIDDEN)
        wk, bk = _dense_init(lk[1], HIDDEN, HIDDEN)
        wv, bv = _dense_init(lk[2], HIDDEN, HIDDEN)
        wo, bo = _dense_init(lk[3], HIDDEN, HIDDEN)
        w1, b1 = _dense_init(lk[4], HIDDEN, FFN)
        w2, b2 = _dense_init(lk[5], FFN, HIDDEN)
        layers.append({
            "wq": wq, "bq": bq, "wk": wk, "bk": bk, "wv": wv, "bv": bv,
            "wo": wo, "bo": bo,
            "ln1_g": jnp.ones((1, HIDDEN), jnp.float32),
            "ln1_b": jnp.zeros((1, HIDDEN), jnp.float32),
            "w1": w1, "b1": b1, "w2": w2, "b2": b2,
            "ln2_g": jnp.ones((1, HIDDEN), jnp.float32),
            "ln2_b": jnp.zeros((1, HIDDEN), jnp.float32),
        })
    params["layers"] = layers
    return params


if __name__ == "__main__":
    root = jax.random.PRNGKey(0)
    k_ids, k_params = jax.random.split(root)

    B, S = 2, 8
    input_ids = jax.random.randint(k_ids, (B, S), 0, VOCAB, dtype=jnp.int32)
    attention_mask = jnp.array(
        [[1] * S,
         [1] * (S - 3) + [0] * 3], dtype=jnp.int32)

    params = init_params(k_params)
    logits = distilbert_classifier_forward(params, input_ids, attention_mask)
    logits = jax.block_until_ready(logits)
    assert logits.shape == (B, NUM_LABELS) and logits.dtype == jnp.float32
    print("KERNEL_OK")
</pallas_src>

<mosaic_0001>
module attributes {stable_mosaic.version = 11 : i64} {
  func.func @fused_forward_kernel(%arg0: i32, %arg1: memref<16xi32, #tpu.memory_space<smem>>, %arg2: memref<1x1x8xf32, #tpu.memory_space<vmem>>, %arg3: memref<50x32xf32, #tpu.memory_space<vmem>>, %arg4: memref<16x32xf32, #tpu.memory_space<vmem>>, %arg5: memref<1x32xf32, #tpu.memory_space<vmem>>, %arg6: memref<1x32xf32, #tpu.memory_space<vmem>>, %arg7: memref<4x32x8xbf16, #tpu.memory_space<vmem>>, %arg8: memref<4x1x8xf32, #tpu.memory_space<vmem>>, %arg9: memref<4x32x8xbf16, #tpu.memory_space<vmem>>, %arg10: memref<4x1x8xf32, #tpu.memory_space<vmem>>, %arg11: memref<4x32x8xbf16, #tpu.memory_space<vmem>>, %arg12: memref<4x1x8xf32, #tpu.memory_space<vmem>>, %arg13: memref<4x8x32xbf16, #tpu.memory_space<vmem>>, %arg14: memref<1x32xf32, #tpu.memory_space<vmem>>, %arg15: memref<1x32xf32, #tpu.memory_space<vmem>>, %arg16: memref<1x32xf32, #tpu.memory_space<vmem>>, %arg17: memref<32x64xbf16, #tpu.memory_space<vmem>>, %arg18: memref<1x64xf32, #tpu.memory_space<vmem>>, %arg19: memref<64x32xbf16, #tpu.memory_space<vmem>>, %arg20: memref<1x32xf32, #tpu.memory_space<vmem>>, %arg21: memref<1x32xf32, #tpu.memory_space<vmem>>, %arg22: memref<1x32xf32, #tpu.memory_space<vmem>>, %arg23: memref<4x32x8xbf16, #tpu.memory_space<vmem>>, %arg24: memref<4x1x8xf32, #tpu.memory_space<vmem>>, %arg25: memref<4x32x8xbf16, #tpu.memory_space<vmem>>, %arg26: memref<4x1x8xf32, #tpu.memory_space<vmem>>, %arg27: memref<4x32x8xbf16, #tpu.memory_space<vmem>>, %arg28: memref<4x1x8xf32, #tpu.memory_space<vmem>>, %arg29: memref<4x8x32xbf16, #tpu.memory_space<vmem>>, %arg30: memref<1x32xf32, #tpu.memory_space<vmem>>, %arg31: memref<1x32xf32, #tpu.memory_space<vmem>>, %arg32: memref<1x32xf32, #tpu.memory_space<vmem>>, %arg33: memref<32x64xbf16, #tpu.memory_space<vmem>>, %arg34: memref<1x64xf32, #tpu.memory_space<vmem>>, %arg35: memref<64x32xbf16, #tpu.memory_space<vmem>>, %arg36: memref<1x32xf32, #tpu.memory_space<vmem>>, %arg37: memref<1x32xf32, #tpu.memory_space<vmem>>, %arg38: memref<1x32xf32, #tpu.memory_space<vmem>>, %arg39: memref<32x4xbf16, #tpu.memory_space<vmem>>, %arg40: memref<1x4xf32, #tpu.memory_space<vmem>>, %arg41: memref<1x1x4xf32, #tpu.memory_space<vmem>>, %arg42: memref<8x32xf32, #tpu.memory_space<vmem>>) attributes {dimension_semantics = [#tpu.dimension_semantics<parallel>], iteration_bounds = array<i64: 2>, scalar_prefetch = 1 : i64, scratch_operands = 1 : i64, tpu.core_type = #tpu.core_type<tc>, window_params = [{transform_indices = @transform_0, window_bounds = array<i64: 1, 1, 8>}, {pipeline_mode = #tpu.pipeline_mode<synchronous>, transform_indices = @transform_1, window_bounds = array<i64: 50, 32>}, {pipeline_mode = #tpu.pipeline_mode<synchronous>, transform_indices = @transform_2, window_bounds = array<i64: 16, 32>}, {pipeline_mode = #tpu.pipeline_mode<synchronous>, transform_indices = @transform_3, window_bounds = array<i64: 1, 32>}, {pipeline_mode = #tpu.pipeline_mode<synchronous>, transform_indices = @transform_4, window_bounds = array<i64: 1, 32>}, {pipeline_mode = #tpu.pipeline_mode<synchronous>, transform_indices = @transform_5, window_bounds = array<i64: 4, 32, 8>}, {pipeline_mode = #tpu.pipeline_mode<synchronous>, transform_indices = @transform_6, window_bounds = array<i64: 4, 1, 8>}, {pipeline_mode = #tpu.pipeline_mode<synchronous>, transform_indices = @transform_7, window_bounds = array<i64: 4, 32, 8>}, {pipeline_mode = #tpu.pipeline_mode<synchronous>, transform_indices = @transform_8, window_bounds = array<i64: 4, 1, 8>}, {pipeline_mode = #tpu.pipeline_mode<synchronous>, transform_indices = @transform_9, window_bounds = array<i64: 4, 32, 8>}, {pipeline_mode = #tpu.pipeline_mode<synchronous>, transform_indices = @transform_10, window_bounds = array<i64: 4, 1, 8>}, {pipeline_mode = #tpu.pipeline_mode<synchronous>, transform_indices = @transform_11, window_bounds = array<i64: 4, 8, 32>}, {pipeline_mode = #tpu.pipeline_mode<synchronous>, transform_indices = @transform_12, window_bounds = array<i64: 1, 32>}, {pipeline_mode = #tpu.pipeline_mode<synchronous>, transform_indices = @transform_13, window_bounds = array<i64: 1, 32>}, {pipeline_mode = #tpu.pipeline_mode<synchronous>, transform_indices = @transform_14, window_bounds = array<i64: 1, 32>}, {pipeline_mode = #tpu.pipeline_mode<synchronous>, transform_indices = @transform_15, window_bounds = array<i64: 32, 64>}, {pipeline_mode = #tpu.pipeline_mode<synchronous>, transform_indices = @transform_16, window_bounds = array<i64: 1, 64>}, {pipeline_mode = #tpu.pipeline_mode<synchronous>, transform_indices = @transform_17, window_bounds = array<i64: 64, 32>}, {pipeline_mode = #tpu.pipeline_mode<synchronous>, transform_indices = @transform_18, window_bounds = array<i64: 1, 32>}, {pipeline_mode = #tpu.pipeline_mode<synchronous>, transform_indices = @transform_19, window_bounds = array<i64: 1, 32>}, {pipeline_mode = #tpu.pipeline_mode<synchronous>, transform_indices = @transform_20, window_bounds = array<i64: 1, 32>}, {pipeline_mode = #tpu.pipeline_mode<synchronous>, transform_indices = @transform_21, window_bounds = array<i64: 4, 32, 8>}, {pipeline_mode = #tpu.pipeline_mode<synchronous>, transform_indices = @transform_22, window_bounds = array<i64: 4, 1, 8>}, {pipeline_mode = #tpu.pipeline_mode<synchronous>, transform_indices = @transform_23, window_bounds = array<i64: 4, 32, 8>}, {pipeline_mode = #tpu.pipeline_mode<synchronous>, transform_indices = @transform_24, window_bounds = array<i64: 4, 1, 8>}, {pipeline_mode = #tpu.pipeline_mode<synchronous>, transform_indices = @transform_25, window_bounds = array<i64: 4, 32, 8>}, {pipeline_mode = #tpu.pipeline_mode<synchronous>, transform_indices = @transform_26, window_bounds = array<i64: 4, 1, 8>}, {pipeline_mode = #tpu.pipeline_mode<synchronous>, transform_indices = @transform_27, window_bounds = array<i64: 4, 8, 32>}, {pipeline_mode = #tpu.pipeline_mode<synchronous>, transform_indices = @transform_28, window_bounds = array<i64: 1, 32>}, {pipeline_mode = #tpu.pipeline_mode<synchronous>, transform_indices = @transform_29, window_bounds = array<i64: 1, 32>}, {pipeline_mode = #tpu.pipeline_mode<synchronous>, transform_indices = @transform_30, window_bounds = array<i64: 1, 32>}, {pipeline_mode = #tpu.pipeline_mode<synchronous>, transform_indices = @transform_31, window_bounds = array<i64: 32, 64>}, {pipeline_mode = #tpu.pipeline_mode<synchronous>, transform_indices = @transform_32, window_bounds = array<i64: 1, 64>}, {pipeline_mode = #tpu.pipeline_mode<synchronous>, transform_indices = @transform_33, window_bounds = array<i64: 64, 32>}, {pipeline_mode = #tpu.pipeline_mode<synchronous>, transform_indices = @transform_34, window_bounds = array<i64: 1, 32>}, {pipeline_mode = #tpu.pipeline_mode<synchronous>, transform_indices = @transform_35, window_bounds = array<i64: 1, 32>}, {pipeline_mode = #tpu.pipeline_mode<synchronous>, transform_indices = @transform_36, window_bounds = array<i64: 1, 32>}, {pipeline_mode = #tpu.pipeline_mode<synchronous>, transform_indices = @transform_37, window_bounds = array<i64: 32, 4>}, {pipeline_mode = #tpu.pipeline_mode<synchronous>, transform_indices = @transform_38, window_bounds = array<i64: 1, 4>}, {transform_indices = @transform_39, window_bounds = array<i64: 1, 1, 4>}]} {
    %c8_i32 = arith.constant 8 : i32
    %0 = arith.muli %arg0, %c8_i32 : i32
    %c0_i32 = arith.constant 0 : i32
    %1 = arith.addi %0, %c0_i32 : i32
    %2 = arith.index_cast %1 : i32 to index
    %3 = memref.load %arg1[%2] : memref<16xi32, #tpu.memory_space<smem>>
    %4 = arith.index_cast %3 : i32 to index
    %c0 = arith.constant 0 : index
    %5 = vector.load %arg3[%4, %c0] : memref<50x32xf32, #tpu.memory_space<vmem>>, vector<1x32xf32>
    %c0_0 = arith.constant 0 : index
    %c0_1 = arith.constant 0 : index
    %6 = vector.load %arg42[%c0_0, %c0_1] : memref<8x32xf32, #tpu.memory_space<vmem>>, vector<1x32xf32>
    tpu.vector_store %arg42[%c0_0, %c0_1], %5 {strides = array<i32>} : memref<8x32xf32, #tpu.memory_space<vmem>>, vector<1x32xf32>,
    %c8_i32_2 = arith.constant 8 : i32
    %7 = arith.muli %arg0, %c8_i32_2 : i32
    %c1_i32 = arith.constant 1 : i32
    %8 = arith.addi %7, %c1_i32 : i32
    %9 = arith.index_cast %8 : i32 to index
    %10 = memref.load %arg1[%9] : memref<16xi32, #tpu.memory_space<smem>>
    %11 = arith.index_cast %10 : i32 to index
    %c0_3 = arith.constant 0 : index
    %12 = vector.load %arg3[%11, %c0_3] : memref<50x32xf32, #tpu.memory_space<vmem>>, vector<1x32xf32>
    %c1 = arith.constant 1 : index
    %c0_4 = arith.constant 0 : index
    %13 = vector.load %arg42[%c1, %c0_4] : memref<8x32xf32, #tpu.memory_space<vmem>>, vector<1x32xf32>
    tpu.vector_store %arg42[%c1, %c0_4], %12 {strides = array<i32>} : memref<8x32xf32, #tpu.memory_space<vmem>>, vector<1x32xf32>,
    %c8_i32_5 = arith.constant 8 : i32
    %14 = arith.muli %arg0, %c8_i32_5 : i32
    %c2_i32 = arith.constant 2 : i32
    %15 = arith.addi %14, %c2_i32 : i32
    %16 = arith.index_cast %15 : i32 to index
    %17 = memref.load %arg1[%16] : memref<16xi32, #tpu.memory_space<smem>>
    %18 = arith.index_cast %17 : i32 to index
    %c0_6 = arith.constant 0 : index
    %19 = vector.load %arg3[%18, %c0_6] : memref<50x32xf32, #tpu.memory_space<vmem>>, vector<1x32xf32>
    %c2 = arith.constant 2 : index
    %c0_7 = arith.constant 0 : index
    %20 = vector.load %arg42[%c2, %c0_7] : memref<8x32xf32, #tpu.memory_space<vmem>>, vector<1x32xf32>
    tpu.vector_store %arg42[%c2, %c0_7], %19 {strides = array<i32>} : memref<8x32xf32, #tpu.memory_space<vmem>>, vector<1x32xf32>,
    %c8_i32_8 = arith.constant 8 : i32
    %21 = arith.muli %arg0, %c8_i32_8 : i32
    %c3_i32 = arith.constant 3 : i32
    %22 = arith.addi %21, %c3_i32 : i32
    %23 = arith.index_cast %22 : i32 to index
    %24 = memref.load %arg1[%23] : memref<16xi32, #tpu.memory_space<smem>>
    %25 = arith.index_cast %24 : i32 to index
    %c0_9 = arith.constant 0 : index
    %26 = vector.load %arg3[%25, %c0_9] : memref<50x32xf32, #tpu.memory_space<vmem>>, vector<1x32xf32>
    %c3 = arith.constant 3 : index
    %c0_10 = arith.constant 0 : index
    %27 = vector.load %arg42[%c3, %c0_10] : memref<8x32xf32, #tpu.memory_space<vmem>>, vector<1x32xf32>
    tpu.vector_store %arg42[%c3, %c0_10], %26 {strides = array<i32>} : memref<8x32xf32, #tpu.memory_space<vmem>>, vector<1x32xf32>,
    %c8_i32_11 = arith.constant 8 : i32
    %28 = arith.muli %arg0, %c8_i32_11 : i32
    %c4_i32 = arith.constant 4 : i32
    %29 = arith.addi %28, %c4_i32 : i32
    %30 = arith.index_cast %29 : i32 to index
    %31 = memref.load %arg1[%30] : memref<16xi32, #tpu.memory_space<smem>>
    %32 = arith.index_cast %31 : i32 to index
    %c0_12 = arith.constant 0 : index
    %33 = vector.load %arg3[%32, %c0_12] : memref<50x32xf32, #tpu.memory_space<vmem>>, vector<1x32xf32>
    %c4 = arith.constant 4 : index
    %c0_13 = arith.constant 0 : index
    %34 = vector.load %arg42[%c4, %c0_13] : memref<8x32xf32, #tpu.memory_space<vmem>>, vector<1x32xf32>
    tpu.vector_store %arg42[%c4, %c0_13], %33 {strides = array<i32>} : memref<8x32xf32, #tpu.memory_space<vmem>>, vector<1x32xf32>,
    %c8_i32_14 = arith.constant 8 : i32
    %35 = arith.muli %arg0, %c8_i32_14 : i32
    %c5_i32 = arith.constant 5 : i32
    %36 = arith.addi %35, %c5_i32 : i32
    %37 = arith.index_cast %36 : i32 to index
    %38 = memref.load %arg1[%37] : memref<16xi32, #tpu.memory_space<smem>>
    %39 = arith.index_cast %38 : i32 to index
    %c0_15 = arith.constant 0 : index
    %40 = vector.load %arg3[%39, %c0_15] : memref<50x32xf32, #tpu.memory_space<vmem>>, vector<1x32xf32>
    %c5 = arith.constant 5 : index
    %c0_16 = arith.constant 0 : index
    %41 = vector.load %arg42[%c5, %c0_16] : memref<8x32xf32, #tpu.memory_space<vmem>>, vector<1x32xf32>
    tpu.vector_store %arg42[%c5, %c0_16], %40 {strides = array<i32>} : memref<8x32xf32, #tpu.memory_space<vmem>>, vector<1x32xf32>,
    %c8_i32_17 = arith.constant 8 : i32
    %42 = arith.muli %arg0, %c8_i32_17 : i32
    %c6_i32 = arith.constant 6 : i32
    %43 = arith.addi %42, %c6_i32 : i32
    %44 = arith.index_cast %43 : i32 to index
    %45 = memref.load %arg1[%44] : memref<16xi32, #tpu.memory_space<smem>>
    %46 = arith.index_cast %45 : i32 to index
    %c0_18 = arith.constant 0 : index
    %47 = vector.load %arg3[%46, %c0_18] : memref<50x32xf32, #tpu.memory_space<vmem>>, vector<1x32xf32>
    %c6 = arith.constant 6 : index
    %c0_19 = arith.constant 0 : index
    %48 = vector.load %arg42[%c6, %c0_19] : memref<8x32xf32, #tpu.memory_space<vmem>>, vector<1x32xf32>
    tpu.vector_store %arg42[%c6, %c0_19], %47 {strides = array<i32>} : memref<8x32xf32, #tpu.memory_space<vmem>>, vector<1x32xf32>,
    %c8_i32_20 = arith.constant 8 : i32
    %49 = arith.muli %arg0, %c8_i32_20 : i32
    %c7_i32 = arith.constant 7 : i32
    %50 = arith.addi %49, %c7_i32 : i32
    %51 = arith.index_cast %50 : i32 to index
    %52 = memref.load %arg1[%51] : memref<16xi32, #tpu.memory_space<smem>>
    %53 = arith.index_cast %52 : i32 to index
    %c0_21 = arith.constant 0 : index
    %54 = vector.load %arg3[%53, %c0_21] : memref<50x32xf32, #tpu.memory_space<vmem>>, vector<1x32xf32>
    %c7 = arith.constant 7 : index
    %c0_22 = arith.constant 0 : index
    %55 = vector.load %arg42[%c7, %c0_22] : memref<8x32xf32, #tpu.memory_space<vmem>>, vector<1x32xf32>
    tpu.vector_store %arg42[%c7, %c0_22], %54 {strides = array<i32>} : memref<8x32xf32, #tpu.memory_space<vmem>>, vector<1x32xf32>,
    %c0_23 = arith.constant 0 : index
    %c0_24 = arith.constant 0 : index
    %56 = vector.load %arg42[%c0_23, %c0_24] : memref<8x32xf32, #tpu.memory_space<vmem>>, vector<8x32xf32>
    %c0_25 = arith.constant 0 : index
    %c0_26 = arith.constant 0 : index
    %57 = vector.load %arg4[%c0_25, %c0_26] : memref<16x32xf32, #tpu.memory_space<vmem>>, vector<8x32xf32>
    %58 = arith.addf %56, %57 : vector<8x32xf32>
    %c0_27 = arith.constant 0 : index
    %c0_28 = arith.constant 0 : index
    %59 = vector.load %arg5[%c0_27, %c0_28] : memref<1x32xf32, #tpu.memory_space<vmem>>, vector<1x32xf32>
    %c0_29 = arith.constant 0 : index
    %c0_30 = arith.constant 0 : index
    %60 = vector.load %arg6[%c0_29, %c0_30] : memref<1x32xf32, #tpu.memory_space<vmem>>, vector<1x32xf32>
    %cst = arith.constant dense<0.000000e+00> : vector<8xf32>
    %61 = vector.multi_reduction <add>, %58, %cst [1] : vector<8x32xf32> to vector<8xf32>
    %62 = vector.shape_cast %61 : vector<8xf32> to vector<8x1xf32>
    %cst_31 = arith.constant 3.200000e+01 : f32
    %63 = vector.broadcast %cst_31 : f32 to vector<8x1xf32>
    %64 = arith.divf %62, %63 : vector<8x1xf32>
    %65 = vector.broadcast %64 : vector<8x1xf32> to vector<8x32xf32>
    %66 = arith.subf %58, %65 : vector<8x32xf32>
    %67 = arith.mulf %66, %66 : vector<8x32xf32>
    %cst_32 = arith.constant dense<0.000000e+00> : vector<8xf32>
    %68 = vector.multi_reduction <add>, %67, %cst_32 [1] : vector<8x32xf32> to vector<8xf32>
    %69 = vector.shape_cast %68 : vector<8xf32> to vector<8x1xf32>
    %cst_33 = arith.constant 3.200000e+01 : f32
    %70 = vector.broadcast %cst_33 : f32 to vector<8x1xf32>
    %71 = arith.divf %69, %70 : vector<8x1xf32>
    %72 = vector.broadcast %64 : vector<8x1xf32> to vector<8x32xf32>
    %73 = arith.subf %58, %72 : vector<8x32xf32>
    %cst_34 = arith.constant 9.99999996E-13 : f32
    %74 = vector.broadcast %cst_34 : f32 to vector<8x1xf32>
    %75 = arith.addf %71, %74 : vector<8x1xf32>
    %76 = math.rsqrt %75 : vector<8x1xf32>
    %77 = vector.broadcast %76 : vector<8x1xf32> to vector<8x32xf32>
    %78 = arith.mulf %73, %77 : vector<8x32xf32>
    %79 = vector.broadcast %59 : vector<1x32xf32> to vector<8x32xf32>
    %80 = arith.mulf %78, %79 : vector<8x32xf32>
    %81 = vector.broadcast %60 : vector<1x32xf32> to vector<8x32xf32>
    %82 = arith.addf %80, %81 : vector<8x32xf32>
    %c0_35 = arith.constant 0 : index
    %c0_36 = arith.constant 0 : index
    %c0_37 = arith.constant 0 : index
    %83 = vector.load %arg2[%c0_35, %c0_36, %c0_37] : memref<1x1x8xf32, #tpu.memory_space<vmem>>, vector<1x1x8xf32>
    %84 = vector.shape_cast %83 : vector<1x1x8xf32> to vector<1x8xf32>
    %cst_38 = arith.constant 0.000000e+00 : f32
    %85 = vector.broadcast %cst_38 : f32 to vector<1x8xf32>
    %86 = arith.cmpf oeq, %84, %85 : vector<1x8xf32>
    %87 = arith.truncf %82 : vector<8x32xf32> to vector<8x32xbf16>
    %cst_39 = arith.constant 0.000000e+00 : f32
    %88 = vector.broadcast %cst_39 : f32 to vector<8x32xf32>
    %c0_40 = arith.constant 0 : index
    %c0_41 = arith.constant 0 : index
    %c0_42 = arith.constant 0 : index
    %89 = vector.load %arg7[%c0_40, %c0_41, %c0_42] : memref<4x32x8xbf16, #tpu.memory_space<vmem>>, vector<1x32x8xbf16>
    %90 = vector.shape_cast %89 : vector<1x32x8xbf16> to vector<32x8xbf16>
    %cst_43 = arith.constant dense<0.000000e+00> : vector<8x8xf32>
    %91 = tpu.matmul %87, %90, %cst_43 {dimension_numbers = #tpu.dot_dimension_numbers<[1], [0], [0], [1], [0, 0, 1, 1], [], []>} : vector<8x32xbf16>, vector<32x8xbf16>, vector<8x8xf32> -> vector<8x8xf32>
    %c0_44 = arith.constant 0 : index
    %c0_45 = arith.constant 0 : index
    %c0_46 = arith.constant 0 : index
    %92 = vector.load %arg8[%c0_44, %c0_45, %c0_46] : memref<4x1x8xf32, #tpu.memory_space<vmem>>, vector<1x1x8xf32>
    %93 = vector.shape_cast %92 : vector<1x1x8xf32> to vector<1x8xf32>
    %94 = vector.broadcast %93 : vector<1x8xf32> to vector<8x8xf32>
    %95 = arith.addf %91, %94 : vector<8x8xf32>
    %c0_47 = arith.constant 0 : index
    %c0_48 = arith.constant 0 : index
    %c0_49 = arith.constant 0 : index
    %96 = vector.load %arg9[%c0_47, %c0_48, %c0_49] : memref<4x32x8xbf16, #tpu.memory_space<vmem>>, vector<1x32x8xbf16>
    %97 = vector.shape_cast %96 : vector<1x32x8xbf16> to vector<32x8xbf16>
    %cst_50 = arith.constant dense<0.000000e+00> : vector<8x8xf32>
    %98 = tpu.matmul %87, %97, %cst_50 {dimension_numbers = #tpu.dot_dimension_numbers<[1], [0], [0], [1], [0, 0, 1, 1], [], []>} : vector<8x32xbf16>, vector<32x8xbf16>, vector<8x8xf32> -> vector<8x8xf32>
    %c0_51 = arith.constant 0 : index
    %c0_52 = arith.constant 0 : index
    %c0_53 = arith.constant 0 : index
    %99 = vector.load %arg10[%c0_51, %c0_52, %c0_53] : memref<4x1x8xf32, #tpu.memory_space<vmem>>, vector<1x1x8xf32>
    %100 = vector.shape_cast %99 : vector<1x1x8xf32> to vector<1x8xf32>
    %101 = vector.broadcast %100 : vector<1x8xf32> to vector<8x8xf32>
    %102 = arith.addf %98, %101 : vector<8x8xf32>
    %c0_54 = arith.constant 0 : index
    %c0_55 = arith.constant 0 : index
    %c0_56 = arith.constant 0 : index
    %103 = vector.load %arg11[%c0_54, %c0_55, %c0_56] : memref<4x32x8xbf16, #tpu.memory_space<vmem>>, vector<1x32x8xbf16>
    %104 = vector.shape_cast %103 : vector<1x32x8xbf16> to vector<32x8xbf16>
    %cst_57 = arith.constant dense<0.000000e+00> : vector<8x8xf32>
    %105 = tpu.matmul %87, %104, %cst_57 {dimension_numbers = #tpu.dot_dimension_numbers<[1], [0], [0], [1], [0, 0, 1, 1], [], []>} : vector<8x32xbf16>, vector<32x8xbf16>, vector<8x8xf32> -> vector<8x8xf32>
    %c0_58 = arith.constant 0 : index
    %c0_59 = arith.constant 0 : index
    %c0_60 = arith.constant 0 : index
    %106 = vector.load %arg12[%c0_58, %c0_59, %c0_60] : memref<4x1x8xf32, #tpu.memory_space<vmem>>, vector<1x1x8xf32>
    %107 = vector.shape_cast %106 : vector<1x1x8xf32> to vector<1x8xf32>
    %108 = vector.broadcast %107 : vector<1x8xf32> to vector<8x8xf32>
    %109 = arith.addf %105, %108 : vector<8x8xf32>
    %cst_61 = arith.constant 0.353553385 : f32
    %110 = vector.broadcast %cst_61 : f32 to vector<8x8xf32>
    %111 = arith.mulf %95, %110 : vector<8x8xf32>
    %112 = arith.truncf %111 : vector<8x8xf32> to vector<8x8xbf16>
    %113 = arith.truncf %102 : vector<8x8xf32> to vector<8x8xbf16>
    %cst_62 = arith.constant dense<0.000000e+00> : vector<8x8xf32>
    %114 = tpu.matmul %112, %113, %cst_62 {dimension_numbers = #tpu.dot_dimension_numbers<[1], [1], [0], [0], [0, 0, 1, 0], [], []>} : vector<8x8xbf16>, vector<8x8xbf16>, vector<8x8xf32> -> vector<8x8xf32>
    %cst_63 = arith.constant -3.40282347E+38 : f32
    %115 = vector.shape_cast %86 : vector<1x8xi1> to vector<1x8xi1>
    %116 = vector.broadcast %115 : vector<1x8xi1> to vector<8x8xi1>
    %117 = vector.broadcast %cst_63 : f32 to vector<8x8xf32>
    %118 = arith.select %116, %117, %114 : vector<8x8xi1>, vector<8x8xf32>
    %cst_64 = arith.constant dense<0xFF800000> : vector<8xf32>
    %119 = vector.multi_reduction <maximumf>, %118, %cst_64 [1] : vector<8x8xf32> to vector<8xf32>
    %120 = vector.shape_cast %119 : vector<8xf32> to vector<8x1xf32>
    %121 = vector.broadcast %120 : vector<8x1xf32> to vector<8x8xf32>
    %122 = arith.subf %118, %121 : vector<8x8xf32>
    %123 = math.exp %122 : vector<8x8xf32>
    %cst_65 = arith.constant dense<0.000000e+00> : vector<8xf32>
    %124 = vector.multi_reduction <add>, %123, %cst_65 [1] : vector<8x8xf32> to vector<8xf32>
    %125 = vector.shape_cast %124 : vector<8xf32> to vector<8x1xf32>
    %126 = tpu.reciprocal %125 {approx = true} : vector<8x1xf32> -> vector<8x1xf32>
    %127 = vector.broadcast %126 : vector<8x1xf32> to vector<8x8xf32>
    %128 = arith.mulf %123, %127 : vector<8x8xf32>
    %129 = arith.truncf %128 : vector<8x8xf32> to vector<8x8xbf16>
    %130 = arith.truncf %109 : vector<8x8xf32> to vector<8x8xbf16>
    %cst_66 = arith.constant dense<0.000000e+00> : vector<8x8xf32>
    %131 = tpu.matmul %129, %130, %cst_66 {dimension_numbers = #tpu.dot_dimension_numbers<[1], [0], [0], [1], [0, 0, 1, 1], [], []>} : vector<8x8xbf16>, vector<8x8xbf16>, vector<8x8xf32> -> vector<8x8xf32>
    %132 = arith.truncf %131 : vector<8x8xf32> to vector<8x8xbf16>
    %c0_67 = arith.constant 0 : index
    %c0_68 = arith.constant 0 : index
    %c0_69 = arith.constant 0 : index
    %133 = vector.load %arg13[%c0_67, %c0_68, %c0_69] : memref<4x8x32xbf16, #tpu.memory_space<vmem>>, vector<1x8x32xbf16>
    %134 = vector.shape_cast %133 : vector<1x8x32xbf16> to vector<8x32xbf16>
    %cst_70 = arith.constant dense<0.000000e+00> : vector<8x32xf32>
    %135 = tpu.matmul %132, %134, %cst_70 {dimension_numbers = #tpu.dot_dimension_numbers<[1], [0], [0], [1], [0, 0, 1, 1], [], []>} : vector<8x8xbf16>, vector<8x32xbf16>, vector<8x32xf32> -> vector<8x32xf32>
    %136 = arith.addf %88, %135 : vector<8x32xf32>
    %c1_71 = arith.constant 1 : index
    %c0_72 = arith.constant 0 : index
    %c0_73 = arith.constant 0 : index
    %137 = vector.load %arg7[%c1_71, %c0_72, %c0_73] : memref<4x32x8xbf16, #tpu.memory_space<vmem>>, vector<1x32x8xbf16>
    %138 = vector.shape_cast %137 : vector<1x32x8xbf16> to vector<32x8xbf16>
    %cst_74 = arith.constant dense<0.000000e+00> : vector<8x8xf32>
    %139 = tpu.matmul %87, %138, %cst_74 {dimension_numbers = #tpu.dot_dimension_numbers<[1], [0], [0], [1], [0, 0, 1, 1], [], []>} : vector<8x32xbf16>, vector<32x8xbf16>, vector<8x8xf32> -> vector<8x8xf32>
    %c1_75 = arith.constant 1 : index
    %c0_76 = arith.constant 0 : index
    %c0_77 = arith.constant 0 : index
    %140 = vector.load %arg8[%c1_75, %c0_76, %c0_77] : memref<4x1x8xf32, #tpu.memory_space<vmem>>, vector<1x1x8xf32>
    %141 = vector.shape_cast %140 : vector<1x1x8xf32> to vector<1x8xf32>
    %142 = vector.broadcast %141 : vector<1x8xf32> to vector<8x8xf32>
    %143 = arith.addf %139, %142 : vector<8x8xf32>
    %c1_78 = arith.constant 1 : index
    %c0_79 = arith.constant 0 : index
    %c0_80 = arith.constant 0 : index
    %144 = vector.load %arg9[%c1_78, %c0_79, %c0_80] : memref<4x32x8xbf16, #tpu.memory_space<vmem>>, vector<1x32x8xbf16>
    %145 = vector.shape_cast %144 : vector<1x32x8xbf16> to vector<32x8xbf16>
    %cst_81 = arith.constant dense<0.000000e+00> : vector<8x8xf32>
    %146 = tpu.matmul %87, %145, %cst_81 {dimension_numbers = #tpu.dot_dimension_numbers<[1], [0], [0], [1], [0, 0, 1, 1], [], []>} : vector<8x32xbf16>, vector<32x8xbf16>, vector<8x8xf32> -> vector<8x8xf32>
    %c1_82 = arith.constant 1 : index
    %c0_83 = arith.constant 0 : index
    %c0_84 = arith.constant 0 : index
    %147 = vector.load %arg10[%c1_82, %c0_83, %c0_84] : memref<4x1x8xf32, #tpu.memory_space<vmem>>, vector<1x1x8xf32>
    %148 = vector.shape_cast %147 : vector<1x1x8xf32> to vector<1x8xf32>
    %149 = vector.broadcast %148 : vector<1x8xf32> to vector<8x8xf32>
    %150 = arith.addf %146, %149 : vector<8x8xf32>
    %c1_85 = arith.constant 1 : index
    %c0_86 = arith.constant 0 : index
    %c0_87 = arith.constant 0 : index
    %151 = vector.load %arg11[%c1_85, %c0_86, %c0_87] : memref<4x32x8xbf16, #tpu.memory_space<vmem>>, vector<1x32x8xbf16>
    %152 = vector.shape_cast %151 : vector<1x32x8xbf16> to vector<32x8xbf16>
    %cst_88 = arith.constant dense<0.000000e+00> : vector<8x8xf32>
    %153 = tpu.matmul %87, %152, %cst_88 {dimension_numbers = #tpu.dot_dimension_numbers<[1], [0], [0], [1], [0, 0, 1, 1], [], []>} : vector<8x32xbf16>, vector<32x8xbf16>, vector<8x8xf32> -> vector<8x8xf32>
    %c1_89 = arith.constant 1 : index
    %c0_90 = arith.constant 0 : index
    %c0_91 = arith.constant 0 : index
    %154 = vector.load %arg12[%c1_89, %c0_90, %c0_91] : memref<4x1x8xf32, #tpu.memory_space<vmem>>, vector<1x1x8xf32>
    %155 = vector.shape_cast %154 : vector<1x1x8xf32> to vector<1x8xf32>
    %156 = vector.broadcast %155 : vector<1x8xf32> to vector<8x8xf32>
    %157 = arith.addf %153, %156 : vector<8x8xf32>
    %cst_92 = arith.constant 0.353553385 : f32
    %158 = vector.broadcast %cst_92 : f32 to vector<8x8xf32>
    %159 = arith.mulf %143, %158 : vector<8x8xf32>
    %160 = arith.truncf %159 : vector<8x8xf32> to vector<8x8xbf16>
    %161 = arith.truncf %150 : vector<8x8xf32> to vector<8x8xbf16>
    %cst_93 = arith.constant dense<0.000000e+00> : vector<8x8xf32>
    %162 = tpu.matmul %160, %161, %cst_93 {dimension_numbers = #tpu.dot_dimension_numbers<[1], [1], [0], [0], [0, 0, 1, 0], [], []>} : vector<8x8xbf16>, vector<8x8xbf16>, vector<8x8xf32> -> vector<8x8xf32>
    %cst_94 = arith.constant -3.40282347E+38 : f32
    %163 = vector.shape_cast %86 : vector<1x8xi1> to vector<1x8xi1>
    %164 = vector.broadcast %163 : vector<1x8xi1> to vector<8x8xi1>
    %165 = vector.broadcast %cst_94 : f32 to vector<8x8xf32>
    %166 = arith.select %164, %165, %162 : vector<8x8xi1>, vector<8x8xf32>
    %cst_95 = arith.constant dense<0xFF800000> : vector<8xf32>
    %167 = vector.multi_reduction <maximumf>, %166, %cst_95 [1] : vector<8x8xf32> to vector<8xf32>
    %168 = vector.shape_cast %167 : vector<8xf32> to vector<8x1xf32>
    %169 = vector.broadcast %168 : vector<8x1xf32> to vector<8x8xf32>
    %170 = arith.subf %166, %169 : vector<8x8xf32>
    %171 = math.exp %170 : vector<8x8xf32>
    %cst_96 = arith.constant dense<0.000000e+00> : vector<8xf32>
    %172 = vector.multi_reduction <add>, %171, %cst_96 [1] : vector<8x8xf32> to vector<8xf32>
    %173 = vector.shape_cast %172 : vector<8xf32> to vector<8x1xf32>
    %174 = tpu.reciprocal %173 {approx = true} : vector<8x1xf32> -> vector<8x1xf32>
    %175 = vector.broadcast %174 : vector<8x1xf32> to vector<8x8xf32>
    %176 = arith.mulf %171, %175 : vector<8x8xf32>
    %177 = arith.truncf %176 : vector<8x8xf32> to vector<8x8xbf16>
    %178 = arith.truncf %157 : vector<8x8xf32> to vector<8x8xbf16>
    %cst_97 = arith.constant dense<0.000000e+00> : vector<8x8xf32>
    %179 = tpu.matmul %177, %178, %cst_97 {dimension_numbers = #tpu.dot_dimension_numbers<[1], [0], [0], [1], [0, 0, 1, 1], [], []>} : vector<8x8xbf16>, vector<8x8xbf16>, vector<8x8xf32> -> vector<8x8xf32>
    %180 = arith.truncf %179 : vector<8x8xf32> to vector<8x8xbf16>
    %c1_98 = arith.constant 1 : index
    %c0_99 = arith.constant 0 : index
    %c0_100 = arith.constant 0 : index
    %181 = vector.load %arg13[%c1_98, %c0_99, %c0_100] : memref<4x8x32xbf16, #tpu.memory_space<vmem>>, vector<1x8x32xbf16>
    %182 = vector.shape_cast %181 : vector<1x8x32xbf16> to vector<8x32xbf16>
    %cst_101 = arith.constant dense<0.000000e+00> : vector<8x32xf32>
    %183 = tpu.matmul %180, %182, %cst_101 {dimension_numbers = #tpu.dot_dimension_numbers<[1], [0], [0], [1], [0, 0, 1, 1], [], []>} : vector<8x8xbf16>, vector<8x32xbf16>, vector<8x32xf32> -> vector<8x32xf32>
    %184 = arith.addf %136, %183 : vector<8x32xf32>
    %c2_102 = arith.constant 2 : index
    %c0_103 = arith.constant 0 : index
    %c0_104 = arith.constant 0 : index
    %185 = vector.load %arg7[%c2_102, %c0_103, %c0_104] : memref<4x32x8xbf16, #tpu.memory_space<vmem>>, vector<1x32x8xbf16>
    %186 = vector.shape_cast %185 : vector<1x32x8xbf16> to vector<32x8xbf16>
    %cst_105 = arith.constant dense<0.000000e+00> : vector<8x8xf32>
    %187 = tpu.matmul %87, %186, %cst_105 {dimension_numbers = #tpu.dot_dimension_numbers<[1], [0], [0], [1], [0, 0, 1, 1], [], []>} : vector<8x32xbf16>, vector<32x8xbf16>, vector<8x8xf32> -> vector<8x8xf32>
    %c2_106 = arith.constant 2 : index
    %c0_107 = arith.constant 0 : index
    %c0_108 = arith.constant 0 : index
    %188 = vector.load %arg8[%c2_106, %c0_107, %c0_108] : memref<4x1x8xf32, #tpu.memory_space<vmem>>, vector<1x1x8xf32>
    %189 = vector.shape_cast %188 : vector<1x1x8xf32> to vector<1x8xf32>
    %190 = vector.broadcast %189 : vector<1x8xf32> to vector<8x8xf32>
    %191 = arith.addf %187, %190 : vector<8x8xf32>
    %c2_109 = arith.constant 2 : index
    %c0_110 = arith.constant 0 : index
    %c0_111 = arith.constant 0 : index
    %192 = vector.load %arg9[%c2_109, %c0_110, %c0_111] : memref<4x32x8xbf16, #tpu.memory_space<vmem>>, vector<1x32x8xbf16>
    %193 = vector.shape_cast %192 : vector<1x32x8xbf16> to vector<32x8xbf16>
    %cst_112 = arith.constant dense<0.000000e+00> : vector<8x8xf32>
    %194 = tpu.matmul %87, %193, %cst_112 {dimension_numbers = #tpu.dot_dimension_numbers<[1], [0], [0], [1], [0, 0, 1, 1], [], []>} : vector<8x32xbf16>, vector<32x8xbf16>, vector<8x8xf32> -> vector<8x8xf32>
    %c2_113 = arith.constant 2 : index
    %c0_114 = arith.constant 0 : index
    %c0_115 = arith.constant 0 : index
    %195 = vector.load %arg10[%c2_113, %c0_114, %c0_115] : memref<4x1x8xf32, #tpu.memory_space<vmem>>, vector<1x1x8xf32>
    %196 = vector.shape_cast %195 : vector<1x1x8xf32> to vector<1x8xf32>
    %197 = vector.broadcast %196 : vector<1x8xf32> to vector<8x8xf32>
    %198 = arith.addf %194, %197 : vector<8x8xf32>
    %c2_116 = arith.constant 2 : index
    %c0_117 = arith.constant 0 : index
    %c0_118 = arith.constant 0 : index
    %199 = vector.load %arg11[%c2_116, %c0_117, %c0_118] : memref<4x32x8xbf16, #tpu.memory_space<vmem>>, vector<1x32x8xbf16>
    %200 = vector.shape_cast %199 : vector<1x32x8xbf16> to vector<32x8xbf16>
    %cst_119 = arith.constant dense<0.000000e+00> : vector<8x8xf32>
    %201 = tpu.matmul %87, %200, %cst_119 {dimension_numbers = #tpu.dot_dimension_numbers<[1], [0], [0], [1], [0, 0, 1, 1], [], []>} : vector<8x32xbf16>, vector<32x8xbf16>, vector<8x8xf32> -> vector<8x8xf32>
    %c2_120 = arith.constant 2 : index
    %c0_121 = arith.constant 0 : index
    %c0_122 = arith.constant 0 : index
    %202 = vector.load %arg12[%c2_120, %c0_121, %c0_122] : memref<4x1x8xf32, #tpu.memory_space<vmem>>, vector<1x1x8xf32>
    %203 = vector.shape_cast %202 : vector<1x1x8xf32> to vector<1x8xf32>
    %204 = vector.broadcast %203 : vector<1x8xf32> to vector<8x8xf32>
    %205 = arith.addf %201, %204 : vector<8x8xf32>
    %cst_123 = arith.constant 0.353553385 : f32
    %206 = vector.broadcast %cst_123 : f32 to vector<8x8xf32>
    %207 = arith.mulf %191, %206 : vector<8x8xf32>
    %208 = arith.truncf %207 : vector<8x8xf32> to vector<8x8xbf16>
    %209 = arith.truncf %198 : vector<8x8xf32> to vector<8x8xbf16>
    %cst_124 = arith.constant dense<0.000000e+00> : vector<8x8xf32>
    %210 = tpu.matmul %208, %209, %cst_124 {dimension_numbers = #tpu.dot_dimension_numbers<[1], [1], [0], [0], [0, 0, 1, 0], [], []>} : vector<8x8xbf16>, vector<8x8xbf16>, vector<8x8xf32> -> vector<8x8xf32>
    %cst_125 = arith.constant -3.40282347E+38 : f32
    %211 = vector.shape_cast %86 : vector<1x8xi1> to vector<1x8xi1>
    %212 = vector.broadcast %211 : vector<1x8xi1> to vector<8x8xi1>
    %213 = vector.broadcast %cst_125 : f32 to vector<8x8xf32>
    %214 = arith.select %212, %213, %210 : vector<8x8xi1>, vector<8x8xf32>
    %cst_126 = arith.constant dense<0xFF800000> : vector<8xf32>
    %215 = vector.multi_reduction <maximumf>, %214, %cst_126 [1] : vector<8x8xf32> to vector<8xf32>
    %216 = vector.shape_cast %215 : vector<8xf32> to vector<8x1xf32>
    %217 = vector.broadcast %216 : vector<8x1xf32> to vector<8x8xf32>
    %218 = arith.subf %214, %217 : vector<8x8xf32>
    %219 = math.exp %218 : vector<8x8xf32>
    %cst_127 = arith.constant dense<0.000000e+00> : vector<8xf32>
    %220 = vector.multi_reduction <add>, %219, %cst_127 [1] : vector<8x8xf32> to vector<8xf32>
    %221 = vector.shape_cast %220 : vector<8xf32> to vector<8x1xf32>
    %222 = tpu.reciprocal %221 {approx = true} : vector<8x1xf32> -> vector<8x1xf32>
    %223 = vector.broadcast %222 : vector<8x1xf32> to vector<8x8xf32>
    %224 = arith.mulf %219, %223 : vector<8x8xf32>
    %225 = arith.truncf %224 : vector<8x8xf32> to vector<8x8xbf16>
    %226 = arith.truncf %205 : vector<8x8xf32> to vector<8x8xbf16>
    %cst_128 = arith.constant dense<0.000000e+00> : vector<8x8xf32>
    %227 = tpu.matmul %225, %226, %cst_128 {dimension_numbers = #tpu.dot_dimension_numbers<[1], [0], [0], [1], [0, 0, 1, 1], [], []>} : vector<8x8xbf16>, vector<8x8xbf16>, vector<8x8xf32> -> vector<8x8xf32>
    %228 = arith.truncf %227 : vector<8x8xf32> to vector<8x8xbf16>
    %c2_129 = arith.constant 2 : index
    %c0_130 = arith.constant 0 : index
    %c0_131 = arith.constant 0 : index
    %229 = vector.load %arg13[%c2_129, %c0_130, %c0_131] : memref<4x8x32xbf16, #tpu.memory_space<vmem>>, vector<1x8x32xbf16>
    %230 = vector.shape_cast %229 : vector<1x8x32xbf16> to vector<8x32xbf16>
    %cst_132 = arith.constant dense<0.000000e+00> : vector<8x32xf32>
    %231 = tpu.matmul %228, %230, %cst_132 {dimension_numbers = #tpu.dot_dimension_numbers<[1], [0], [0], [1], [0, 0, 1, 1], [], []>} : vector<8x8xbf16>, vector<8x32xbf16>, vector<8x32xf32> -> vector<8x32xf32>
    %232 = arith.addf %184, %231 : vector<8x32xf32>
    %c3_133 = arith.constant 3 : index
    %c0_134 = arith.constant 0 : index
    %c0_135 = arith.constant 0 : index
    %233 = vector.load %arg7[%c3_133, %c0_134, %c0_135] : memref<4x32x8xbf16, #tpu.memory_space<vmem>>, vector<1x32x8xbf16>
    %234 = vector.shape_cast %233 : vector<1x32x8xbf16> to vector<32x8xbf16>
    %cst_136 = arith.constant dense<0.000000e+00> : vector<8x8xf32>
    %235 = tpu.matmul %87, %234, %cst_136 {dimension_numbers = #tpu.dot_dimension_numbers<[1], [0], [0], [1], [0, 0, 1, 1], [], []>} : vector<8x32xbf16>, vector<32x8xbf16>, vector<8x8xf32> -> vector<8x8xf32>
    %c3_137 = arith.constant 3 : index
    %c0_138 = arith.constant 0 : index
    %c0_139 = arith.constant 0 : index
    %236 = vector.load %arg8[%c3_137, %c0_138, %c0_139] : memref<4x1x8xf32, #tpu.memory_space<vmem>>, vector<1x1x8xf32>
    %237 = vector.shape_cast %236 : vector<1x1x8xf32> to vector<1x8xf32>
    %238 = vector.broadcast %237 : vector<1x8xf32> to vector<8x8xf32>
    %239 = arith.addf %235, %238 : vector<8x8xf32>
    %c3_140 = arith.constant 3 : index
    %c0_141 = arith.constant 0 : index
    %c0_142 = arith.constant 0 : index
    %240 = vector.load %arg9[%c3_140, %c0_141, %c0_142] : memref<4x32x8xbf16, #tpu.memory_space<vmem>>, vector<1x32x8xbf16>
    %241 = vector.shape_cast %240 : vector<1x32x8xbf16> to vector<32x8xbf16>
    %cst_143 = arith.constant dense<0.000000e+00> : vector<8x8xf32>
    %242 = tpu.matmul %87, %241, %cst_143 {dimension_numbers = #tpu.dot_dimension_numbers<[1], [0], [0], [1], [0, 0, 1, 1], [], []>} : vector<8x32xbf16>, vector<32x8xbf16>, vector<8x8xf32> -> vector<8x8xf32>
    %c3_144 = arith.constant 3 : index
    %c0_145 = arith.constant 0 : index
    %c0_146 = arith.constant 0 : index
    %243 = vector.load %arg10[%c3_144, %c0_145, %c0_146] : memref<4x1x8xf32, #tpu.memory_space<vmem>>, vector<1x1x8xf32>
    %244 = vector.shape_cast %243 : vector<1x1x8xf32> to vector<1x8xf32>
    %245 = vector.broadcast %244 : vector<1x8xf32> to vector<8x8xf32>
    %246 = arith.addf %242, %245 : vector<8x8xf32>
    %c3_147 = arith.constant 3 : index
    %c0_148 = arith.constant 0 : index
    %c0_149 = arith.constant 0 : index
    %247 = vector.load %arg11[%c3_147, %c0_148, %c0_149] : memref<4x32x8xbf16, #tpu.memory_space<vmem>>, vector<1x32x8xbf16>
    %248 = vector.shape_cast %247 : vector<1x32x8xbf16> to vector<32x8xbf16>
    %cst_150 = arith.constant dense<0.000000e+00> : vector<8x8xf32>
    %249 = tpu.matmul %87, %248, %cst_150 {dimension_numbers = #tpu.dot_dimension_numbers<[1], [0], [0], [1], [0, 0, 1, 1], [], []>} : vector<8x32xbf16>, vector<32x8xbf16>, vector<8x8xf32> -> vector<8x8xf32>
    %c3_151 = arith.constant 3 : index
    %c0_152 = arith.constant 0 : index
    %c0_153 = arith.constant 0 : index
    %250 = vector.load %arg12[%c3_151, %c0_152, %c0_153] : memref<4x1x8xf32, #tpu.memory_space<vmem>>, vector<1x1x8xf32>
    %251 = vector.shape_cast %250 : vector<1x1x8xf32> to vector<1x8xf32>
    %252 = vector.broadcast %251 : vector<1x8xf32> to vector<8x8xf32>
    %253 = arith.addf %249, %252 : vector<8x8xf32>
    %cst_154 = arith.constant 0.353553385 : f32
    %254 = vector.broadcast %cst_154 : f32 to vector<8x8xf32>
    %255 = arith.mulf %239, %254 : vector<8x8xf32>
    %256 = arith.truncf %255 : vector<8x8xf32> to vector<8x8xbf16>
    %257 = arith.truncf %246 : vector<8x8xf32> to vector<8x8xbf16>
    %cst_155 = arith.constant dense<0.000000e+00> : vector<8x8xf32>
    %258 = tpu.matmul %256, %257, %cst_155 {dimension_numbers = #tpu.dot_dimension_numbers<[1], [1], [0], [0], [0, 0, 1, 0], [], []>} : vector<8x8xbf16>, vector<8x8xbf16>, vector<8x8xf32> -> vector<8x8xf32>
    %cst_156 = arith.constant -3.40282347E+38 : f32
    %259 = vector.shape_cast %86 : vector<1x8xi1> to vector<1x8xi1>
    %260 = vector.broadcast %259 : vector<1x8xi1> to vector<8x8xi1>
    %261 = vector.broadcast %cst_156 : f32 to vector<8x8xf32>
    %262 = arith.select %260, %261, %258 : vector<8x8xi1>, vector<8x8xf32>
    %cst_157 = arith.constant dense<0xFF800000> : vector<8xf32>
    %263 = vector.multi_reduction <maximumf>, %262, %cst_157 [1] : vector<8x8xf32> to vector<8xf32>
    %264 = vector.shape_cast %263 : vector<8xf32> to vector<8x1xf32>
    %265 = vector.broadcast %264 : vector<8x1xf32> to vector<8x8xf32>
    %266 = arith.subf %262, %265 : vector<8x8xf32>
    %267 = math.exp %266 : vector<8x8xf32>
    %cst_158 = arith.constant dense<0.000000e+00> : vector<8xf32>
    %268 = vector.multi_reduction <add>, %267, %cst_158 [1] : vector<8x8xf32> to vector<8xf32>
    %269 = vector.shape_cast %268 : vector<8xf32> to vector<8x1xf32>
    %270 = tpu.reciprocal %269 {approx = true} : vector<8x1xf32> -> vector<8x1xf32>
    %271 = vector.broadcast %270 : vector<8x1xf32> to vector<8x8xf32>
    %272 = arith.mulf %267, %271 : vector<8x8xf32>
    %273 = arith.truncf %272 : vector<8x8xf32> to vector<8x8xbf16>
    %274 = arith.truncf %253 : vector<8x8xf32> to vector<8x8xbf16>
    %cst_159 = arith.constant dense<0.000000e+00> : vector<8x8xf32>
    %275 = tpu.matmul %273, %274, %cst_159 {dimension_numbers = #tpu.dot_dimension_numbers<[1], [0], [0], [1], [0, 0, 1, 1], [], []>} : vector<8x8xbf16>, vector<8x8xbf16>, vector<8x8xf32> -> vector<8x8xf32>
    %276 = arith.truncf %275 : vector<8x8xf32> to vector<8x8xbf16>
    %c3_160 = arith.constant 3 : index
    %c0_161 = arith.constant 0 : index
    %c0_162 = arith.constant 0 : index
    %277 = vector.load %arg13[%c3_160, %c0_161, %c0_162] : memref<4x8x32xbf16, #tpu.memory_space<vmem>>, vector<1x8x32xbf16>
    %278 = vector.shape_cast %277 : vector<1x8x32xbf16> to vector<8x32xbf16>
    %cst_163 = arith.constant dense<0.000000e+00> : vector<8x32xf32>
    %279 = tpu.matmul %276, %278, %cst_163 {dimension_numbers = #tpu.dot_dimension_numbers<[1], [0], [0], [1], [0, 0, 1, 1], [], []>} : vector<8x8xbf16>, vector<8x32xbf16>, vector<8x32xf32> -> vector<8x32xf32>
    %280 = arith.addf %232, %279 : vector<8x32xf32>
    %c0_164 = arith.constant 0 : index
    %c0_165 = arith.constant 0 : index
    %281 = vector.load %arg14[%c0_164, %c0_165] : memref<1x32xf32, #tpu.memory_space<vmem>>, vector<1x32xf32>
    %282 = vector.broadcast %281 : vector<1x32xf32> to vector<8x32xf32>
    %283 = arith.addf %280, %282 : vector<8x32xf32>
    %284 = arith.addf %82, %283 : vector<8x32xf32>
    %c0_166 = arith.constant 0 : index
    %c0_167 = arith.constant 0 : index
    %285 = vector.load %arg15[%c0_166, %c0_167] : memref<1x32xf32, #tpu.memory_space<vmem>>, vector<1x32xf32>
    %c0_168 = arith.constant 0 : index
    %c0_169 = arith.constant 0 : index
    %286 = vector.load %arg16[%c0_168, %c0_169] : memref<1x32xf32, #tpu.memory_space<vmem>>, vector<1x32xf32>
    %cst_170 = arith.constant dense<0.000000e+00> : vector<8xf32>
    %287 = vector.multi_reduction <add>, %284, %cst_170 [1] : vector<8x32xf32> to vector<8xf32>
    %288 = vector.shape_cast %287 : vector<8xf32> to vector<8x1xf32>
    %cst_171 = arith.constant 3.200000e+01 : f32
    %289 = vector.broadcast %cst_171 : f32 to vector<8x1xf32>
    %290 = arith.divf %288, %289 : vector<8x1xf32>
    %291 = vector.broadcast %290 : vector<8x1xf32> to vector<8x32xf32>
    %292 = arith.subf %284, %291 : vector<8x32xf32>
    %293 = arith.mulf %292, %292 : vector<8x32xf32>
    %cst_172 = arith.constant dense<0.000000e+00> : vector<8xf32>
    %294 = vector.multi_reduction <add>, %293, %cst_172 [1] : vector<8x32xf32> to vector<8xf32>
    %295 = vector.shape_cast %294 : vector<8xf32> to vector<8x1xf32>
    %cst_173 = arith.constant 3.200000e+01 : f32
    %296 = vector.broadcast %cst_173 : f32 to vector<8x1xf32>
    %297 = arith.divf %295, %296 : vector<8x1xf32>
    %298 = vector.broadcast %290 : vector<8x1xf32> to vector<8x32xf32>
    %299 = arith.subf %284, %298 : vector<8x32xf32>
    %cst_174 = arith.constant 9.99999996E-13 : f32
    %300 = vector.broadcast %cst_174 : f32 to vector<8x1xf32>
    %301 = arith.addf %297, %300 : vector<8x1xf32>
    %302 = math.rsqrt %301 : vector<8x1xf32>
    %303 = vector.broadcast %302 : vector<8x1xf32> to vector<8x32xf32>
    %304 = arith.mulf %299, %303 : vector<8x32xf32>
    %305 = vector.broadcast %285 : vector<1x32xf32> to vector<8x32xf32>
    %306 = arith.mulf %304, %305 : vector<8x32xf32>
    %307 = vector.broadcast %286 : vector<1x32xf32> to vector<8x32xf32>
    %308 = arith.addf %306, %307 : vector<8x32xf32>
    %c0_175 = arith.constant 0 : index
    %c0_176 = arith.constant 0 : index
    %309 = vector.load %arg17[%c0_175, %c0_176] : memref<32x64xbf16, #tpu.memory_space<vmem>>, vector<32x64xbf16>
    %c0_177 = arith.constant 0 : index
    %c0_178 = arith.constant 0 : index
    %310 = vector.load %arg18[%c0_177, %c0_178] : memref<1x64xf32, #tpu.memory_space<vmem>>, vector<1x64xf32>
    %311 = arith.truncf %308 : vector<8x32xf32> to vector<8x32xbf16>
    %cst_179 = arith.constant dense<0.000000e+00> : vector<8x64xf32>
    %312 = tpu.matmul %311, %309, %cst_179 {dimension_numbers = #tpu.dot_dimension_numbers<[1], [0], [0], [1], [0, 0, 1, 1], [], []>} : vector<8x32xbf16>, vector<32x64xbf16>, vector<8x64xf32> -> vector<8x64xf32>
    %313 = vector.broadcast %310 : vector<1x64xf32> to vector<8x64xf32>
    %314 = arith.addf %312, %313 : vector<8x64xf32>
    %cst_180 = arith.constant 5.000000e-01 : f32
    %315 = vector.broadcast %cst_180 : f32 to vector<8x64xf32>
    %316 = arith.mulf %315, %314 : vector<8x64xf32>
    %cst_181 = arith.constant 0.707106769 : f32
    %317 = vector.broadcast %cst_181 : f32 to vector<8x64xf32>
    %318 = arith.mulf %314, %317 : vector<8x64xf32>
    %319 = math.erf %318 : vector<8x64xf32>
    %cst_182 = arith.constant 1.000000e+00 : f32
    %320 = vector.broadcast %cst_182 : f32 to vector<8x64xf32>
    %321 = arith.addf %320, %319 : vector<8x64xf32>
    %322 = arith.mulf %316, %321 : vector<8x64xf32>
    %c0_183 = arith.constant 0 : index
    %c0_184 = arith.constant 0 : index
    %323 = vector.load %arg19[%c0_183, %c0_184] : memref<64x32xbf16, #tpu.memory_space<vmem>>, vector<64x32xbf16>
    %c0_185 = arith.constant 0 : index
    %c0_186 = arith.constant 0 : index
    %324 = vector.load %arg20[%c0_185, %c0_186] : memref<1x32xf32, #tpu.memory_space<vmem>>, vector<1x32xf32>
    %325 = arith.truncf %322 : vector<8x64xf32> to vector<8x64xbf16>
    %cst_187 = arith.constant dense<0.000000e+00> : vector<8x32xf32>
    %326 = tpu.matmul %325, %323, %cst_187 {dimension_numbers = #tpu.dot_dimension_numbers<[1], [0], [0], [1], [0, 0, 1, 1], [], []>} : vector<8x64xbf16>, vector<64x32xbf16>, vector<8x32xf32> -> vector<8x32xf32>
    %327 = vector.broadcast %324 : vector<1x32xf32> to vector<8x32xf32>
    %328 = arith.addf %326, %327 : vector<8x32xf32>
    %329 = arith.addf %308, %328 : vector<8x32xf32>
    %c0_188 = arith.constant 0 : index
    %c0_189 = arith.constant 0 : index
    %330 = vector.load %arg21[%c0_188, %c0_189] : memref<1x32xf32, #tpu.memory_space<vmem>>, vector<1x32xf32>
    %c0_190 = arith.constant 0 : index
    %c0_191 = arith.constant 0 : index
    %331 = vector.load %arg22[%c0_190, %c0_191] : memref<1x32xf32, #tpu.memory_space<vmem>>, vector<1x32xf32>
    %cst_192 = arith.constant dense<0.000000e+00> : vector<8xf32>
    %332 = vector.multi_reduction <add>, %329, %cst_192 [1] : vector<8x32xf32> to vector<8xf32>
    %333 = vector.shape_cast %332 : vector<8xf32> to vector<8x1xf32>
    %cst_193 = arith.constant 3.200000e+01 : f32
    %334 = vector.broadcast %cst_193 : f32 to vector<8x1xf32>
    %335 = arith.divf %333, %334 : vector<8x1xf32>
    %336 = vector.broadcast %335 : vector<8x1xf32> to vector<8x32xf32>
    %337 = arith.subf %329, %336 : vector<8x32xf32>
    %338 = arith.mulf %337, %337 : vector<8x32xf32>
    %cst_194 = arith.constant dense<0.000000e+00> : vector<8xf32>
    %339 = vector.multi_reduction <add>, %338, %cst_194 [1] : vector<8x32xf32> to vector<8xf32>
    %340 = vector.shape_cast %339 : vector<8xf32> to vector<8x1xf32>
    %cst_195 = arith.constant 3.200000e+01 : f32
    %341 = vector.broadcast %cst_195 : f32 to vector<8x1xf32>
    %342 = arith.divf %340, %341 : vector<8x1xf32>
    %343 = vector.broadcast %335 : vector<8x1xf32> to vector<8x32xf32>
    %344 = arith.subf %329, %343 : vector<8x32xf32>
    %cst_196 = arith.constant 9.99999996E-13 : f32
    %345 = vector.broadcast %cst_196 : f32 to vector<8x1xf32>
    %346 = arith.addf %342, %345 : vector<8x1xf32>
    %347 = math.rsqrt %346 : vector<8x1xf32>
    %348 = vector.broadcast %347 : vector<8x1xf32> to vector<8x32xf32>
    %349 = arith.mulf %344, %348 : vector<8x32xf32>
    %350 = vector.broadcast %330 : vector<1x32xf32> to vector<8x32xf32>
    %351 = arith.mulf %349, %350 : vector<8x32xf32>
    %352 = vector.broadcast %331 : vector<1x32xf32> to vector<8x32xf32>
    %353 = arith.addf %351, %352 : vector<8x32xf32>
    %354 = arith.truncf %353 : vector<8x32xf32> to vector<8x32xbf16>
    %cst_197 = arith.constant 0.000000e+00 : f32
    %355 = vector.broadcast %cst_197 : f32 to vector<8x32xf32>
    %c0_198 = arith.constant 0 : index
    %c0_199 = arith.constant 0 : index
    %c0_200 = arith.constant 0 : index
    %356 = vector.load %arg23[%c0_198, %c0_199, %c0_200] : memref<4x32x8xbf16, #tpu.memory_space<vmem>>, vector<1x32x8xbf16>
    %357 = vector.shape_cast %356 : vector<1x32x8xbf16> to vector<32x8xbf16>
    %cst_201 = arith.constant dense<0.000000e+00> : vector<8x8xf32>
    %358 = tpu.matmul %354, %357, %cst_201 {dimension_numbers = #tpu.dot_dimension_numbers<[1], [0], [0], [1], [0, 0, 1, 1], [], []>} : vector<8x32xbf16>, vector<32x8xbf16>, vector<8x8xf32> -> vector<8x8xf32>
    %c0_202 = arith.constant 0 : index
    %c0_203 = arith.constant 0 : index
    %c0_204 = arith.constant 0 : index
    %359 = vector.load %arg24[%c0_202, %c0_203, %c0_204] : memref<4x1x8xf32, #tpu.memory_space<vmem>>, vector<1x1x8xf32>
    %360 = vector.shape_cast %359 : vector<1x1x8xf32> to vector<1x8xf32>
    %361 = vector.broadcast %360 : vector<1x8xf32> to vector<8x8xf32>
    %362 = arith.addf %358, %361 : vector<8x8xf32>
    %c0_205 = arith.constant 0 : index
    %c0_206 = arith.constant 0 : index
    %c0_207 = arith.constant 0 : index
    %363 = vector.load %arg25[%c0_205, %c0_206, %c0_207] : memref<4x32x8xbf16, #tpu.memory_space<vmem>>, vector<1x32x8xbf16>
    %364 = vector.shape_cast %363 : vector<1x32x8xbf16> to vector<32x8xbf16>
    %cst_208 = arith.constant dense<0.000000e+00> : vector<8x8xf32>
    %365 = tpu.matmul %354, %364, %cst_208 {dimension_numbers = #tpu.dot_dimension_numbers<[1], [0], [0], [1], [0, 0, 1, 1], [], []>} : vector<8x32xbf16>, vector<32x8xbf16>, vector<8x8xf32> -> vector<8x8xf32>
    %c0_209 = arith.constant 0 : index
    %c0_210 = arith.constant 0 : index
    %c0_211 = arith.constant 0 : index
    %366 = vector.load %arg26[%c0_209, %c0_210, %c0_211] : memref<4x1x8xf32, #tpu.memory_space<vmem>>, vector<1x1x8xf32>
    %367 = vector.shape_cast %366 : vector<1x1x8xf32> to vector<1x8xf32>
    %368 = vector.broadcast %367 : vector<1x8xf32> to vector<8x8xf32>
    %369 = arith.addf %365, %368 : vector<8x8xf32>
    %c0_212 = arith.constant 0 : index
    %c0_213 = arith.constant 0 : index
    %c0_214 = arith.constant 0 : index
    %370 = vector.load %arg27[%c0_212, %c0_213, %c0_214] : memref<4x32x8xbf16, #tpu.memory_space<vmem>>, vector<1x32x8xbf16>
    %371 = vector.shape_cast %370 : vector<1x32x8xbf16> to vector<32x8xbf16>
    %cst_215 = arith.constant dense<0.000000e+00> : vector<8x8xf32>
    %372 = tpu.matmul %354, %371, %cst_215 {dimension_numbers = #tpu.dot_dimension_numbers<[1], [0], [0], [1], [0, 0, 1, 1], [], []>} : vector<8x32xbf16>, vector<32x8xbf16>, vector<8x8xf32> -> vector<8x8xf32>
    %c0_216 = arith.constant 0 : index
    %c0_217 = arith.constant 0 : index
    %c0_218 = arith.constant 0 : index
    %373 = vector.load %arg28[%c0_216, %c0_217, %c0_218] : memref<4x1x8xf32, #tpu.memory_space<vmem>>, vector<1x1x8xf32>
    %374 = vector.shape_cast %373 : vector<1x1x8xf32> to vector<1x8xf32>
    %375 = vector.broadcast %374 : vector<1x8xf32> to vector<8x8xf32>
    %376 = arith.addf %372, %375 : vector<8x8xf32>
    %cst_219 = arith.constant 0.353553385 : f32
    %377 = vector.broadcast %cst_219 : f32 to vector<8x8xf32>
    %378 = arith.mulf %362, %377 : vector<8x8xf32>
    %379 = arith.truncf %378 : vector<8x8xf32> to vector<8x8xbf16>
    %380 = arith.truncf %369 : vector<8x8xf32> to vector<8x8xbf16>
    %cst_220 = arith.constant dense<0.000000e+00> : vector<8x8xf32>
    %381 = tpu.matmul %379, %380, %cst_220 {dimension_numbers = #tpu.dot_dimension_numbers<[1], [1], [0], [0], [0, 0, 1, 0], [], []>} : vector<8x8xbf16>, vector<8x8xbf16>, vector<8x8xf32> -> vector<8x8xf32>
    %cst_221 = arith.constant -3.40282347E+38 : f32
    %382 = vector.shape_cast %86 : vector<1x8xi1> to vector<1x8xi1>
    %383 = vector.broadcast %382 : vector<1x8xi1> to vector<8x8xi1>
    %384 = vector.broadcast %cst_221 : f32 to vector<8x8xf32>
    %385 = arith.select %383, %384, %381 : vector<8x8xi1>, vector<8x8xf32>
    %cst_222 = arith.constant dense<0xFF800000> : vector<8xf32>
    %386 = vector.multi_reduction <maximumf>, %385, %cst_222 [1] : vector<8x8xf32> to vector<8xf32>
    %387 = vector.shape_cast %386 : vector<8xf32> to vector<8x1xf32>
    %388 = vector.broadcast %387 : vector<8x1xf32> to vector<8x8xf32>
    %389 = arith.subf %385, %388 : vector<8x8xf32>
    %390 = math.exp %389 : vector<8x8xf32>
    %cst_223 = arith.constant dense<0.000000e+00> : vector<8xf32>
    %391 = vector.multi_reduction <add>, %390, %cst_223 [1] : vector<8x8xf32> to vector<8xf32>
    %392 = vector.shape_cast %391 : vector<8xf32> to vector<8x1xf32>
    %393 = tpu.reciprocal %392 {approx = true} : vector<8x1xf32> -> vector<8x1xf32>
    %394 = vector.broadcast %393 : vector<8x1xf32> to vector<8x8xf32>
    %395 = arith.mulf %390, %394 : vector<8x8xf32>
    %396 = arith.truncf %395 : vector<8x8xf32> to vector<8x8xbf16>
    %397 = arith.truncf %376 : vector<8x8xf32> to vector<8x8xbf16>
    %cst_224 = arith.constant dense<0.000000e+00> : vector<8x8xf32>
    %398 = tpu.matmul %396, %397, %cst_224 {dimension_numbers = #tpu.dot_dimension_numbers<[1], [0], [0], [1], [0, 0, 1, 1], [], []>} : vector<8x8xbf16>, vector<8x8xbf16>, vector<8x8xf32> -> vector<8x8xf32>
    %399 = arith.truncf %398 : vector<8x8xf32> to vector<8x8xbf16>
    %c0_225 = arith.constant 0 : index
    %c0_226 = arith.constant 0 : index
    %c0_227 = arith.constant 0 : index
    %400 = vector.load %arg29[%c0_225, %c0_226, %c0_227] : memref<4x8x32xbf16, #tpu.memory_space<vmem>>, vector<1x8x32xbf16>
    %401 = vector.shape_cast %400 : vector<1x8x32xbf16> to vector<8x32xbf16>
    %cst_228 = arith.constant dense<0.000000e+00> : vector<8x32xf32>
    %402 = tpu.matmul %399, %401, %cst_228 {dimension_numbers = #tpu.dot_dimension_numbers<[1], [0], [0], [1], [0, 0, 1, 1], [], []>} : vector<8x8xbf16>, vector<8x32xbf16>, vector<8x32xf32> -> vector<8x32xf32>
    %403 = arith.addf %355, %402 : vector<8x32xf32>
    %c1_229 = arith.constant 1 : index
    %c0_230 = arith.constant 0 : index
    %c0_231 = arith.constant 0 : index
    %404 = vector.load %arg23[%c1_229, %c0_230, %c0_231] : memref<4x32x8xbf16, #tpu.memory_space<vmem>>, vector<1x32x8xbf16>
    %405 = vector.shape_cast %404 : vector<1x32x8xbf16> to vector<32x8xbf16>
    %cst_232 = arith.constant dense<0.000000e+00> : vector<8x8xf32>
    %406 = tpu.matmul %354, %405, %cst_232 {dimension_numbers = #tpu.dot_dimension_numbers<[1], [0], [0], [1], [0, 0, 1, 1], [], []>} : vector<8x32xbf16>, vector<32x8xbf16>, vector<8x8xf32> -> vector<8x8xf32>
    %c1_233 = arith.constant 1 : index
    %c0_234 = arith.constant 0 : index
    %c0_235 = arith.constant 0 : index
    %407 = vector.load %arg24[%c1_233, %c0_234, %c0_235] : memref<4x1x8xf32, #tpu.memory_space<vmem>>, vector<1x1x8xf32>
    %408 = vector.shape_cast %407 : vector<1x1x8xf32> to vector<1x8xf32>
    %409 = vector.broadcast %408 : vector<1x8xf32> to vector<8x8xf32>
    %410 = arith.addf %406, %409 : vector<8x8xf32>
    %c1_236 = arith.constant 1 : index
    %c0_237 = arith.constant 0 : index
    %c0_238 = arith.constant 0 : index
    %411 = vector.load %arg25[%c1_236, %c0_237, %c0_238] : memref<4x32x8xbf16, #tpu.memory_space<vmem>>, vector<1x32x8xbf16>
    %412 = vector.shape_cast %411 : vector<1x32x8xbf16> to vector<32x8xbf16>
    %cst_239 = arith.constant dense<0.000000e+00> : vector<8x8xf32>
    %413 = tpu.matmul %354, %412, %cst_239 {dimension_numbers = #tpu.dot_dimension_numbers<[1], [0], [0], [1], [0, 0, 1, 1], [], []>} : vector<8x32xbf16>, vector<32x8xbf16>, vector<8x8xf32> -> vector<8x8xf32>
    %c1_240 = arith.constant 1 : index
    %c0_241 = arith.constant 0 : index
    %c0_242 = arith.constant 0 : index
    %414 = vector.load %arg26[%c1_240, %c0_241, %c0_242] : memref<4x1x8xf32, #tpu.memory_space<vmem>>, vector<1x1x8xf32>
    %415 = vector.shape_cast %414 : vector<1x1x8xf32> to vector<1x8xf32>
    %416 = vector.broadcast %415 : vector<1x8xf32> to vector<8x8xf32>
    %417 = arith.addf %413, %416 : vector<8x8xf32>
    %c1_243 = arith.constant 1 : index
    %c0_244 = arith.constant 0 : index
    %c0_245 = arith.constant 0 : index
    %418 = vector.load %arg27[%c1_243, %c0_244, %c0_245] : memref<4x32x8xbf16, #tpu.memory_space<vmem>>, vector<1x32x8xbf16>
    %419 = vector.shape_cast %418 : vector<1x32x8xbf16> to vector<32x8xbf16>
    %cst_246 = arith.constant dense<0.000000e+00> : vector<8x8xf32>
    %420 = tpu.matmul %354, %419, %cst_246 {dimension_numbers = #tpu.dot_dimension_numbers<[1], [0], [0], [1], [0, 0, 1, 1], [], []>} : vector<8x32xbf16>, vector<32x8xbf16>, vector<8x8xf32> -> vector<8x8xf32>
    %c1_247 = arith.constant 1 : index
    %c0_248 = arith.constant 0 : index
    %c0_249 = arith.constant 0 : index
    %421 = vector.load %arg28[%c1_247, %c0_248, %c0_249] : memref<4x1x8xf32, #tpu.memory_space<vmem>>, vector<1x1x8xf32>
    %422 = vector.shape_cast %421 : vector<1x1x8xf32> to vector<1x8xf32>
    %423 = vector.broadcast %422 : vector<1x8xf32> to vector<8x8xf32>
    %424 = arith.addf %420, %423 : vector<8x8xf32>
    %cst_250 = arith.constant 0.353553385 : f32
    %425 = vector.broadcast %cst_250 : f32 to vector<8x8xf32>
    %426 = arith.mulf %410, %425 : vector<8x8xf32>
    %427 = arith.truncf %426 : vector<8x8xf32> to vector<8x8xbf16>
    %428 = arith.truncf %417 : vector<8x8xf32> to vector<8x8xbf16>
    %cst_251 = arith.constant dense<0.000000e+00> : vector<8x8xf32>
    %429 = tpu.matmul %427, %428, %cst_251 {dimension_numbers = #tpu.dot_dimension_numbers<[1], [1], [0], [0], [0, 0, 1, 0], [], []>} : vector<8x8xbf16>, vector<8x8xbf16>, vector<8x8xf32> -> vector<8x8xf32>
    %cst_252 = arith.constant -3.40282347E+38 : f32
    %430 = vector.shape_cast %86 : vector<1x8xi1> to vector<1x8xi1>
    %431 = vector.broadcast %430 : vector<1x8xi1> to vector<8x8xi1>
    %432 = vector.broadcast %cst_252 : f32 to vector<8x8xf32>
    %433 = arith.select %431, %432, %429 : vector<8x8xi1>, vector<8x8xf32>
    %cst_253 = arith.constant dense<0xFF800000> : vector<8xf32>
    %434 = vector.multi_reduction <maximumf>, %433, %cst_253 [1] : vector<8x8xf32> to vector<8xf32>
    %435 = vector.shape_cast %434 : vector<8xf32> to vector<8x1xf32>
    %436 = vector.broadcast %435 : vector<8x1xf32> to vector<8x8xf32>
    %437 = arith.subf %433, %436 : vector<8x8xf32>
    %438 = math.exp %437 : vector<8x8xf32>
    %cst_254 = arith.constant dense<0.000000e+00> : vector<8xf32>
    %439 = vector.multi_reduction <add>, %438, %cst_254 [1] : vector<8x8xf32> to vector<8xf32>
    %440 = vector.shape_cast %439 : vector<8xf32> to vector<8x1xf32>
    %441 = tpu.reciprocal %440 {approx = true} : vector<8x1xf32> -> vector<8x1xf32>
    %442 = vector.broadcast %441 : vector<8x1xf32> to vector<8x8xf32>
    %443 = arith.mulf %438, %442 : vector<8x8xf32>
    %444 = arith.truncf %443 : vector<8x8xf32> to vector<8x8xbf16>
    %445 = arith.truncf %424 : vector<8x8xf32> to vector<8x8xbf16>
    %cst_255 = arith.constant dense<0.000000e+00> : vector<8x8xf32>
    %446 = tpu.matmul %444, %445, %cst_255 {dimension_numbers = #tpu.dot_dimension_numbers<[1], [0], [0], [1], [0, 0, 1, 1], [], []>} : vector<8x8xbf16>, vector<8x8xbf16>, vector<8x8xf32> -> vector<8x8xf32>
    %447 = arith.truncf %446 : vector<8x8xf32> to vector<8x8xbf16>
    %c1_256 = arith.constant 1 : index
    %c0_257 = arith.constant 0 : index
    %c0_258 = arith.constant 0 : index
    %448 = vector.load %arg29[%c1_256, %c0_257, %c0_258] : memref<4x8x32xbf16, #tpu.memory_space<vmem>>, vector<1x8x32xbf16>
    %449 = vector.shape_cast %448 : vector<1x8x32xbf16> to vector<8x32xbf16>
    %cst_259 = arith.constant dense<0.000000e+00> : vector<8x32xf32>
    %450 = tpu.matmul %447, %449, %cst_259 {dimension_numbers = #tpu.dot_dimension_numbers<[1], [0], [0], [1], [0, 0, 1, 1], [], []>} : vector<8x8xbf16>, vector<8x32xbf16>, vector<8x32xf32> -> vector<8x32xf32>
    %451 = arith.addf %403, %450 : vector<8x32xf32>
    %c2_260 = arith.constant 2 : index
    %c0_261 = arith.constant 0 : index
    %c0_262 = arith.constant 0 : index
    %452 = vector.load %arg23[%c2_260, %c0_261, %c0_262] : memref<4x32x8xbf16, #tpu.memory_space<vmem>>, vector<1x32x8xbf16>
    %453 = vector.shape_cast %452 : vector<1x32x8xbf16> to vector<32x8xbf16>
    %cst_263 = arith.constant dense<0.000000e+00> : vector<8x8xf32>
    %454 = tpu.matmul %354, %453, %cst_263 {dimension_numbers = #tpu.dot_dimension_numbers<[1], [0], [0], [1], [0, 0, 1, 1], [], []>} : vector<8x32xbf16>, vector<32x8xbf16>, vector<8x8xf32> -> vector<8x8xf32>
    %c2_264 = arith.constant 2 : index
    %c0_265 = arith.constant 0 : index
    %c0_266 = arith.constant 0 : index
    %455 = vector.load %arg24[%c2_264, %c0_265, %c0_266] : memref<4x1x8xf32, #tpu.memory_space<vmem>>, vector<1x1x8xf32>
    %456 = vector.shape_cast %455 : vector<1x1x8xf32> to vector<1x8xf32>
    %457 = vector.broadcast %456 : vector<1x8xf32> to vector<8x8xf32>
    %458 = arith.addf %454, %457 : vector<8x8xf32>
    %c2_267 = arith.constant 2 : index
    %c0_268 = arith.constant 0 : index
    %c0_269 = arith.constant 0 : index
    %459 = vector.load %arg25[%c2_267, %c0_268, %c0_269] : memref<4x32x8xbf16, #tpu.memory_space<vmem>>, vector<1x32x8xbf16>
    %460 = vector.shape_cast %459 : vector<1x32x8xbf16> to vector<32x8xbf16>
    %cst_270 = arith.constant dense<0.000000e+00> : vector<8x8xf32>
    %461 = tpu.matmul %354, %460, %cst_270 {dimension_numbers = #tpu.dot_dimension_numbers<[1], [0], [0], [1], [0, 0, 1, 1], [], []>} : vector<8x32xbf16>, vector<32x8xbf16>, vector<8x8xf32> -> vector<8x8xf32>
    %c2_271 = arith.constant 2 : index
    %c0_272 = arith.constant 0 : index
    %c0_273 = arith.constant 0 : index
    %462 = vector.load %arg26[%c2_271, %c0_272, %c0_273] : memref<4x1x8xf32, #tpu.memory_space<vmem>>, vector<1x1x8xf32>
    %463 = vector.shape_cast %462 : vector<1x1x8xf32> to vector<1x8xf32>
    %464 = vector.broadcast %463 : vector<1x8xf32> to vector<8x8xf32>
    %465 = arith.addf %461, %464 : vector<8x8xf32>
    %c2_274 = arith.constant 2 : index
    %c0_275 = arith.constant 0 : index
    %c0_276 = arith.constant 0 : index
    %466 = vector.load %arg27[%c2_274, %c0_275, %c0_276] : memref<4x32x8xbf16, #tpu.memory_space<vmem>>, vector<1x32x8xbf16>
    %467 = vector.shape_cast %466 : vector<1x32x8xbf16> to vector<32x8xbf16>
    %cst_277 = arith.constant dense<0.000000e+00> : vector<8x8xf32>
    %468 = tpu.matmul %354, %467, %cst_277 {dimension_numbers = #tpu.dot_dimension_numbers<[1], [0], [0], [1], [0, 0, 1, 1], [], []>} : vector<8x32xbf16>, vector<32x8xbf16>, vector<8x8xf32> -> vector<8x8xf32>
    %c2_278 = arith.constant 2 : index
    %c0_279 = arith.constant 0 : index
    %c0_280 = arith.constant 0 : index
    %469 = vector.load %arg28[%c2_278, %c0_279, %c0_280] : memref<4x1x8xf32, #tpu.memory_space<vmem>>, vector<1x1x8xf32>
    %470 = vector.shape_cast %469 : vector<1x1x8xf32> to vector<1x8xf32>
    %471 = vector.broadcast %470 : vector<1x8xf32> to vector<8x8xf32>
    %472 = arith.addf %468, %471 : vector<8x8xf32>
    %cst_281 = arith.constant 0.353553385 : f32
    %473 = vector.broadcast %cst_281 : f32 to vector<8x8xf32>
    %474 = arith.mulf %458, %473 : vector<8x8xf32>
    %475 = arith.truncf %474 : vector<8x8xf32> to vector<8x8xbf16>
    %476 = arith.truncf %465 : vector<8x8xf32> to vector<8x8xbf16>
    %cst_282 = arith.constant dense<0.000000e+00> : vector<8x8xf32>
    %477 = tpu.matmul %475, %476, %cst_282 {dimension_numbers = #tpu.dot_dimension_numbers<[1], [1], [0], [0], [0, 0, 1, 0], [], []>} : vector<8x8xbf16>, vector<8x8xbf16>, vector<8x8xf32> -> vector<8x8xf32>
    %cst_283 = arith.constant -3.40282347E+38 : f32
    %478 = vector.shape_cast %86 : vector<1x8xi1> to vector<1x8xi1>
    %479 = vector.broadcast %478 : vector<1x8xi1> to vector<8x8xi1>
    %480 = vector.broadcast %cst_283 : f32 to vector<8x8xf32>
    %481 = arith.select %479, %480, %477 : vector<8x8xi1>, vector<8x8xf32>
    %cst_284 = arith.constant dense<0xFF800000> : vector<8xf32>
    %482 = vector.multi_reduction <maximumf>, %481, %cst_284 [1] : vector<8x8xf32> to vector<8xf32>
    %483 = vector.shape_cast %482 : vector<8xf32> to vector<8x1xf32>
    %484 = vector.broadcast %483 : vector<8x1xf32> to vector<8x8xf32>
    %485 = arith.subf %481, %484 : vector<8x8xf32>
    %486 = math.exp %485 : vector<8x8xf32>
    %cst_285 = arith.constant dense<0.000000e+00> : vector<8xf32>
    %487 = vector.multi_reduction <add>, %486, %cst_285 [1] : vector<8x8xf32> to vector<8xf32>
    %488 = vector.shape_cast %487 : vector<8xf32> to vector<8x1xf32>
    %489 = tpu.reciprocal %488 {approx = true} : vector<8x1xf32> -> vector<8x1xf32>
    %490 = vector.broadcast %489 : vector<8x1xf32> to vector<8x8xf32>
    %491 = arith.mulf %486, %490 : vector<8x8xf32>
    %492 = arith.truncf %491 : vector<8x8xf32> to vector<8x8xbf16>
    %493 = arith.truncf %472 : vector<8x8xf32> to vector<8x8xbf16>
    %cst_286 = arith.constant dense<0.000000e+00> : vector<8x8xf32>
    %494 = tpu.matmul %492, %493, %cst_286 {dimension_numbers = #tpu.dot_dimension_numbers<[1], [0], [0], [1], [0, 0, 1, 1], [], []>} : vector<8x8xbf16>, vector<8x8xbf16>, vector<8x8xf32> -> vector<8x8xf32>
    %495 = arith.truncf %494 : vector<8x8xf32> to vector<8x8xbf16>
    %c2_287 = arith.constant 2 : index
    %c0_288 = arith.constant 0 : index
    %c0_289 = arith.constant 0 : index
    %496 = vector.load %arg29[%c2_287, %c0_288, %c0_289] : memref<4x8x32xbf16, #tpu.memory_space<vmem>>, vector<1x8x32xbf16>
    %497 = vector.shape_cast %496 : vector<1x8x32xbf16> to vector<8x32xbf16>
    %cst_290 = arith.constant dense<0.000000e+00> : vector<8x32xf32>
    %498 = tpu.matmul %495, %497, %cst_290 {dimension_numbers = #tpu.dot_dimension_numbers<[1], [0], [0], [1], [0, 0, 1, 1], [], []>} : vector<8x8xbf16>, vector<8x32xbf16>, vector<8x32xf32> -> vector<8x32xf32>
    %499 = arith.addf %451, %498 : vector<8x32xf32>
    %c3_291 = arith.constant 3 : index
    %c0_292 = arith.constant 0 : index
    %c0_293 = arith.constant 0 : index
    %500 = vector.load %arg23[%c3_291, %c0_292, %c0_293] : memref<4x32x8xbf16, #tpu.memory_space<vmem>>, vector<1x32x8xbf16>
    %501 = vector.shape_cast %500 : vector<1x32x8xbf16> to vector<32x8xbf16>
    %cst_294 = arith.constant dense<0.000000e+00> : vector<8x8xf32>
    %502 = tpu.matmul %354, %501, %cst_294 {dimension_numbers = #tpu.dot_dimension_numbers<[1], [0], [0], [1], [0, 0, 1, 1], [], []>} : vector<8x32xbf16>, vector<32x8xbf16>, vector<8x8xf32> -> vector<8x8xf32>
    %c3_295 = arith.constant 3 : index
    %c0_296 = arith.constant 0 : index
    %c0_297 = arith.constant 0 : index
    %503 = vector.load %arg24[%c3_295, %c0_296, %c0_297] : memref<4x1x8xf32, #tpu.memory_space<vmem>>, vector<1x1x8xf32>
    %504 = vector.shape_cast %503 : vector<1x1x8xf32> to vector<1x8xf32>
    %505 = vector.broadcast %504 : vector<1x8xf32> to vector<8x8xf32>
    %506 = arith.addf %502, %505 : vector<8x8xf32>
    %c3_298 = arith.constant 3 : index
    %c0_299 = arith.constant 0 : index
    %c0_300 = arith.constant 0 : index
    %507 = vector.load %arg25[%c3_298, %c0_299, %c0_300] : memref<4x32x8xbf16, #tpu.memory_space<vmem>>, vector<1x32x8xbf16>
    %508 = vector.shape_cast %507 : vector<1x32x8xbf16> to vector<32x8xbf16>
    %cst_301 = arith.constant dense<0.000000e+00> : vector<8x8xf32>
    %509 = tpu.matmul %354, %508, %cst_301 {dimension_numbers = #tpu.dot_dimension_numbers<[1], [0], [0], [1], [0, 0, 1, 1], [], []>} : vector<8x32xbf16>, vector<32x8xbf16>, vector<8x8xf32> -> vector<8x8xf32>
    %c3_302 = arith.constant 3 : index
    %c0_303 = arith.constant 0 : index
    %c0_304 = arith.constant 0 : index
    %510 = vector.load %arg26[%c3_302, %c0_303, %c0_304] : memref<4x1x8xf32, #tpu.memory_space<vmem>>, vector<1x1x8xf32>
    %511 = vector.shape_cast %510 : vector<1x1x8xf32> to vector<1x8xf32>
    %512 = vector.broadcast %511 : vector<1x8xf32> to vector<8x8xf32>
    %513 = arith.addf %509, %512 : vector<8x8xf32>
    %c3_305 = arith.constant 3 : index
    %c0_306 = arith.constant 0 : index
    %c0_307 = arith.constant 0 : index
    %514 = vector.load %arg27[%c3_305, %c0_306, %c0_307] : memref<4x32x8xbf16, #tpu.memory_space<vmem>>, vector<1x32x8xbf16>
    %515 = vector.shape_cast %514 : vector<1x32x8xbf16> to vector<32x8xbf16>
    %cst_308 = arith.constant dense<0.000000e+00> : vector<8x8xf32>
    %516 = tpu.matmul %354, %515, %cst_308 {dimension_numbers = #tpu.dot_dimension_numbers<[1], [0], [0], [1], [0, 0, 1, 1], [], []>} : vector<8x32xbf16>, vector<32x8xbf16>, vector<8x8xf32> -> vector<8x8xf32>
    %c3_309 = arith.constant 3 : index
    %c0_310 = arith.constant 0 : index
    %c0_311 = arith.constant 0 : index
    %517 = vector.load %arg28[%c3_309, %c0_310, %c0_311] : memref<4x1x8xf32, #tpu.memory_space<vmem>>, vector<1x1x8xf32>
    %518 = vector.shape_cast %517 : vector<1x1x8xf32> to vector<1x8xf32>
    %519 = vector.broadcast %518 : vector<1x8xf32> to vector<8x8xf32>
    %520 = arith.addf %516, %519 : vector<8x8xf32>
    %cst_312 = arith.constant 0.353553385 : f32
    %521 = vector.broadcast %cst_312 : f32 to vector<8x8xf32>
    %522 = arith.mulf %506, %521 : vector<8x8xf32>
    %523 = arith.truncf %522 : vector<8x8xf32> to vector<8x8xbf16>
    %524 = arith.truncf %513 : vector<8x8xf32> to vector<8x8xbf16>
    %cst_313 = arith.constant dense<0.000000e+00> : vector<8x8xf32>
    %525 = tpu.matmul %523, %524, %cst_313 {dimension_numbers = #tpu.dot_dimension_numbers<[1], [1], [0], [0], [0, 0, 1, 0], [], []>} : vector<8x8xbf16>, vector<8x8xbf16>, vector<8x8xf32> -> vector<8x8xf32>
    %cst_314 = arith.constant -3.40282347E+38 : f32
    %526 = vector.shape_cast %86 : vector<1x8xi1> to vector<1x8xi1>
    %527 = vector.broadcast %526 : vector<1x8xi1> to vector<8x8xi1>
    %528 = vector.broadcast %cst_314 : f32 to vector<8x8xf32>
    %529 = arith.select %527, %528, %525 : vector<8x8xi1>, vector<8x8xf32>
    %cst_315 = arith.constant dense<0xFF800000> : vector<8xf32>
    %530 = vector.multi_reduction <maximumf>, %529, %cst_315 [1] : vector<8x8xf32> to vector<8xf32>
    %531 = vector.shape_cast %530 : vector<8xf32> to vector<8x1xf32>
    %532 = vector.broadcast %531 : vector<8x1xf32> to vector<8x8xf32>
    %533 = arith.subf %529, %532 : vector<8x8xf32>
    %534 = math.exp %533 : vector<8x8xf32>
    %cst_316 = arith.constant dense<0.000000e+00> : vector<8xf32>
    %535 = vector.multi_reduction <add>, %534, %cst_316 [1] : vector<8x8xf32> to vector<8xf32>
    %536 = vector.shape_cast %535 : vector<8xf32> to vector<8x1xf32>
    %537 = tpu.reciprocal %536 {approx = true} : vector<8x1xf32> -> vector<8x1xf32>
    %538 = vector.broadcast %537 : vector<8x1xf32> to vector<8x8xf32>
    %539 = arith.mulf %534, %538 : vector<8x8xf32>
    %540 = arith.truncf %539 : vector<8x8xf32> to vector<8x8xbf16>
    %541 = arith.truncf %520 : vector<8x8xf32> to vector<8x8xbf16>
    %cst_317 = arith.constant dense<0.000000e+00> : vector<8x8xf32>
    %542 = tpu.matmul %540, %541, %cst_317 {dimension_numbers = #tpu.dot_dimension_numbers<[1], [0], [0], [1], [0, 0, 1, 1], [], []>} : vector<8x8xbf16>, vector<8x8xbf16>, vector<8x8xf32> -> vector<8x8xf32>
    %543 = arith.truncf %542 : vector<8x8xf32> to vector<8x8xbf16>
    %c3_318 = arith.constant 3 : index
    %c0_319 = arith.constant 0 : index
    %c0_320 = arith.constant 0 : index
    %544 = vector.load %arg29[%c3_318, %c0_319, %c0_320] : memref<4x8x32xbf16, #tpu.memory_space<vmem>>, vector<1x8x32xbf16>
    %545 = vector.shape_cast %544 : vector<1x8x32xbf16> to vector<8x32xbf16>
    %cst_321 = arith.constant dense<0.000000e+00> : vector<8x32xf32>
    %546 = tpu.matmul %543, %545, %cst_321 {dimension_numbers = #tpu.dot_dimension_numbers<[1], [0], [0], [1], [0, 0, 1, 1], [], []>} : vector<8x8xbf16>, vector<8x32xbf16>, vector<8x32xf32> -> vector<8x32xf32>
    %547 = arith.addf %499, %546 : vector<8x32xf32>
    %c0_322 = arith.constant 0 : index
    %c0_323 = arith.constant 0 : index
    %548 = vector.load %arg30[%c0_322, %c0_323] : memref<1x32xf32, #tpu.memory_space<vmem>>, vector<1x32xf32>
    %549 = vector.broadcast %548 : vector<1x32xf32> to vector<8x32xf32>
    %550 = arith.addf %547, %549 : vector<8x32xf32>
    %551 = arith.addf %353, %550 : vector<8x32xf32>
    %c0_324 = arith.constant 0 : index
    %c0_325 = arith.constant 0 : index
    %552 = vector.load %arg31[%c0_324, %c0_325] : memref<1x32xf32, #tpu.memory_space<vmem>>, vector<1x32xf32>
    %c0_326 = arith.constant 0 : index
    %c0_327 = arith.constant 0 : index
    %553 = vector.load %arg32[%c0_326, %c0_327] : memref<1x32xf32, #tpu.memory_space<vmem>>, vector<1x32xf32>
    %cst_328 = arith.constant dense<0.000000e+00> : vector<8xf32>
    %554 = vector.multi_reduction <add>, %551, %cst_328 [1] : vector<8x32xf32> to vector<8xf32>
    %555 = vector.shape_cast %554 : vector<8xf32> to vector<8x1xf32>
    %cst_329 = arith.constant 3.200000e+01 : f32
    %556 = vector.broadcast %cst_329 : f32 to vector<8x1xf32>
    %557 = arith.divf %555, %556 : vector<8x1xf32>
    %558 = vector.broadcast %557 : vector<8x1xf32> to vector<8x32xf32>
    %559 = arith.subf %551, %558 : vector<8x32xf32>
    %560 = arith.mulf %559, %559 : vector<8x32xf32>
    %cst_330 = arith.constant dense<0.000000e+00> : vector<8xf32>
    %561 = vector.multi_reduction <add>, %560, %cst_330 [1] : vector<8x32xf32> to vector<8xf32>
    %562 = vector.shape_cast %561 : vector<8xf32> to vector<8x1xf32>
    %cst_331 = arith.constant 3.200000e+01 : f32
    %563 = vector.broadcast %cst_331 : f32 to vector<8x1xf32>
    %564 = arith.divf %562, %563 : vector<8x1xf32>
    %565 = vector.broadcast %557 : vector<8x1xf32> to vector<8x32xf32>
    %566 = arith.subf %551, %565 : vector<8x32xf32>
    %cst_332 = arith.constant 9.99999996E-13 : f32
    %567 = vector.broadcast %cst_332 : f32 to vector<8x1xf32>
    %568 = arith.addf %564, %567 : vector<8x1xf32>
    %569 = math.rsqrt %568 : vector<8x1xf32>
    %570 = vector.broadcast %569 : vector<8x1xf32> to vector<8x32xf32>
    %571 = arith.mulf %566, %570 : vector<8x32xf32>
    %572 = vector.broadcast %552 : vector<1x32xf32> to vector<8x32xf32>
    %573 = arith.mulf %571, %572 : vector<8x32xf32>
    %574 = vector.broadcast %553 : vector<1x32xf32> to vector<8x32xf32>
    %575 = arith.addf %573, %574 : vector<8x32xf32>
    %c0_333 = arith.constant 0 : index
    %c0_334 = arith.constant 0 : index
    %576 = vector.load %arg33[%c0_333, %c0_334] : memref<32x64xbf16, #tpu.memory_space<vmem>>, vector<32x64xbf16>
    %c0_335 = arith.constant 0 : index
    %c0_336 = arith.constant 0 : index
    %577 = vector.load %arg34[%c0_335, %c0_336] : memref<1x64xf32, #tpu.memory_space<vmem>>, vector<1x64xf32>
    %578 = arith.truncf %575 : vector<8x32xf32> to vector<8x32xbf16>
    %cst_337 = arith.constant dense<0.000000e+00> : vector<8x64xf32>
    %579 = tpu.matmul %578, %576, %cst_337 {dimension_numbers = #tpu.dot_dimension_numbers<[1], [0], [0], [1], [0, 0, 1, 1], [], []>} : vector<8x32xbf16>, vector<32x64xbf16>, vector<8x64xf32> -> vector<8x64xf32>
    %580 = vector.broadcast %577 : vector<1x64xf32> to vector<8x64xf32>
    %581 = arith.addf %579, %580 : vector<8x64xf32>
    %cst_338 = arith.constant 5.000000e-01 : f32
    %582 = vector.broadcast %cst_338 : f32 to vector<8x64xf32>
    %583 = arith.mulf %582, %581 : vector<8x64xf32>
    %cst_339 = arith.constant 0.707106769 : f32
    %584 = vector.broadcast %cst_339 : f32 to vector<8x64xf32>
    %585 = arith.mulf %581, %584 : vector<8x64xf32>
    %586 = math.erf %585 : vector<8x64xf32>
    %cst_340 = arith.constant 1.000000e+00 : f32
    %587 = vector.broadcast %cst_340 : f32 to vector<8x64xf32>
    %588 = arith.addf %587, %586 : vector<8x64xf32>
    %589 = arith.mulf %583, %588 : vector<8x64xf32>
    %c0_341 = arith.constant 0 : index
    %c0_342 = arith.constant 0 : index
    %590 = vector.load %arg35[%c0_341, %c0_342] : memref<64x32xbf16, #tpu.memory_space<vmem>>, vector<64x32xbf16>
    %c0_343 = arith.constant 0 : index
    %c0_344 = arith.constant 0 : index
    %591 = vector.load %arg36[%c0_343, %c0_344] : memref<1x32xf32, #tpu.memory_space<vmem>>, vector<1x32xf32>
    %592 = arith.truncf %589 : vector<8x64xf32> to vector<8x64xbf16>
    %cst_345 = arith.constant dense<0.000000e+00> : vector<8x32xf32>
    %593 = tpu.matmul %592, %590, %cst_345 {dimension_numbers = #tpu.dot_dimension_numbers<[1], [0], [0], [1], [0, 0, 1, 1], [], []>} : vector<8x64xbf16>, vector<64x32xbf16>, vector<8x32xf32> -> vector<8x32xf32>
    %594 = vector.broadcast %591 : vector<1x32xf32> to vector<8x32xf32>
    %595 = arith.addf %593, %594 : vector<8x32xf32>
    %596 = arith.addf %575, %595 : vector<8x32xf32>
    %c0_346 = arith.constant 0 : index
    %c0_347 = arith.constant 0 : index
    %597 = vector.load %arg37[%c0_346, %c0_347] : memref<1x32xf32, #tpu.memory_space<vmem>>, vector<1x32xf32>
    %c0_348 = arith.constant 0 : index
    %c0_349 = arith.constant 0 : index
    %598 = vector.load %arg38[%c0_348, %c0_349] : memref<1x32xf32, #tpu.memory_space<vmem>>, vector<1x32xf32>
    %cst_350 = arith.constant dense<0.000000e+00> : vector<8xf32>
    %599 = vector.multi_reduction <add>, %596, %cst_350 [1] : vector<8x32xf32> to vector<8xf32>
    %600 = vector.shape_cast %599 : vector<8xf32> to vector<8x1xf32>
    %cst_351 = arith.constant 3.200000e+01 : f32
    %601 = vector.broadcast %cst_351 : f32 to vector<8x1xf32>
    %602 = arith.divf %600, %601 : vector<8x1xf32>
    %603 = vector.broadcast %602 : vector<8x1xf32> to vector<8x32xf32>
    %604 = arith.subf %596, %603 : vector<8x32xf32>
    %605 = arith.mulf %604, %604 : vector<8x32xf32>
    %cst_352 = arith.constant dense<0.000000e+00> : vector<8xf32>
    %606 = vector.multi_reduction <add>, %605, %cst_352 [1] : vector<8x32xf32> to vector<8xf32>
    %607 = vector.shape_cast %606 : vector<8xf32> to vector<8x1xf32>
    %cst_353 = arith.constant 3.200000e+01 : f32
    %608 = vector.broadcast %cst_353 : f32 to vector<8x1xf32>
    %609 = arith.divf %607, %608 : vector<8x1xf32>
    %610 = vector.broadcast %602 : vector<8x1xf32> to vector<8x32xf32>
    %611 = arith.subf %596, %610 : vector<8x32xf32>
    %cst_354 = arith.constant 9.99999996E-13 : f32
    %612 = vector.broadcast %cst_354 : f32 to vector<8x1xf32>
    %613 = arith.addf %609, %612 : vector<8x1xf32>
    %614 = math.rsqrt %613 : vector<8x1xf32>
    %615 = vector.broadcast %614 : vector<8x1xf32> to vector<8x32xf32>
    %616 = arith.mulf %611, %615 : vector<8x32xf32>
    %617 = vector.broadcast %597 : vector<1x32xf32> to vector<8x32xf32>
    %618 = arith.mulf %616, %617 : vector<8x32xf32>
    %619 = vector.broadcast %598 : vector<1x32xf32> to vector<8x32xf32>
    %620 = arith.addf %618, %619 : vector<8x32xf32>
    %621 = vector.extract_strided_slice %620 {offsets = [0, 0], sizes = [1, 32], strides = [1, 1]} : vector<8x32xf32> to vector<1x32xf32>
    %c0_355 = arith.constant 0 : index
    %c0_356 = arith.constant 0 : index
    %622 = vector.load %arg39[%c0_355, %c0_356] : memref<32x4xbf16, #tpu.memory_space<vmem>>, vector<32x4xbf16>
    %c0_357 = arith.constant 0 : index
    %c0_358 = arith.constant 0 : index
    %623 = vector.load %arg40[%c0_357, %c0_358] : memref<1x4xf32, #tpu.memory_space<vmem>>, vector<1x4xf32>
    %624 = arith.truncf %621 : vector<1x32xf32> to vector<1x32xbf16>
    %cst_359 = arith.constant dense<0.000000e+00> : vector<1x4xf32>
    %625 = tpu.matmul %624, %622, %cst_359 {dimension_numbers = #tpu.dot_dimension_numbers<[1], [0], [0], [1], [0, 0, 1, 1], [], []>} : vector<1x32xbf16>, vector<32x4xbf16>, vector<1x4xf32> -> vector<1x4xf32>
    %626 = arith.addf %625, %623 : vector<1x4xf32>
    %c0_360 = arith.constant 0 : index
    %c0_361 = arith.constant 0 : index
    %c0_362 = arith.constant 0 : index
    %627 = vector.load %arg41[%c0_360, %c0_361, %c0_362] : memref<1x1x4xf32, #tpu.memory_space<vmem>>, vector<1x1x4xf32>
    %628 = vector.shape_cast %627 : vector<1x1x4xf32> to vector<1x4xf32>
    %629 = vector.shape_cast %626 : vector<1x4xf32> to vector<1x1x4xf32>
    tpu.vector_store %arg41[%c0_360, %c0_361, %c0_362], %629 {strides = array<i32>} : memref<1x1x4xf32, #tpu.memory_space<vmem>>, vector<1x1x4xf32>,
    return
  }
  func.func @transform_0(%arg0: i32, %arg1: memref<16xi32, #tpu.memory_space<smem>>) -> (i32, i32, i32) {
    %c0_i32 = arith.constant 0 : i32
    %c0_i32_0 = arith.constant 0 : i32
    %c0_i32_1 = arith.constant 0 : i32
    return %arg0, %c0_i32, %c0_i32_0 : i32, i32, i32
  }
  func.func @transform_1(%arg0: i32, %arg1: memref<16xi32, #tpu.memory_space<smem>>) -> (i32, i32) {
    %c0_i32 = arith.constant 0 : i32
    %c0_i32_0 = arith.constant 0 : i32
    %c0_i32_1 = arith.constant 0 : i32
    return %c0_i32, %c0_i32_0 : i32, i32
  }
  func.func @transform_2(%arg0: i32, %arg1: memref<16xi32, #tpu.memory_space<smem>>) -> (i32, i32) {
    %c0_i32 = arith.constant 0 : i32
    %c0_i32_0 = arith.constant 0 : i32
    %c0_i32_1 = arith.constant 0 : i32
    return %c0_i32, %c0_i32_0 : i32, i32
  }
  func.func @transform_3(%arg0: i32, %arg1: memref<16xi32, #tpu.memory_space<smem>>) -> (i32, i32) {
    %c0_i32 = arith.constant 0 : i32
    %c0_i32_0 = arith.constant 0 : i32
    %c0_i32_1 = arith.constant 0 : i32
    return %c0_i32, %c0_i32_0 : i32, i32
  }
  func.func @transform_4(%arg0: i32, %arg1: memref<16xi32, #tpu.memory_space<smem>>) -> (i32, i32) {
    %c0_i32 = arith.constant 0 : i32
    %c0_i32_0 = arith.constant 0 : i32
    %c0_i32_1 = arith.constant 0 : i32
    return %c0_i32, %c0_i32_0 : i32, i32
  }
  func.func @transform_5(%arg0: i32, %arg1: memref<16xi32, #tpu.memory_space<smem>>) -> (i32, i32, i32) {
    %c0_i32 = arith.constant 0 : i32
    %c0_i32_0 = arith.constant 0 : i32
    %c0_i32_1 = arith.constant 0 : i32
    %c0_i32_2 = arith.constant 0 : i32
    return %c0_i32, %c0_i32_0, %c0_i32_1 : i32, i32, i32
  }
  func.func @transform_6(%arg0: i32, %arg1: memref<16xi32, #tpu.memory_space<smem>>) -> (i32, i32, i32) {
    %c0_i32 = arith.constant 0 : i32
    %c0_i32_0 = arith.constant 0 : i32
    %c0_i32_1 = arith.constant 0 : i32
    %c0_i32_2 = arith.constant 0 : i32
    return %c0_i32, %c0_i32_0, %c0_i32_1 : i32, i32, i32
  }
  func.func @transform_7(%arg0: i32, %arg1: memref<16xi32, #tpu.memory_space<smem>>) -> (i32, i32, i32) {
    %c0_i32 = arith.constant 0 : i32
    %c0_i32_0 = arith.constant 0 : i32
    %c0_i32_1 = arith.constant 0 : i32
    %c0_i32_2 = arith.constant 0 : i32
    return %c0_i32, %c0_i32_0, %c0_i32_1 : i32, i32, i32
  }
  func.func @transform_8(%arg0: i32, %arg1: memref<16xi32, #tpu.memory_space<smem>>) -> (i32, i32, i32) {
    %c0_i32 = arith.constant 0 : i32
    %c0_i32_0 = arith.constant 0 : i32
    %c0_i32_1 = arith.constant 0 : i32
    %c0_i32_2 = arith.constant 0 : i32
    return %c0_i32, %c0_i32_0, %c0_i32_1 : i32, i32, i32
  }
  func.func @transform_9(%arg0: i32, %arg1: memref<16xi32, #tpu.memory_space<smem>>) -> (i32, i32, i32) {
    %c0_i32 = arith.constant 0 : i32
    %c0_i32_0 = arith.constant 0 : i32
    %c0_i32_1 = arith.constant 0 : i32
    %c0_i32_2 = arith.constant 0 : i32
    return %c0_i32, %c0_i32_0, %c0_i32_1 : i32, i32, i32
  }
  func.func @transform_10(%arg0: i32, %arg1: memref<16xi32, #tpu.memory_space<smem>>) -> (i32, i32, i32) {
    %c0_i32 = arith.constant 0 : i32
    %c0_i32_0 = arith.constant 0 : i32
    %c0_i32_1 = arith.constant 0 : i32
    %c0_i32_2 = arith.constant 0 : i32
    return %c0_i32, %c0_i32_0, %c0_i32_1 : i32, i32, i32
  }
  func.func @transform_11(%arg0: i32, %arg1: memref<16xi32, #tpu.memory_space<smem>>) -> (i32, i32, i32) {
    %c0_i32 = arith.constant 0 : i32
    %c0_i32_0 = arith.constant 0 : i32
    %c0_i32_1 = arith.constant 0 : i32
    %c0_i32_2 = arith.constant 0 : i32
    return %c0_i32, %c0_i32_0, %c0_i32_1 : i32, i32, i32
  }
  func.func @transform_12(%arg0: i32, %arg1: memref<16xi32, #tpu.memory_space<smem>>) -> (i32, i32) {
    %c0_i32 = arith.constant 0 : i32
    %c0_i32_0 = arith.constant 0 : i32
    %c0_i32_1 = arith.constant 0 : i32
    return %c0_i32, %c0_i32_0 : i32, i32
  }
  func.func @transform_13(%arg0: i32, %arg1: memref<16xi32, #tpu.memory_space<smem>>) -> (i32, i32) {
    %c0_i32 = arith.constant 0 : i32
    %c0_i32_0 = arith.constant 0 : i32
    %c0_i32_1 = arith.constant 0 : i32
    return %c0_i32, %c0_i32_0 : i32, i32
  }
  func.func @transform_14(%arg0: i32, %arg1: memref<16xi32, #tpu.memory_space<smem>>) -> (i32, i32) {
    %c0_i32 = arith.constant 0 : i32
    %c0_i32_0 = arith.constant 0 : i32
    %c0_i32_1 = arith.constant 0 : i32
    return %c0_i32, %c0_i32_0 : i32, i32
  }
  func.func @transform_15(%arg0: i32, %arg1: memref<16xi32, #tpu.memory_space<smem>>) -> (i32, i32) {
    %c0_i32 = arith.constant 0 : i32
    %c0_i32_0 = arith.constant 0 : i32
    %c0_i32_1 = arith.constant 0 : i32
    return %c0_i32, %c0_i32_0 : i32, i32
  }
  func.func @transform_16(%arg0: i32, %arg1: memref<16xi32, #tpu.memory_space<smem>>) -> (i32, i32) {
    %c0_i32 = arith.constant 0 : i32
    %c0_i32_0 = arith.constant 0 : i32
    %c0_i32_1 = arith.constant 0 : i32
    return %c0_i32, %c0_i32_0 : i32, i32
  }
  func.func @transform_17(%arg0: i32, %arg1: memref<16xi32, #tpu.memory_space<smem>>) -> (i32, i32) {
    %c0_i32 = arith.constant 0 : i32
    %c0_i32_0 = arith.constant 0 : i32
    %c0_i32_1 = arith.constant 0 : i32
    return %c0_i32, %c0_i32_0 : i32, i32
  }
  func.func @transform_18(%arg0: i32, %arg1: memref<16xi32, #tpu.memory_space<smem>>) -> (i32, i32) {
    %c0_i32 = arith.constant 0 : i32
    %c0_i32_0 = arith.constant 0 : i32
    %c0_i32_1 = arith.constant 0 : i32
    return %c0_i32, %c0_i32_0 : i32, i32
  }
  func.func @transform_19(%arg0: i32, %arg1: memref<16xi32, #tpu.memory_space<smem>>) -> (i32, i32) {
    %c0_i32 = arith.constant 0 : i32
    %c0_i32_0 = arith.constant 0 : i32
    %c0_i32_1 = arith.constant 0 : i32
    return %c0_i32, %c0_i32_0 : i32, i32
  }
  func.func @transform_20(%arg0: i32, %arg1: memref<16xi32, #tpu.memory_space<smem>>) -> (i32, i32) {
    %c0_i32 = arith.constant 0 : i32
    %c0_i32_0 = arith.constant 0 : i32
    %c0_i32_1 = arith.constant 0 : i32
    return %c0_i32, %c0_i32_0 : i32, i32
  }
  func.func @transform_21(%arg0: i32, %arg1: memref<16xi32, #tpu.memory_space<smem>>) -> (i32, i32, i32) {
    %c0_i32 = arith.constant 0 : i32
    %c0_i32_0 = arith.constant 0 : i32
    %c0_i32_1 = arith.constant 0 : i32
    %c0_i32_2 = arith.constant 0 : i32
    return %c0_i32, %c0_i32_0, %c0_i32_1 : i32, i32, i32
  }
  func.func @transform_22(%arg0: i32, %arg1: memref<16xi32, #tpu.memory_space<smem>>) -> (i32, i32, i32) {
    %c0_i32 = arith.constant 0 : i32
    %c0_i32_0 = arith.constant 0 : i32
    %c0_i32_1 = arith.constant 0 : i32
    %c0_i32_2 = arith.constant 0 : i32
    return %c0_i32, %c0_i32_0, %c0_i32_1 : i32, i32, i32
  }
  func.func @transform_23(%arg0: i32, %arg1: memref<16xi32, #tpu.memory_space<smem>>) -> (i32, i32, i32) {
    %c0_i32 = arith.constant 0 : i32
    %c0_i32_0 = arith.constant 0 : i32
    %c0_i32_1 = arith.constant 0 : i32
    %c0_i32_2 = arith.constant 0 : i32
    return %c0_i32, %c0_i32_0, %c0_i32_1 : i32, i32, i32
  }
  func.func @transform_24(%arg0: i32, %arg1: memref<16xi32, #tpu.memory_space<smem>>) -> (i32, i32, i32) {
    %c0_i32 = arith.constant 0 : i32
    %c0_i32_0 = arith.constant 0 : i32
    %c0_i32_1 = arith.constant 0 : i32
    %c0_i32_2 = arith.constant 0 : i32
    return %c0_i32, %c0_i32_0, %c0_i32_1 : i32, i32, i32
  }
  func.func @transform_25(%arg0: i32, %arg1: memref<16xi32, #tpu.memory_space<smem>>) -> (i32, i32, i32) {
    %c0_i32 = arith.constant 0 : i32
    %c0_i32_0 = arith.constant 0 : i32
    %c0_i32_1 = arith.constant 0 : i32
    %c0_i32_2 = arith.constant 0 : i32
    return %c0_i32, %c0_i32_0, %c0_i32_1 : i32, i32, i32
  }
  func.func @transform_26(%arg0: i32, %arg1: memref<16xi32, #tpu.memory_space<smem>>) -> (i32, i32, i32) {
    %c0_i32 = arith.constant 0 : i32
    %c0_i32_0 = arith.constant 0 : i32
    %c0_i32_1 = arith.constant 0 : i32
    %c0_i32_2 = arith.constant 0 : i32
    return %c0_i32, %c0_i32_0, %c0_i32_1 : i32, i32, i32
  }
  func.func @transform_27(%arg0: i32, %arg1: memref<16xi32, #tpu.memory_space<smem>>) -> (i32, i32, i32) {
    %c0_i32 = arith.constant 0 : i32
    %c0_i32_0 = arith.constant 0 : i32
    %c0_i32_1 = arith.constant 0 : i32
    %c0_i32_2 = arith.constant 0 : i32
    return %c0_i32, %c0_i32_0, %c0_i32_1 : i32, i32, i32
  }
  func.func @transform_28(%arg0: i32, %arg1: memref<16xi32, #tpu.memory_space<smem>>) -> (i32, i32) {
    %c0_i32 = arith.constant 0 : i32
    %c0_i32_0 = arith.constant 0 : i32
    %c0_i32_1 = arith.constant 0 : i32
    return %c0_i32, %c0_i32_0 : i32, i32
  }
  func.func @transform_29(%arg0: i32, %arg1: memref<16xi32, #tpu.memory_space<smem>>) -> (i32, i32) {
    %c0_i32 = arith.constant 0 : i32
    %c0_i32_0 = arith.constant 0 : i32
    %c0_i32_1 = arith.constant 0 : i32
    return %c0_i32, %c0_i32_0 : i32, i32
  }
  func.func @transform_30(%arg0: i32, %arg1: memref<16xi32, #tpu.memory_space<smem>>) -> (i32, i32) {
    %c0_i32 = arith.constant 0 : i32
    %c0_i32_0 = arith.constant 0 : i32
    %c0_i32_1 = arith.constant 0 : i32
    return %c0_i32, %c0_i32_0 : i32, i32
  }
  func.func @transform_31(%arg0: i32, %arg1: memref<16xi32, #tpu.memory_space<smem>>) -> (i32, i32) {
    %c0_i32 = arith.constant 0 : i32
    %c0_i32_0 = arith.constant 0 : i32
    %c0_i32_1 = arith.constant 0 : i32
    return %c0_i32, %c0_i32_0 : i32, i32
  }
  func.func @transform_32(%arg0: i32, %arg1: memref<16xi32, #tpu.memory_space<smem>>) -> (i32, i32) {
    %c0_i32 = arith.constant 0 : i32
    %c0_i32_0 = arith.constant 0 : i32
    %c0_i32_1 = arith.constant 0 : i32
    return %c0_i32, %c0_i32_0 : i32, i32
  }
  func.func @transform_33(%arg0: i32, %arg1: memref<16xi32, #tpu.memory_space<smem>>) -> (i32, i32) {
    %c0_i32 = arith.constant 0 : i32
    %c0_i32_0 = arith.constant 0 : i32
    %c0_i32_1 = arith.constant 0 : i32
    return %c0_i32, %c0_i32_0 : i32, i32
  }
  func.func @transform_34(%arg0: i32, %arg1: memref<16xi32, #tpu.memory_space<smem>>) -> (i32, i32) {
    %c0_i32 = arith.constant 0 : i32
    %c0_i32_0 = arith.constant 0 : i32
    %c0_i32_1 = arith.constant 0 : i32
    return %c0_i32, %c0_i32_0 : i32, i32
  }
  func.func @transform_35(%arg0: i32, %arg1: memref<16xi32, #tpu.memory_space<smem>>) -> (i32, i32) {
    %c0_i32 = arith.constant 0 : i32
    %c0_i32_0 = arith.constant 0 : i32
    %c0_i32_1 = arith.constant 0 : i32
    return %c0_i32, %c0_i32_0 : i32, i32
  }
  func.func @transform_36(%arg0: i32, %arg1: memref<16xi32, #tpu.memory_space<smem>>) -> (i32, i32) {
    %c0_i32 = arith.constant 0 : i32
    %c0_i32_0 = arith.constant 0 : i32
    %c0_i32_1 = arith.constant 0 : i32
    return %c0_i32, %c0_i32_0 : i32, i32
  }
  func.func @transform_37(%arg0: i32, %arg1: memref<16xi32, #tpu.memory_space<smem>>) -> (i32, i32) {
    %c0_i32 = arith.constant 0 : i32
    %c0_i32_0 = arith.constant 0 : i32
    %c0_i32_1 = arith.constant 0 : i32
    return %c0_i32, %c0_i32_0 : i32, i32
  }
  func.func @transform_38(%arg0: i32, %arg1: memref<16xi32, #tpu.memory_space<smem>>) -> (i32, i32) {
    %c0_i32 = arith.constant 0 : i32
    %c0_i32_0 = arith.constant 0 : i32
    %c0_i32_1 = arith.constant 0 : i32
    return %c0_i32, %c0_i32_0 : i32, i32
  }
  func.func @transform_39(%arg0: i32, %arg1: memref<16xi32, #tpu.memory_space<smem>>) -> (i32, i32, i32) {
    %c0_i32 = arith.constant 0 : i32
    %c0_i32_0 = arith.constant 0 : i32
    %c0_i32_1 = arith.constant 0 : i32
    return %arg0, %c0_i32, %c0_i32_0 : i32, i32, i32
  }
}

</mosaic_0001>

<llo_original>
// kernel: tpu_custom_call.1
$region0: #{tpu_custom_call.1}
  #allocation0 [shape = 'u32[]', space=smem, size = 0x4, offset = 0x4, fixed_abs, tag = 'smem constant byte address 0x4 - core index']
  #allocation1 [shape = 'u32[144,128]{1,0:T(1,128)}', space=vmem, size = 0x12000, scoped, tag = 'internal scratch']
  #allocation2 [shape = 'f32[8,32]{1,0:T(8,128)}', space=vmem, size = 0x1000, scoped, tag = 'scratch operand']
  #allocation3 [shape = 's32[1]{0}', space=sflag, size = 0x4, scoped, tag = 'scoped memory for tpu_custom_call.1']
  #allocation4 [shape = 'u8[512]{0}', space=smem, size = 0x200, scoped, tag = 'prefetched SMEM operand 0']
  %s0 = inlined_call_operand.smem [shape: u32[41], index: -1, kind: input, shape index: {}]
  %s1 = sld [smem:[%s0]]
  %s2 = scalar_lea.smem %s0, 1
  %s3 = sld [smem:[%s2]]
  %s4 = scalar_lea.smem %s0, 2
  %s5 = sld [smem:[%s4]]
  %s6 = scalar_lea.smem %s0, 3
  %s7 = sld [smem:[%s6]]
  %s8 = scalar_lea.smem %s0, 4
  %s9 = sld [smem:[%s8]]
  %s10 = scalar_lea.smem %s0, 5
  %s11 = sld [smem:[%s10]]
  %s12 = scalar_lea.smem %s0, 6
  %s13 = sld [smem:[%s12]]
  %s14 = scalar_lea.smem %s0, 7
  %s15 = sld [smem:[%s14]]
  %s16 = scalar_lea.smem %s0, 8
  %s17 = sld [smem:[%s16]]
  %s18 = scalar_lea.smem %s0, 9
  %s19 = sld [smem:[%s18]]
  %s20 = scalar_lea.smem %s0, 10
  %s21 = sld [smem:[%s20]]
  %s22 = scalar_lea.smem %s0, 11
  %s23 = sld [smem:[%s22]]
  %s24 = scalar_lea.smem %s0, 12
  %s25 = sld [smem:[%s24]]
  %s26 = scalar_lea.smem %s0, 13
  %s27 = sld [smem:[%s26]]
  %s28 = scalar_lea.smem %s0, 14
  %s29 = sld [smem:[%s28]]
  %s30 = scalar_lea.smem %s0, 15
  %s31 = sld [smem:[%s30]]
  %s32 = scalar_lea.smem %s0, 16
  %s33 = sld [smem:[%s32]]
  %s34 = scalar_lea.smem %s0, 17
  %s35 = sld [smem:[%s34]]
  %s36 = scalar_lea.smem %s0, 18
  %s37 = sld [smem:[%s36]]
  %s38 = scalar_lea.smem %s0, 19
  %s39 = sld [smem:[%s38]]
  %s40 = scalar_lea.smem %s0, 20
  %s41 = sld [smem:[%s40]]
  %s42 = scalar_lea.smem %s0, 21
  %s43 = sld [smem:[%s42]]
  %s44 = scalar_lea.smem %s0, 22
  %s45 = sld [smem:[%s44]]
  %s46 = scalar_lea.smem %s0, 23
  %s47 = sld [smem:[%s46]]
  %s48 = scalar_lea.smem %s0, 24
  %s49 = sld [smem:[%s48]]
  %s50 = scalar_lea.smem %s0, 25
  %s51 = sld [smem:[%s50]]
  %s52 = scalar_lea.smem %s0, 26
  %s53 = sld [smem:[%s52]]
  %s54 = scalar_lea.smem %s0, 27
  %s55 = sld [smem:[%s54]]
  %s56 = scalar_lea.smem %s0, 28
  %s57 = sld [smem:[%s56]]
  %s58 = scalar_lea.smem %s0, 29
  %s59 = sld [smem:[%s58]]
  %s60 = scalar_lea.smem %s0, 30
  %s61 = sld [smem:[%s60]]
  %s62 = scalar_lea.smem %s0, 31
  %s63 = sld [smem:[%s62]]
  %s64 = scalar_lea.smem %s0, 32
  %s65 = sld [smem:[%s64]]
  %s66 = scalar_lea.smem %s0, 33
  %s67 = sld [smem:[%s66]]
  %s68 = scalar_lea.smem %s0, 34
  %s69 = sld [smem:[%s68]]
  %s70 = scalar_lea.smem %s0, 35
  %s71 = sld [smem:[%s70]]
  %s72 = scalar_lea.smem %s0, 36
  %s73 = sld [smem:[%s72]]
  %s74 = scalar_lea.smem %s0, 37
  %s75 = sld [smem:[%s74]]
  %s76 = scalar_lea.smem %s0, 38
  %s77 = sld [smem:[%s76]]
  %s78 = scalar_lea.smem %s0, 39
  %s79 = sld [smem:[%s78]]
  %s80 = scalar_lea.smem %s0, 40
  %s81 = sld [smem:[%s80]]
  %s82 = sld [smem:[#allocation0]]
  $region189: #{tpu_custom_call.1} parent=0
    _
  %s84 = ssub.s32 1, %s82
  %s85 = scalar_select 0, %s84, %s82
  %s86 = sshll.u32 %s1, 4
  %s87 = int_to_ptr.vmem [resolvable:$true] %s86
  %89 = dma.vmem_to_smem %s87, 16, [#allocation4], [#allocation3]
  %90 = dma.done [#allocation3], 16
  %91 = sfence
  $region1: #{tpu_custom_call.1} parent=0
    #allocation5 [shape = 'u8[1024]{0}', space=vmem, size = 0x400, scoped, tag = 'output window, operand 0']
    #allocation6 [shape = 's32[2]{0}', space=sflag, size = 0x8, scoped, tag = 'scoped memory for tpu_custom_call.1']
    %92 = vsyncpa [#allocation6], 0
    %s93 = scalar_lea.sflag [#allocation6], 1
    %94 = vsyncpa %s93, 0
    loop: start=0, step=1, limit=4
    $region2: #{tpu_custom_call.1} parent=1 // loop_pre_header
      _
    $region3: #{tpu_custom_call.1} parent=1 // loop_header
      %s96 = sphi 0, %s100
      %p97 = scmp.ge.s32.totalorder %s96, 4
      %s106 = sphi 0, %s108
      %s109 = sphi 0, %s106
      %s110 = sphi 0, %s109
      %s126 = sphi 0, %s110
      %s130 = sphi 0, %s130
      %s132 = sphi 0, %s130
      %s133 = sphi 0, %s132
      %s147 = sphi 0, %s133
      %s151 = sphi 0, %s151
      %s153 = sphi 0, %s151
      %s154 = sphi 0, %s153
      %s168 = sphi 0, %s154
      %s172 = sphi 0, %s172
      %s174 = sphi 0, %s172
      %s175 = sphi 0, %s174
      %s189 = sphi 0, %s175
      %s193 = sphi 0, %s193
      %s195 = sphi 0, %s193
      %s196 = sphi 0, %s195
      %s210 = sphi 0, %s196
      %s214 = sphi 0, %s214
      %s216 = sphi 0, %s214
      %s217 = sphi 0, %s216
      %s231 = sphi 0, %s217
      %s235 = sphi 0, %s235
      %s237 = sphi 0, %s235
      %s238 = sphi 0, %s237
      %s252 = sphi 0, %s238
      %s256 = sphi 0, %s256
      %s258 = sphi 0, %s256
      %s259 = sphi 0, %s258
      %s273 = sphi 0, %s259
      %s277 = sphi 0, %s277
      %s279 = sphi 0, %s277
      %s280 = sphi 0, %s279
      %s294 = sphi 0, %s280
      %s298 = sphi 0, %s298
      %s300 = sphi 0, %s298
      %s301 = sphi 0, %s300
      %s315 = sphi 0, %s301
      %s319 = sphi 0, %s319
      %s321 = sphi 0, %s319
      %s322 = sphi 0, %s321
      %s336 = sphi 0, %s322
      %s340 = sphi 0, %s340
      %s342 = sphi 0, %s340
      %s343 = sphi 0, %s342
      %s357 = sphi 0, %s343
      %s361 = sphi 0, %s361
      %s363 = sphi 0, %s361
      %s364 = sphi 0, %s363
      %s378 = sphi 0, %s364
      %s382 = sphi 0, %s382
      %s384 = sphi 0, %s382
      %s385 = sphi 0, %s384
      %s399 = sphi 0, %s385
      %s403 = sphi 0, %s403
      %s405 = sphi 0, %s403
      %s406 = sphi 0, %s405
      %s420 = sphi 0, %s406
      %s424 = sphi 0, %s424
      %s426 = sphi 0, %s424
      %s427 = sphi 0, %s426
      %s441 = sphi 0, %s427
      %s445 = sphi 0, %s445
      %s447 = sphi 0, %s445
      %s448 = sphi 0, %s447
      %s462 = sphi 0, %s448
      %s466 = sphi 0, %s466
      %s468 = sphi 0, %s466
      %s469 = sphi 0, %s468
      %s483 = sphi 0, %s469
      %s487 = sphi 0, %s487
      %s489 = sphi 0, %s487
      %s490 = sphi 0, %s489
      %s504 = sphi 0, %s490
      %s508 = sphi 0, %s508
      %s510 = sphi 0, %s508
      %s511 = sphi 0, %s510
      %s525 = sphi 0, %s511
      %s529 = sphi 0, %s529
      %s531 = sphi 0, %s529
      %s532 = sphi 0, %s531
      %s546 = sphi 0, %s532
      %s550 = sphi 0, %s550
      %s552 = sphi 0, %s550
      %s553 = sphi 0, %s552
      %s567 = sphi 0, %s553
      %s571 = sphi 0, %s571
      %s573 = sphi 0, %s571
      %s574 = sphi 0, %s573
      %s588 = sphi 0, %s574
      %s592 = sphi 0, %s592
      %s594 = sphi 0, %s592
      %s595 = sphi 0, %s594
      %s609 = sphi 0, %s595
      %s613 = sphi 0, %s613
      %s615 = sphi 0, %s613
      %s616 = sphi 0, %s615
      %s630 = sphi 0, %s616
      %s634 = sphi 0, %s634
      %s636 = sphi 0, %s634
      %s637 = sphi 0, %s636
      %s651 = sphi 0, %s637
      %s655 = sphi 0, %s655
      %s657 = sphi 0, %s655
      %s658 = sphi 0, %s657
      %s672 = sphi 0, %s658
      %s676 = sphi 0, %s676
      %s678 = sphi 0, %s676
      %s679 = sphi 0, %s678
      %s693 = sphi 0, %s679
      %s697 = sphi 0, %s697
      %s699 = sphi 0, %s697
      %s700 = sphi 0, %s699
      %s714 = sphi 0, %s700
      %s718 = sphi 0, %s718
      %s720 = sphi 0, %s718
      %s721 = sphi 0, %s720
      %s735 = sphi 0, %s721
      %s739 = sphi 0, %s739
      %s741 = sphi 0, %s739
      %s742 = sphi 0, %s741
      %s756 = sphi 0, %s742
      %s760 = sphi 0, %s760
      %s762 = sphi 0, %s760
      %s763 = sphi 0, %s762
      %s777 = sphi 0, %s763
      %s781 = sphi 0, %s781
      %s783 = sphi 0, %s781
      %s784 = sphi 0, %s783
      %s798 = sphi 0, %s784
      %s802 = sphi 0, %s802
      %s804 = sphi 0, %s802
      %s805 = sphi 0, %s804
      %s819 = sphi 0, %s805
      %s823 = sphi 0, %s823
      %s825 = sphi 0, %s823
      %s826 = sphi 0, %s825
      %s840 = sphi 0, %s826
      %s844 = sphi 0, %s844
      %s846 = sphi 0, %s844
      %s847 = sphi 0, %s846
      %s861 = sphi 0, %s847
      %s865 = sphi 0, %s865
      %s867 = sphi 0, %s865
      %s868 = sphi 0, %s867
      %s882 = sphi 0, %s868
      %s886 = sphi 0, %s886
      %s888 = sphi 0, %s886
      %s889 = sphi 0, %s888
      %s903 = sphi 0, %s889
      %s907 = sphi 0, %s907
      %s909 = sphi 0, %s907
      %s910 = sphi 0, %s909
      %s924 = sphi 0, %s910
      %s930 = sphi 0, %s932
      %s933 = sphi 0, %s930
      %s934 = sphi 0, %s933
      %s950 = sphi 0, %s934
    $region4: #{tpu_custom_call.1} parent=1 // loop_header_branch
      %99 = sbr.rel (%p97) target = $region8
    $region5: #{tpu_custom_call.1} parent=1 // loop_body
      %s101 = ssub.s32 %s96, 1
      %s102 = ssub.s32 %s96, 2
      %s103 = sadd.s32 %s96, 1
      %s104 = ssub.s32 %s96, %s103
      %p105 = scmp.eq.s32.totalorder %s104, 0
      %s107 = sadd.s32 %s106, 1
      %s108 = scalar_select %p105, %s106, %s107
      %p111 = pneg %p105
      %p112 = scmp.eq.s32.totalorder %s96, 1
      %p113 = por %p111, %p112
      %p114 = scmp.ne.s32.totalorder %s106, %s109
      %p115 = scmp.eq.s32.totalorder %s96, 0
      %p116 = por %p114, %p115
      %p117 = scmp.ne.s32.totalorder %s106, %s109
      %p118 = scmp.eq.s32.totalorder %s101, 1
      %p119 = por %p117, %p118
      %p120 = scmp.ne.s32.totalorder %s109, %s110
      %p121 = scmp.eq.s32.totalorder %s101, 0
      %p122 = por %p120, %p121
      %p123 = scmp.ne.s32.totalorder %s109, %s110
      %p124 = scmp.eq.s32.totalorder %s102, 1
      %p125 = por %p123, %p124
      %p127 = scmp.ne.s32.totalorder %s110, %s126
      %p128 = scmp.eq.s32.totalorder %s102, 0
      %p129 = por %p127, %p128
      %s131 = sadd.s32 %s130, 1
      %p134 = scmp.eq.s32.totalorder %s96, 1
      %p135 = scmp.ne.s32.totalorder %s130, %s132
      %p136 = scmp.eq.s32.totalorder %s96, 0
      %p137 = por %p135, %p136
      %p138 = scmp.ne.s32.totalorder %s130, %s132
      %p139 = scmp.eq.s32.totalorder %s101, 1
      %p140 = por %p138, %p139
      %p141 = scmp.ne.s32.totalorder %s132, %s133
      %p142 = scmp.eq.s32.totalorder %s101, 0
      %p143 = por %p141, %p142
      %p144 = scmp.ne.s32.totalorder %s132, %s133
      %p145 = scmp.eq.s32.totalorder %s102, 1
      %p146 = por %p144, %p145
      %p148 = scmp.ne.s32.totalorder %s133, %s147
      %p149 = scmp.eq.s32.totalorder %s102, 0
      %p150 = por %p148, %p149
      %s152 = sadd.s32 %s151, 1
      %p155 = scmp.eq.s32.totalorder %s96, 1
      %p156 = scmp.ne.s32.totalorder %s151, %s153
      %p157 = scmp.eq.s32.totalorder %s96, 0
      %p158 = por %p156, %p157
      %p159 = scmp.ne.s32.totalorder %s151, %s153
      %p160 = scmp.eq.s32.totalorder %s101, 1
      %p161 = por %p159, %p160
      %p162 = scmp.ne.s32.totalorder %s153, %s154
      %p163 = scmp.eq.s32.totalorder %s101, 0
      %p164 = por %p162, %p163
      %p165 = scmp.ne.s32.totalorder %s153, %s154
      %p166 = scmp.eq.s32.totalorder %s102, 1
      %p167 = por %p165, %p166
      %p169 = scmp.ne.s32.totalorder %s154, %s168
      %p170 = scmp.eq.s32.totalorder %s102, 0
      %p171 = por %p169, %p170
      %s173 = sadd.s32 %s172, 1
      %p176 = scmp.eq.s32.totalorder %s96, 1
      %p177 = scmp.ne.s32.totalorder %s172, %s174
      %p178 = scmp.eq.s32.totalorder %s96, 0
      %p179 = por %p177, %p178
      %p180 = scmp.ne.s32.totalorder %s172, %s174
      %p181 = scmp.eq.s32.totalorder %s101, 1
      %p182 = por %p180, %p181
      %p183 = scmp.ne.s32.totalorder %s174, %s175
      %p184 = scmp.eq.s32.totalorder %s101, 0
      %p185 = por %p183, %p184
      %p186 = scmp.ne.s32.totalorder %s174, %s175
      %p187 = scmp.eq.s32.totalorder %s102, 1
      %p188 = por %p186, %p187
      %p190 = scmp.ne.s32.totalorder %s175, %s189
      %p191 = scmp.eq.s32.totalorder %s102, 0
      %p192 = por %p190, %p191
      %s194 = sadd.s32 %s193, 1
      %p197 = scmp.eq.s32.totalorder %s96, 1
      %p198 = scmp.ne.s32.totalorder %s193, %s195
      %p199 = scmp.eq.s32.totalorder %s96, 0
      %p200 = por %p198, %p199
      %p201 = scmp.ne.s32.totalorder %s193, %s195
      %p202 = scmp.eq.s32.totalorder %s101, 1
      %p203 = por %p201, %p202
      %p204 = scmp.ne.s32.totalorder %s195, %s196
      %p205 = scmp.eq.s32.totalorder %s101, 0
      %p206 = por %p204, %p205
      %p207 = scmp.ne.s32.totalorder %s195, %s196
      %p208 = scmp.eq.s32.totalorder %s102, 1
      %p209 = por %p207, %p208
      %p211 = scmp.ne.s32.totalorder %s196, %s210
      %p212 = scmp.eq.s32.totalorder %s102, 0
      %p213 = por %p211, %p212
      %s215 = sadd.s32 %s214, 1
      %p218 = scmp.eq.s32.totalorder %s96, 1
      %p219 = scmp.ne.s32.totalorder %s214, %s216
      %p220 = scmp.eq.s32.totalorder %s96, 0
      %p221 = por %p219, %p220
      %p222 = scmp.ne.s32.totalorder %s214, %s216
      %p223 = scmp.eq.s32.totalorder %s101, 1
      %p224 = por %p222, %p223
      %p225 = scmp.ne.s32.totalorder %s216, %s217
      %p226 = scmp.eq.s32.totalorder %s101, 0
      %p227 = por %p225, %p226
      %p228 = scmp.ne.s32.totalorder %s216, %s217
      %p229 = scmp.eq.s32.totalorder %s102, 1
      %p230 = por %p228, %p229
      %p232 = scmp.ne.s32.totalorder %s217, %s231
      %p233 = scmp.eq.s32.totalorder %s102, 0
      %p234 = por %p232, %p233
      %s236 = sadd.s32 %s235, 1
      %p239 = scmp.eq.s32.totalorder %s96, 1
      %p240 = scmp.ne.s32.totalorder %s235, %s237
      %p241 = scmp.eq.s32.totalorder %s96, 0
      %p242 = por %p240, %p241
      %p243 = scmp.ne.s32.totalorder %s235, %s237
      %p244 = scmp.eq.s32.totalorder %s101, 1
      %p245 = por %p243, %p244
      %p246 = scmp.ne.s32.totalorder %s237, %s238
      %p247 = scmp.eq.s32.totalorder %s101, 0
      %p248 = por %p246, %p247
      %p249 = scmp.ne.s32.totalorder %s237, %s238
      %p250 = scmp.eq.s32.totalorder %s102, 1
      %p251 = por %p249, %p250
      %p253 = scmp.ne.s32.totalorder %s238, %s252
      %p254 = scmp.eq.s32.totalorder %s102, 0
      %p255 = por %p253, %p254
      %s257 = sadd.s32 %s256, 1
      %p260 = scmp.eq.s32.totalorder %s96, 1
      %p261 = scmp.ne.s32.totalorder %s256, %s258
      %p262 = scmp.eq.s32.totalorder %s96, 0
      %p263 = por %p261, %p262
      %p264 = scmp.ne.s32.totalorder %s256, %s258
      %p265 = scmp.eq.s32.totalorder %s101, 1
      %p266 = por %p264, %p265
      %p267 = scmp.ne.s32.totalorder %s258, %s259
      %p268 = scmp.eq.s32.totalorder %s101, 0
      %p269 = por %p267, %p268
      %p270 = scmp.ne.s32.totalorder %s258, %s259
      %p271 = scmp.eq.s32.totalorder %s102, 1
      %p272 = por %p270, %p271
      %p274 = scmp.ne.s32.totalorder %s259, %s273
      %p275 = scmp.eq.s32.totalorder %s102, 0
      %p276 = por %p274, %p275
      %s278 = sadd.s32 %s277, 1
      %p281 = scmp.eq.s32.totalorder %s96, 1
      %p282 = scmp.ne.s32.totalorder %s277, %s279
      %p283 = scmp.eq.s32.totalorder %s96, 0
      %p284 = por %p282, %p283
      %p285 = scmp.ne.s32.totalorder %s277, %s279
      %p286 = scmp.eq.s32.totalorder %s101, 1
      %p287 = por %p285, %p286
      %p288 = scmp.ne.s32.totalorder %s279, %s280
      %p289 = scmp.eq.s32.totalorder %s101, 0
      %p290 = por %p288, %p289
      %p291 = scmp.ne.s32.totalorder %s279, %s280
      %p292 = scmp.eq.s32.totalorder %s102, 1
      %p293 = por %p291, %p292
      %p295 = scmp.ne.s32.totalorder %s280, %s294
      %p296 = scmp.eq.s32.totalorder %s102, 0
      %p297 = por %p295, %p296
      %s299 = sadd.s32 %s298, 1
      %p302 = scmp.eq.s32.totalorder %s96, 1
      %p303 = scmp.ne.s32.totalorder %s298, %s300
      %p304 = scmp.eq.s32.totalorder %s96, 0
      %p305 = por %p303, %p304
      %p306 = scmp.ne.s32.totalorder %s298, %s300
      %p307 = scmp.eq.s32.totalorder %s101, 1
      %p308 = por %p306, %p307
      %p309 = scmp.ne.s32.totalorder %s300, %s301
      %p310 = scmp.eq.s32.totalorder %s101, 0
      %p311 = por %p309, %p310
      %p312 = scmp.ne.s32.totalorder %s300, %s301
      %p313 = scmp.eq.s32.totalorder %s102, 1
      %p314 = por %p312, %p313
      %p316 = scmp.ne.s32.totalorder %s301, %s315
      %p317 = scmp.eq.s32.totalorder %s102, 0
      %p318 = por %p316, %p317
      %s320 = sadd.s32 %s319, 1
      %p323 = scmp.eq.s32.totalorder %s96, 1
      %p324 = scmp.ne.s32.totalorder %s319, %s321
      %p325 = scmp.eq.s32.totalorder %s96, 0
      %p326 = por %p324, %p325
      %p327 = scmp.ne.s32.totalorder %s319, %s321
      %p328 = scmp.eq.s32.totalorder %s101, 1
      %p329 = por %p327, %p328
      %p330 = scmp.ne.s32.totalorder %s321, %s322
      %p331 = scmp.eq.s32.totalorder %s101, 0
      %p332 = por %p330, %p331
      %p333 = scmp.ne.s32.totalorder %s321, %s322
      %p334 = scmp.eq.s32.totalorder %s102, 1
      %p335 = por %p333, %p334
      %p337 = scmp.ne.s32.totalorder %s322, %s336
      %p338 = scmp.eq.s32.totalorder %s102, 0
      %p339 = por %p337, %p338
      %s341 = sadd.s32 %s340, 1
      %p344 = scmp.eq.s32.totalorder %s96, 1
      %p345 = scmp.ne.s32.totalorder %s340, %s342
      %p346 = scmp.eq.s32.totalorder %s96, 0
      %p347 = por %p345, %p346
      %p348 = scmp.ne.s32.totalorder %s340, %s342
      %p349 = scmp.eq.s32.totalorder %s101, 1
      %p350 = por %p348, %p349
      %p351 = scmp.ne.s32.totalorder %s342, %s343
      %p352 = scmp.eq.s32.totalorder %s101, 0
      %p353 = por %p351, %p352
      %p354 = scmp.ne.s32.totalorder %s342, %s343
      %p355 = scmp.eq.s32.totalorder %s102, 1
      %p356 = por %p354, %p355
      %p358 = scmp.ne.s32.totalorder %s343, %s357
      %p359 = scmp.eq.s32.totalorder %s102, 0
      %p360 = por %p358, %p359
      %s362 = sadd.s32 %s361, 1
      %p365 = scmp.eq.s32.totalorder %s96, 1
      %p366 = scmp.ne.s32.totalorder %s361, %s363
      %p367 = scmp.eq.s32.totalorder %s96, 0
      %p368 = por %p366, %p367
      %p369 = scmp.ne.s32.totalorder %s361, %s363
      %p370 = scmp.eq.s32.totalorder %s101, 1
      %p371 = por %p369, %p370
      %p372 = scmp.ne.s32.totalorder %s363, %s364
      %p373 = scmp.eq.s32.totalorder %s101, 0
      %p374 = por %p372, %p373
      %p375 = scmp.ne.s32.totalorder %s363, %s364
      %p376 = scmp.eq.s32.totalorder %s102, 1
      %p377 = por %p375, %p376
      %p379 = scmp.ne.s32.totalorder %s364, %s378
      %p380 = scmp.eq.s32.totalorder %s102, 0
      %p381 = por %p379, %p380
      %s383 = sadd.s32 %s382, 1
      %p386 = scmp.eq.s32.totalorder %s96, 1
      %p387 = scmp.ne.s32.totalorder %s382, %s384
      %p388 = scmp.eq.s32.totalorder %s96, 0
      %p389 = por %p387, %p388
      %p390 = scmp.ne.s32.totalorder %s382, %s384
      %p391 = scmp.eq.s32.totalorder %s101, 1
      %p392 = por %p390, %p391
      %p393 = scmp.ne.s32.totalorder %s384, %s385
      %p394 = scmp.eq.s32.totalorder %s101, 0
      %p395 = por %p393, %p394
      %p396 = scmp.ne.s32.totalorder %s384, %s385
      %p397 = scmp.eq.s32.totalorder %s102, 1
      %p398 = por %p396, %p397
      %p400 = scmp.ne.s32.totalorder %s385, %s399
      %p401 = scmp.eq.s32.totalorder %s102, 0
      %p402 = por %p400, %p401
      %s404 = sadd.s32 %s403, 1
      %p407 = scmp.eq.s32.totalorder %s96, 1
      %p408 = scmp.ne.s32.totalorder %s403, %s405
      %p409 = scmp.eq.s32.totalorder %s96, 0
      %p410 = por %p408, %p409
      %p411 = scmp.ne.s32.totalorder %s403, %s405
      %p412 = scmp.eq.s32.totalorder %s101, 1
      %p413 = por %p411, %p412
      %p414 = scmp.ne.s32.totalorder %s405, %s406
      %p415 = scmp.eq.s32.totalorder %s101, 0
      %p416 = por %p414, %p415
      %p417 = scmp.ne.s32.totalorder %s405, %s406
      %p418 = scmp.eq.s32.totalorder %s102, 1
      %p419 = por %p417, %p418
      %p421 = scmp.ne.s32.totalorder %s406, %s420
      %p422 = scmp.eq.s32.totalorder %s102, 0
      %p423 = por %p421, %p422
      %s425 = sadd.s32 %s424, 1
      %p428 = scmp.eq.s32.totalorder %s96, 1
      %p429 = scmp.ne.s32.totalorder %s424, %s426
      %p430 = scmp.eq.s32.totalorder %s96, 0
      %p431 = por %p429, %p430
      %p432 = scmp.ne.s32.totalorder %s424, %s426
      %p433 = scmp.eq.s32.totalorder %s101, 1
      %p434 = por %p432, %p433
      %p435 = scmp.ne.s32.totalorder %s426, %s427
      %p436 = scmp.eq.s32.totalorder %s101, 0
      %p437 = por %p435, %p436
      %p438 = scmp.ne.s32.totalorder %s426, %s427
      %p439 = scmp.eq.s32.totalorder %s102, 1
      %p440 = por %p438, %p439
      %p442 = scmp.ne.s32.totalorder %s427, %s441
      %p443 = scmp.eq.s32.totalorder %s102, 0
      %p444 = por %p442, %p443
      %s446 = sadd.s32 %s445, 1
      %p449 = scmp.eq.s32.totalorder %s96, 1
      %p450 = scmp.ne.s32.totalorder %s445, %s447
      %p451 = scmp.eq.s32.totalorder %s96, 0
      %p452 = por %p450, %p451
      %p453 = scmp.ne.s32.totalorder %s445, %s447
      %p454 = scmp.eq.s32.totalorder %s101, 1
      %p455 = por %p453, %p454
      %p456 = scmp.ne.s32.totalorder %s447, %s448
      %p457 = scmp.eq.s32.totalorder %s101, 0
      %p458 = por %p456, %p457
      %p459 = scmp.ne.s32.totalorder %s447, %s448
      %p460 = scmp.eq.s32.totalorder %s102, 1
      %p461 = por %p459, %p460
      %p463 = scmp.ne.s32.totalorder %s448, %s462
      %p464 = scmp.eq.s32.totalorder %s102, 0
      %p465 = por %p463, %p464
      %s467 = sadd.s32 %s466, 1
      %p470 = scmp.eq.s32.totalorder %s96, 1
      %p471 = scmp.ne.s32.totalorder %s466, %s468
      %p472 = scmp.eq.s32.totalorder %s96, 0
      %p473 = por %p471, %p472
      %p474 = scmp.ne.s32.totalorder %s466, %s468
      %p475 = scmp.eq.s32.totalorder %s101, 1
      %p476 = por %p474, %p475
      %p477 = scmp.ne.s32.totalorder %s468, %s469
      %p478 = scmp.eq.s32.totalorder %s101, 0
      %p479 = por %p477, %p478
      %p480 = scmp.ne.s32.totalorder %s468, %s469
      %p481 = scmp.eq.s32.totalorder %s102, 1
      %p482 = por %p480, %p481
      %p484 = scmp.ne.s32.totalorder %s469, %s483
      %p485 = scmp.eq.s32.totalorder %s102, 0
      %p486 = por %p484, %p485
      %s488 = sadd.s32 %s487, 1
      %p491 = scmp.eq.s32.totalorder %s96, 1
      %p492 = scmp.ne.s32.totalorder %s487, %s489
      %p493 = scmp.eq.s32.totalorder %s96, 0
      %p494 = por %p492, %p493
      %p495 = scmp.ne.s32.totalorder %s487, %s489
      %p496 = scmp.eq.s32.totalorder %s101, 1
      %p497 = por %p495, %p496
      %p498 = scmp.ne.s32.totalorder %s489, %s490
      %p499 = scmp.eq.s32.totalorder %s101, 0
      %p500 = por %p498, %p499
      %p501 = scmp.ne.s32.totalorder %s489, %s490
      %p502 = scmp.eq.s32.totalorder %s102, 1
      %p503 = por %p501, %p502
      %p505 = scmp.ne.s32.totalorder %s490, %s504
      %p506 = scmp.eq.s32.totalorder %s102, 0
      %p507 = por %p505, %p506
      %s509 = sadd.s32 %s508, 1
      %p512 = scmp.eq.s32.totalorder %s96, 1
      %p513 = scmp.ne.s32.totalorder %s508, %s510
      %p514 = scmp.eq.s32.totalorder %s96, 0
      %p515 = por %p513, %p514
      %p516 = scmp.ne.s32.totalorder %s508, %s510
      %p517 = scmp.eq.s32.totalorder %s101, 1
      %p518 = por %p516, %p517
      %p519 = scmp.ne.s32.totalorder %s510, %s511
      %p520 = scmp.eq.s32.totalorder %s101, 0
      %p521 = por %p519, %p520
      %p522 = scmp.ne.s32.totalorder %s510, %s511
      %p523 = scmp.eq.s32.totalorder %s102, 1
      %p524 = por %p522, %p523
      %p526 = scmp.ne.s32.totalorder %s511, %s525
      %p527 = scmp.eq.s32.totalorder %s102, 0
      %p528 = por %p526, %p527
      %s530 = sadd.s32 %s529, 1
      %p533 = scmp.eq.s32.totalorder %s96, 1
      %p534 = scmp.ne.s32.totalorder %s529, %s531
      %p535 = scmp.eq.s32.totalorder %s96, 0
      %p536 = por %p534, %p535
      %p537 = scmp.ne.s32.totalorder %s529, %s531
      %p538 = scmp.eq.s32.totalorder %s101, 1
      %p539 = por %p537, %p538
      %p540 = scmp.ne.s32.totalorder %s531, %s532
      %p541 = scmp.eq.s32.totalorder %s101, 0
      %p542 = por %p540, %p541
      %p543 = scmp.ne.s32.totalorder %s531, %s532
      %p544 = scmp.eq.s32.totalorder %s102, 1
      %p545 = por %p543, %p544
      %p547 = scmp.ne.s32.totalorder %s532, %s546
      %p548 = scmp.eq.s32.totalorder %s102, 0
      %p549 = por %p547, %p548
      %s551 = sadd.s32 %s550, 1
      %p554 = scmp.eq.s32.totalorder %s96, 1
      %p555 = scmp.ne.s32.totalorder %s550, %s552
      %p556 = scmp.eq.s32.totalorder %s96, 0
      %p557 = por %p555, %p556
      %p558 = scmp.ne.s32.totalorder %s550, %s552
      %p559 = scmp.eq.s32.totalorder %s101, 1
      %p560 = por %p558, %p559
      %p561 = scmp.ne.s32.totalorder %s552, %s553
      %p562 = scmp.eq.s32.totalorder %s101, 0
      %p563 = por %p561, %p562
      %p564 = scmp.ne.s32.totalorder %s552, %s553
      %p565 = scmp.eq.s32.totalorder %s102, 1
      %p566 = por %p564, %p565
      %p568 = scmp.ne.s32.totalorder %s553, %s567
      %p569 = scmp.eq.s32.totalorder %s102, 0
      %p570 = por %p568, %p569
      %s572 = sadd.s32 %s571, 1
      %p575 = scmp.eq.s32.totalorder %s96, 1
      %p576 = scmp.ne.s32.totalorder %s571, %s573
      %p577 = scmp.eq.s32.totalorder %s96, 0
      %p578 = por %p576, %p577
      %p579 = scmp.ne.s32.totalorder %s571, %s573
      %p580 = scmp.eq.s32.totalorder %s101, 1
      %p581 = por %p579, %p580
      %p582 = scmp.ne.s32.totalorder %s573, %s574
      %p583 = scmp.eq.s32.totalorder %s101, 0
      %p584 = por %p582, %p583
      %p585 = scmp.ne.s32.totalorder %s573, %s574
      %p586 = scmp.eq.s32.totalorder %s102, 1
      %p587 = por %p585, %p586
      %p589 = scmp.ne.s32.totalorder %s574, %s588
      %p590 = scmp.eq.s32.totalorder %s102, 0
      %p591 = por %p589, %p590
      %s593 = sadd.s32 %s592, 1
      %p596 = scmp.eq.s32.totalorder %s96, 1
      %p597 = scmp.ne.s32.totalorder %s592, %s594
      %p598 = scmp.eq.s32.totalorder %s96, 0
      %p599 = por %p597, %p598
      %p600 = scmp.ne.s32.totalorder %s592, %s594
      %p601 = scmp.eq.s32.totalorder %s101, 1
      %p602 = por %p600, %p601
      %p603 = scmp.ne.s32.totalorder %s594, %s595
      %p604 = scmp.eq.s32.totalorder %s101, 0
      %p605 = por %p603, %p604
      %p606 = scmp.ne.s32.totalorder %s594, %s595
      %p607 = scmp.eq.s32.totalorder %s102, 1
      %p608 = por %p606, %p607
      %p610 = scmp.ne.s32.totalorder %s595, %s609
      %p611 = scmp.eq.s32.totalorder %s102, 0
      %p612 = por %p610, %p611
      %s614 = sadd.s32 %s613, 1
      %p617 = scmp.eq.s32.totalorder %s96, 1
      %p618 = scmp.ne.s32.totalorder %s613, %s615
      %p619 = scmp.eq.s32.totalorder %s96, 0
      %p620 = por %p618, %p619
      %p621 = scmp.ne.s32.totalorder %s613, %s615
      %p622 = scmp.eq.s32.totalorder %s101, 1
      %p623 = por %p621, %p622
      %p624 = scmp.ne.s32.totalorder %s615, %s616
      %p625 = scmp.eq.s32.totalorder %s101, 0
      %p626 = por %p624, %p625
      %p627 = scmp.ne.s32.totalorder %s615, %s616
      %p628 = scmp.eq.s32.totalorder %s102, 1
      %p629 = por %p627, %p628
      %p631 = scmp.ne.s32.totalorder %s616, %s630
      %p632 = scmp.eq.s32.totalorder %s102, 0
      %p633 = por %p631, %p632
      %s635 = sadd.s32 %s634, 1
      %p638 = scmp.eq.s32.totalorder %s96, 1
      %p639 = scmp.ne.s32.totalorder %s634, %s636
      %p640 = scmp.eq.s32.totalorder %s96, 0
      %p641 = por %p639, %p640
      %p642 = scmp.ne.s32.totalorder %s634, %s636
      %p643 = scmp.eq.s32.totalorder %s101, 1
      %p644 = por %p642, %p643
      %p645 = scmp.ne.s32.totalorder %s636, %s637
      %p646 = scmp.eq.s32.totalorder %s101, 0
      %p647 = por %p645, %p646
      %p648 = scmp.ne.s32.totalorder %s636, %s637
      %p649 = scmp.eq.s32.totalorder %s102, 1
      %p650 = por %p648, %p649
      %p652 = scmp.ne.s32.totalorder %s637, %s651
      %p653 = scmp.eq.s32.totalorder %s102, 0
      %p654 = por %p652, %p653
      %s656 = sadd.s32 %s655, 1
      %p659 = scmp.eq.s32.totalorder %s96, 1
      %p660 = scmp.ne.s32.totalorder %s655, %s657
      %p661 = scmp.eq.s32.totalorder %s96, 0
      %p662 = por %p660, %p661
      %p663 = scmp.ne.s32.totalorder %s655, %s657
      %p664 = scmp.eq.s32.totalorder %s101, 1
      %p665 = por %p663, %p664
      %p666 = scmp.ne.s32.totalorder %s657, %s658
      %p667 = scmp.eq.s32.totalorder %s101, 0
      %p668 = por %p666, %p667
      %p669 = scmp.ne.s32.totalorder %s657, %s658
      %p670 = scmp.eq.s32.totalorder %s102, 1
      %p671 = por %p669, %p670
      %p673 = scmp.ne.s32.totalorder %s658, %s672
      %p674 = scmp.eq.s32.totalorder %s102, 0
      %p675 = por %p673, %p674
      %s677 = sadd.s32 %s676, 1
      %p680 = scmp.eq.s32.totalorder %s96, 1
      %p681 = scmp.ne.s32.totalorder %s676, %s678
      %p682 = scmp.eq.s32.totalorder %s96, 0
      %p683 = por %p681, %p682
      %p684 = scmp.ne.s32.totalorder %s676, %s678
      %p685 = scmp.eq.s32.totalorder %s101, 1
      %p686 = por %p684, %p685
      %p687 = scmp.ne.s32.totalorder %s678, %s679
      %p688 = scmp.eq.s32.totalorder %s101, 0
      %p689 = por %p687, %p688
      %p690 = scmp.ne.s32.totalorder %s678, %s679
      %p691 = scmp.eq.s32.totalorder %s102, 1
      %p692 = por %p690, %p691
      %p694 = scmp.ne.s32.totalorder %s679, %s693
      %p695 = scmp.eq.s32.totalorder %s102, 0
      %p696 = por %p694, %p695
      %s698 = sadd.s32 %s697, 1
      %p701 = scmp.eq.s32.totalorder %s96, 1
      %p702 = scmp.ne.s32.totalorder %s697, %s699
      %p703 = scmp.eq.s32.totalorder %s96, 0
      %p704 = por %p702, %p703
      %p705 = scmp.ne.s32.totalorder %s697, %s699
      %p706 = scmp.eq.s32.totalorder %s101, 1
      %p707 = por %p705, %p706
      %p708 = scmp.ne.s32.totalorder %s699, %s700
      %p709 = scmp.eq.s32.totalorder %s101, 0
      %p710 = por %p708, %p709
      %p711 = scmp.ne.s32.totalorder %s699, %s700
      %p712 = scmp.eq.s32.totalorder %s102, 1
      %p713 = por %p711, %p712
      %p715 = scmp.ne.s32.totalorder %s700, %s714
      %p716 = scmp.eq.s32.totalorder %s102, 0
      %p717 = por %p715, %p716
      %s719 = sadd.s32 %s718, 1
      %p722 = scmp.eq.s32.totalorder %s96, 1
      %p723 = scmp.ne.s32.totalorder %s718, %s720
      %p724 = scmp.eq.s32.totalorder %s96, 0
      %p725 = por %p723, %p724
      %p726 = scmp.ne.s32.totalorder %s718, %s720
      %p727 = scmp.eq.s32.totalorder %s101, 1
      %p728 = por %p726, %p727
      %p729 = scmp.ne.s32.totalorder %s720, %s721
      %p730 = scmp.eq.s32.totalorder %s101, 0
      %p731 = por %p729, %p730
      %p732 = scmp.ne.s32.totalorder %s720, %s721
      %p733 = scmp.eq.s32.totalorder %s102, 1
      %p734 = por %p732, %p733
      %p736 = scmp.ne.s32.totalorder %s721, %s735
      %p737 = scmp.eq.s32.totalorder %s102, 0
      %p738 = por %p736, %p737
      %s740 = sadd.s32 %s739, 1
      %p743 = scmp.eq.s32.totalorder %s96, 1
      %p744 = scmp.ne.s32.totalorder %s739, %s741
      %p745 = scmp.eq.s32.totalorder %s96, 0
      %p746 = por %p744, %p745
      %p747 = scmp.ne.s32.totalorder %s739, %s741
      %p748 = scmp.eq.s32.totalorder %s101, 1
      %p749 = por %p747, %p748
      %p750 = scmp.ne.s32.totalorder %s741, %s742
      %p751 = scmp.eq.s32.totalorder %s101, 0
      %p752 = por %p750, %p751
      %p753 = scmp.ne.s32.totalorder %s741, %s742
      %p754 = scmp.eq.s32.totalorder %s102, 1
      %p755 = por %p753, %p754
      %p757 = scmp.ne.s32.totalorder %s742, %s756
      %p758 = scmp.eq.s32.totalorder %s102, 0
      %p759 = por %p757, %p758
      %s761 = sadd.s32 %s760, 1
      %p764 = scmp.eq.s32.totalorder %s96, 1
      %p765 = scmp.ne.s32.totalorder %s760, %s762
      %p766 = scmp.eq.s32.totalorder %s96, 0
      %p767 = por %p765, %p766
      %p768 = scmp.ne.s32.totalorder %s760, %s762
      %p769 = scmp.eq.s32.totalorder %s101, 1
      %p770 = por %p768, %p769
      %p771 = scmp.ne.s32.totalorder %s762, %s763
      %p772 = scmp.eq.s32.totalorder %s101, 0
      %p773 = por %p771, %p772
      %p774 = scmp.ne.s32.totalorder %s762, %s763
      %p775 = scmp.eq.s32.totalorder %s102, 1
      %p776 = por %p774, %p775
      %p778 = scmp.ne.s32.totalorder %s763, %s777
      %p779 = scmp.eq.s32.totalorder %s102, 0
      %p780 = por %p778, %p779
      %s782 = sadd.s32 %s781, 1
      %p785 = scmp.eq.s32.totalorder %s96, 1
      %p786 = scmp.ne.s32.totalorder %s781, %s783
      %p787 = scmp.eq.s32.totalorder %s96, 0
      %p788 = por %p786, %p787
      %p789 = scmp.ne.s32.totalorder %s781, %s783
      %p790 = scmp.eq.s32.totalorder %s101, 1
      %p791 = por %p789, %p790
      %p792 = scmp.ne.s32.totalorder %s783, %s784
      %p793 = scmp.eq.s32.totalorder %s101, 0
      %p794 = por %p792, %p793
      %p795 = scmp.ne.s32.totalorder %s783, %s784
      %p796 = scmp.eq.s32.totalorder %s102, 1
      %p797 = por %p795, %p796
      %p799 = scmp.ne.s32.totalorder %s784, %s798
      %p800 = scmp.eq.s32.totalorder %s102, 0
      %p801 = por %p799, %p800
      %s803 = sadd.s32 %s802, 1
      %p806 = scmp.eq.s32.totalorder %s96, 1
      %p807 = scmp.ne.s32.totalorder %s802, %s804
      %p808 = scmp.eq.s32.totalorder %s96, 0
      %p809 = por %p807, %p808
      %p810 = scmp.ne.s32.totalorder %s802, %s804
      %p811 = scmp.eq.s32.totalorder %s101, 1
      %p812 = por %p810, %p811
      %p813 = scmp.ne.s32.totalorder %s804, %s805
      %p814 = scmp.eq.s32.totalorder %s101, 0
      %p815 = por %p813, %p814
      %p816 = scmp.ne.s32.totalorder %s804, %s805
      %p817 = scmp.eq.s32.totalorder %s102, 1
      %p818 = por %p816, %p817
      %p820 = scmp.ne.s32.totalorder %s805, %s819
      %p821 = scmp.eq.s32.totalorder %s102, 0
      %p822 = por %p820, %p821
      %s824 = sadd.s32 %s823, 1
      %p827 = scmp.eq.s32.totalorder %s96, 1
      %p828 = scmp.ne.s32.totalorder %s823, %s825
      %p829 = scmp.eq.s32.totalorder %s96, 0
      %p830 = por %p828, %p829
      %p831 = scmp.ne.s32.totalorder %s823, %s825
      %p832 = scmp.eq.s32.totalorder %s101, 1
      %p833 = por %p831, %p832
      %p834 = scmp.ne.s32.totalorder %s825, %s826
      %p835 = scmp.eq.s32.totalorder %s101, 0
      %p836 = por %p834, %p835
      %p837 = scmp.ne.s32.totalorder %s825, %s826
      %p838 = scmp.eq.s32.totalorder %s102, 1
      %p839 = por %p837, %p838
      %p841 = scmp.ne.s32.totalorder %s826, %s840
      %p842 = scmp.eq.s32.totalorder %s102, 0
      %p843 = por %p841, %p842
      %s845 = sadd.s32 %s844, 1
      %p848 = scmp.eq.s32.totalorder %s96, 1
      %p849 = scmp.ne.s32.totalorder %s844, %s846
      %p850 = scmp.eq.s32.totalorder %s96, 0
      %p851 = por %p849, %p850
      %p852 = scmp.ne.s32.totalorder %s844, %s846
      %p853 = scmp.eq.s32.totalorder %s101, 1
      %p854 = por %p852, %p853
      %p855 = scmp.ne.s32.totalorder %s846, %s847
      %p856 = scmp.eq.s32.totalorder %s101, 0
      %p857 = por %p855, %p856
      %p858 = scmp.ne.s32.totalorder %s846, %s847
      %p859 = scmp.eq.s32.totalorder %s102, 1
      %p860 = por %p858, %p859
      %p862 = scmp.ne.s32.totalorder %s847, %s861
      %p863 = scmp.eq.s32.totalorder %s102, 0
      %p864 = por %p862, %p863
      %s866 = sadd.s32 %s865, 1
      %p869 = scmp.eq.s32.totalorder %s96, 1
      %p870 = scmp.ne.s32.totalorder %s865, %s867
      %p871 = scmp.eq.s32.totalorder %s96, 0
      %p872 = por %p870, %p871
      %p873 = scmp.ne.s32.totalorder %s865, %s867
      %p874 = scmp.eq.s32.totalorder %s101, 1
      %p875 = por %p873, %p874
      %p876 = scmp.ne.s32.totalorder %s867, %s868
      %p877 = scmp.eq.s32.totalorder %s101, 0
      %p878 = por %p876, %p877
      %p879 = scmp.ne.s32.totalorder %s867, %s868
      %p880 = scmp.eq.s32.totalorder %s102, 1
      %p881 = por %p879, %p880
      %p883 = scmp.ne.s32.totalorder %s868, %s882
      %p884 = scmp.eq.s32.totalorder %s102, 0
      %p885 = por %p883, %p884
      %s887 = sadd.s32 %s886, 1
      %p890 = scmp.eq.s32.totalorder %s96, 1
      %p891 = scmp.ne.s32.totalorder %s886, %s888
      %p892 = scmp.eq.s32.totalorder %s96, 0
      %p893 = por %p891, %p892
      %p894 = scmp.ne.s32.totalorder %s886, %s888
      %p895 = scmp.eq.s32.totalorder %s101, 1
      %p896 = por %p894, %p895
      %p897 = scmp.ne.s32.totalorder %s888, %s889
      %p898 = scmp.eq.s32.totalorder %s101, 0
      %p899 = por %p897, %p898
      %p900 = scmp.ne.s32.totalorder %s888, %s889
      %p901 = scmp.eq.s32.totalorder %s102, 1
      %p902 = por %p900, %p901
      %p904 = scmp.ne.s32.totalorder %s889, %s903
      %p905 = scmp.eq.s32.totalorder %s102, 0
      %p906 = por %p904, %p905
      %s908 = sadd.s32 %s907, 1
      %p911 = scmp.eq.s32.totalorder %s96, 1
      %p912 = scmp.ne.s32.totalorder %s907, %s909
      %p913 = scmp.eq.s32.totalorder %s96, 0
      %p914 = por %p912, %p913
      %p915 = scmp.ne.s32.totalorder %s907, %s909
      %p916 = scmp.eq.s32.totalorder %s101, 1
      %p917 = por %p915, %p916
      %p918 = scmp.ne.s32.totalorder %s909, %s910
      %p919 = scmp.eq.s32.totalorder %s101, 0
      %p920 = por %p918, %p919
      %p921 = scmp.ne.s32.totalorder %s909, %s910
      %p922 = scmp.eq.s32.totalorder %s102, 1
      %p923 = por %p921, %p922
      %p925 = scmp.ne.s32.totalorder %s910, %s924
      %p926 = scmp.eq.s32.totalorder %s102, 0
      %p927 = por %p925, %p926
      %s928 = ssub.s32 %s96, %s103
      %p929 = scmp.eq.s32.totalorder %s928, 0
      %s931 = sadd.s32 %s930, 1
      %s932 = scalar_select %p929, %s930, %s931
      %p935 = pneg %p929
      %p936 = scmp.eq.s32.totalorder %s96, 1
      %p937 = por %p935, %p936
      %p938 = scmp.ne.s32.totalorder %s930, %s933
      %p939 = scmp.eq.s32.totalorder %s96, 0
      %p940 = por %p938, %p939
      %p941 = scmp.ne.s32.totalorder %s930, %s933
      %p942 = scmp.eq.s32.totalorder %s101, 1
      %p943 = por %p941, %p942
      %p944 = scmp.ne.s32.totalorder %s933, %s934
      %p945 = scmp.eq.s32.totalorder %s101, 0
      %p946 = por %p944, %p945
      %p947 = scmp.ne.s32.totalorder %s933, %s934
      %p948 = scmp.eq.s32.totalorder %s102, 1
      %p949 = por %p947, %p948
      %p951 = scmp.ne.s32.totalorder %s934, %s950
      %p952 = scmp.eq.s32.totalorder %s102, 0
      %p953 = por %p951, %p952
      %p954 = scmp.le.s32.totalorder 1, %s96
      %p955 = scmp.lt.s32.totalorder %s96, 3
      %p956 = pnand %p954, %p955
      %p957 = pneg %p956
      // Predicated region
      $region9: #{tpu_custom_call.1} parent=5 // pred_check
        _
      $region10: #{tpu_custom_call.1} parent=5 // pred_check_branch
        %959 = sbr.rel (%p956) target = $region12
      $region11: #{tpu_custom_call.1} parent=5 // pred_region
        %s960 = ssub.s32 %s96, 1
        // Predicated region
        $region13: #{tpu_custom_call.1} parent=11 // pred_check
          %p961 = pneg %p143
        $region14: #{tpu_custom_call.1} parent=11 // pred_check_branch
          %963 = sbr.rel (%p961) target = $region16
        $region15: #{tpu_custom_call.1} parent=11 // pred_region
          _
        $region16: #{tpu_custom_call.1} parent=11 // pred_fallthru
          _
        // Predicated region
        $region17: #{tpu_custom_call.1} parent=11 // pred_check
          %p964 = pneg %p164
        $region18: #{tpu_custom_call.1} parent=11 // pred_check_branch
          %966 = sbr.rel (%p964) target = $region20
        $region19: #{tpu_custom_call.1} parent=11 // pred_region
          _
        $region20: #{tpu_custom_call.1} parent=11 // pred_fallthru
          _
        // Predicated region
        $region21: #{tpu_custom_call.1} parent=11 // pred_check
          %p967 = pneg %p185
        $region22: #{tpu_custom_call.1} parent=11 // pred_check_branch
          %969 = sbr.rel (%p967) target = $region24
        $region23: #{tpu_custom_call.1} parent=11 // pred_region
          _
        $region24: #{tpu_custom_call.1} parent=11 // pred_fallthru
          _
        // Predicated region
        $region25: #{tpu_custom_call.1} parent=11 // pred_check
          %p970 = pneg %p206
        $region26: #{tpu_custom_call.1} parent=11 // pred_check_branch
          %972 = sbr.rel (%p970) target = $region28
        $region27: #{tpu_custom_call.1} parent=11 // pred_region
          _
        $region28: #{tpu_custom_call.1} parent=11 // pred_fallthru
          _
        // Predicated region
        $region29: #{tpu_custom_call.1} parent=11 // pred_check
          %p973 = pneg %p227
        $region30: #{tpu_custom_call.1} parent=11 // pred_check_branch
          %975 = sbr.rel (%p973) target = $region32
        $region31: #{tpu_custom_call.1} parent=11 // pred_region
          _
        $region32: #{tpu_custom_call.1} parent=11 // pred_fallthru
          _
        // Predicated region
        $region33: #{tpu_custom_call.1} parent=11 // pred_check
          %p976 = pneg %p248
        $region34: #{tpu_custom_call.1} parent=11 // pred_check_branch
          %978 = sbr.rel (%p976) target = $region36
        $region35: #{tpu_custom_call.1} parent=11 // pred_region
          _
        $region36: #{tpu_custom_call.1} parent=11 // pred_fallthru
          _
        // Predicated region
        $region37: #{tpu_custom_call.1} parent=11 // pred_check
          %p979 = pneg %p269
        $region38: #{tpu_custom_call.1} parent=11 // pred_check_branch
          %981 = sbr.rel (%p979) target = $region40
        $region39: #{tpu_custom_call.1} parent=11 // pred_region
          _
        $region40: #{tpu_custom_call.1} parent=11 // pred_fallthru
          _
        // Predicated region
        $region41: #{tpu_custom_call.1} parent=11 // pred_check
          %p982 = pneg %p290
        $region42: #{tpu_custom_call.1} parent=11 // pred_check_branch
          %984 = sbr.rel (%p982) target = $region44
        $region43: #{tpu_custom_call.1} parent=11 // pred_region
          _
        $region44: #{tpu_custom_call.1} parent=11 // pred_fallthru
          _
        // Predicated region
        $region45: #{tpu_custom_call.1} parent=11 // pred_check
          %p985 = pneg %p311
        $region46: #{tpu_custom_call.1} parent=11 // pred_check_branch
          %987 = sbr.rel (%p985) target = $region48
        $region47: #{tpu_custom_call.1} parent=11 // pred_region
          _
        $region48: #{tpu_custom_call.1} parent=11 // pred_fallthru
          _
        // Predicated region
        $region49: #{tpu_custom_call.1} parent=11 // pred_check
          %p988 = pneg %p332
        $region50: #{tpu_custom_call.1} parent=11 // pred_check_branch
          %990 = sbr.rel (%p988) target = $region52
        $region51: #{tpu_custom_call.1} parent=11 // pred_region
          _
        $region52: #{tpu_custom_call.1} parent=11 // pred_fallthru
          _
        // Predicated region
        $region53: #{tpu_custom_call.1} parent=11 // pred_check
          %p991 = pneg %p353
        $region54: #{tpu_custom_call.1} parent=11 // pred_check_branch
          %993 = sbr.rel (%p991) target = $region56
        $region55: #{tpu_custom_call.1} parent=11 // pred_region
          _
        $region56: #{tpu_custom_call.1} parent=11 // pred_fallthru
          _
        // Predicated region
        $region57: #{tpu_custom_call.1} parent=11 // pred_check
          %p994 = pneg %p374
        $region58: #{tpu_custom_call.1} parent=11 // pred_check_branch
          %996 = sbr.rel (%p994) target = $region60
        $region59: #{tpu_custom_call.1} parent=11 // pred_region
          _
        $region60: #{tpu_custom_call.1} parent=11 // pred_fallthru
          _
        // Predicated region
        $region61: #{tpu_custom_call.1} parent=11 // pred_check
          %p997 = pneg %p395
        $region62: #{tpu_custom_call.1} parent=11 // pred_check_branch
          %999 = sbr.rel (%p997) target = $region64
        $region63: #{tpu_custom_call.1} parent=11 // pred_region
          _
        $region64: #{tpu_custom_call.1} parent=11 // pred_fallthru
          _
        // Predicated region
        $region65: #{tpu_custom_call.1} parent=11 // pred_check
          %p1000 = pneg %p416
        $region66: #{tpu_custom_call.1} parent=11 // pred_check_branch
          %1002 = sbr.rel (%p1000) target = $region68
        $region67: #{tpu_custom_call.1} parent=11 // pred_region
          _
        $region68: #{tpu_custom_call.1} parent=11 // pred_fallthru
          _
        // Predicated region
        $region69: #{tpu_custom_call.1} parent=11 // pred_check
          %p1003 = pneg %p437
        $region70: #{tpu_custom_call.1} parent=11 // pred_check_branch
          %1005 = sbr.rel (%p1003) target = $region72
        $region71: #{tpu_custom_call.1} parent=11 // pred_region
          _
        $region72: #{tpu_custom_call.1} parent=11 // pred_fallthru
          _
        // Predicated region
        $region73: #{tpu_custom_call.1} parent=11 // pred_check
          %p1006 = pneg %p458
        $region74: #{tpu_custom_call.1} parent=11 // pred_check_branch
          %1008 = sbr.rel (%p1006) target = $region76
        $region75: #{tpu_custom_call.1} parent=11 // pred_region
          _
        $region76: #{tpu_custom_call.1} parent=11 // pred_fallthru
          _
        // Predicated region
        $region77: #{tpu_custom_call.1} parent=11 // pred_check
          %p1009 = pneg %p479
        $region78: #{tpu_custom_call.1} parent=11 // pred_check_branch
          %1011 = sbr.rel (%p1009) target = $region80
        $region79: #{tpu_custom_call.1} parent=11 // pred_region
          _
        $region80: #{tpu_custom_call.1} parent=11 // pred_fallthru
          _
        // Predicated region
        $region81: #{tpu_custom_call.1} parent=11 // pred_check
          %p1012 = pneg %p500
        $region82: #{tpu_custom_call.1} parent=11 // pred_check_branch
          %1014 = sbr.rel (%p1012) target = $region84
        $region83: #{tpu_custom_call.1} parent=11 // pred_region
          _
        $region84: #{tpu_custom_call.1} parent=11 // pred_fallthru
          _
        // Predicated region
        $region85: #{tpu_custom_call.1} parent=11 // pred_check
          %p1015 = pneg %p521
        $region86: #{tpu_custom_call.1} parent=11 // pred_check_branch
          %1017 = sbr.rel (%p1015) target = $region88
        $region87: #{tpu_custom_call.1} parent=11 // pred_region
          _
        $region88: #{tpu_custom_call.1} parent=11 // pred_fallthru
          _
        // Predicated region
        $region89: #{tpu_custom_call.1} parent=11 // pred_check
          %p1018 = pneg %p542
        $region90: #{tpu_custom_call.1} parent=11 // pred_check_branch
          %1020 = sbr.rel (%p1018) target = $region92
        $region91: #{tpu_custom_call.1} parent=11 // pred_region
          _
        $region92: #{tpu_custom_call.1} parent=11 // pred_fallthru
          _
        // Predicated region
        $region93: #{tpu_custom_call.1} parent=11 // pred_check
          %p1021 = pneg %p563
        $region94: #{tpu_custom_call.1} parent=11 // pred_check_branch
          %1023 = sbr.rel (%p1021) target = $region96
        $region95: #{tpu_custom_call.1} parent=11 // pred_region
          _
        $region96: #{tpu_custom_call.1} parent=11 // pred_fallthru
          _
        // Predicated region
        $region97: #{tpu_custom_call.1} parent=11 // pred_check
          %p1024 = pneg %p584
        $region98: #{tpu_custom_call.1} parent=11 // pred_check_branch
          %1026 = sbr.rel (%p1024) target = $region100
        $region99: #{tpu_custom_call.1} parent=11 // pred_region
          _
        $region100: #{tpu_custom_call.1} parent=11 // pred_fallthru
          _
        // Predicated region
        $region101: #{tpu_custom_call.1} parent=11 // pred_check
          %p1027 = pneg %p605
        $region102: #{tpu_custom_call.1} parent=11 // pred_check_branch
          %1029 = sbr.rel (%p1027) target = $region104
        $region103: #{tpu_custom_call.1} parent=11 // pred_region
          _
        $region104: #{tpu_custom_call.1} parent=11 // pred_fallthru
          _
        // Predicated region
        $region105: #{tpu_custom_call.1} parent=11 // pred_check
          %p1030 = pneg %p626
        $region106: #{tpu_custom_call.1} parent=11 // pred_check_branch
          %1032 = sbr.rel (%p1030) target = $region108
        $region107: #{tpu_custom_call.1} parent=11 // pred_region
          _
        $region108: #{tpu_custom_call.1} parent=11 // pred_fallthru
          _
        // Predicated region
        $region109: #{tpu_custom_call.1} parent=11 // pred_check
          %p1033 = pneg %p647
        $region110: #{tpu_custom_call.1} parent=11 // pred_check_branch
          %1035 = sbr.rel (%p1033) target = $region112
        $region111: #{tpu_custom_call.1} parent=11 // pred_region
          _
        $region112: #{tpu_custom_call.1} parent=11 // pred_fallthru
          _
        // Predicated region
        $region113: #{tpu_custom_call.1} parent=11 // pred_check
          %p1036 = pneg %p668
        $region114: #{tpu_custom_call.1} parent=11 // pred_check_branch
          %1038 = sbr.rel (%p1036) target = $region116
        $region115: #{tpu_custom_call.1} parent=11 // pred_region
          _
        $region116: #{tpu_custom_call.1} parent=11 // pred_fallthru
          _
        // Predicated region
        $region117: #{tpu_custom_call.1} parent=11 // pred_check
          %p1039 = pneg %p689
        $region118: #{tpu_custom_call.1} parent=11 // pred_check_branch
          %1041 = sbr.rel (%p1039) target = $region120
        $region119: #{tpu_custom_call.1} parent=11 // pred_region
          _
        $region120: #{tpu_custom_call.1} parent=11 // pred_fallthru
          _
        // Predicated region
        $region121: #{tpu_custom_call.1} parent=11 // pred_check
          %p1042 = pneg %p710
        $region122: #{tpu_custom_call.1} parent=11 // pred_check_branch
          %1044 = sbr.rel (%p1042) target = $region124
        $region123: #{tpu_custom_call.1} parent=11 // pred_region
          _
        $region124: #{tpu_custom_call.1} parent=11 // pred_fallthru
          _
        // Predicated region
        $region125: #{tpu_custom_call.1} parent=11 // pred_check
          %p1045 = pneg %p731
        $region126: #{tpu_custom_call.1} parent=11 // pred_check_branch
          %1047 = sbr.rel (%p1045) target = $region128
        $region127: #{tpu_custom_call.1} parent=11 // pred_region
          _
        $region128: #{tpu_custom_call.1} parent=11 // pred_fallthru
          _
        // Predicated region
        $region129: #{tpu_custom_call.1} parent=11 // pred_check
          %p1048 = pneg %p752
        $region130: #{tpu_custom_call.1} parent=11 // pred_check_branch
          %1050 = sbr.rel (%p1048) target = $region132
        $region131: #{tpu_custom_call.1} parent=11 // pred_region
          _
        $region132: #{tpu_custom_call.1} parent=11 // pred_fallthru
          _
        // Predicated region
        $region133: #{tpu_custom_call.1} parent=11 // pred_check
          %p1051 = pneg %p773
        $region134: #{tpu_custom_call.1} parent=11 // pred_check_branch
          %1053 = sbr.rel (%p1051) target = $region136
        $region135: #{tpu_custom_call.1} parent=11 // pred_region
          _
        $region136: #{tpu_custom_call.1} parent=11 // pred_fallthru
          _
        // Predicated region
        $region137: #{tpu_custom_call.1} parent=11 // pred_check
          %p1054 = pneg %p794
        $region138: #{tpu_custom_call.1} parent=11 // pred_check_branch
          %1056 = sbr.rel (%p1054) target = $region140
        $region139: #{tpu_custom_call.1} parent=11 // pred_region
          _
        $region140: #{tpu_custom_call.1} parent=11 // pred_fallthru
          _
        // Predicated region
        $region141: #{tpu_custom_call.1} parent=11 // pred_check
          %p1057 = pneg %p815
        $region142: #{tpu_custom_call.1} parent=11 // pred_check_branch
          %1059 = sbr.rel (%p1057) target = $region144
        $region143: #{tpu_custom_call.1} parent=11 // pred_region
          _
        $region144: #{tpu_custom_call.1} parent=11 // pred_fallthru
          _
        // Predicated region
        $region145: #{tpu_custom_call.1} parent=11 // pred_check
          %p1060 = pneg %p836
        $region146: #{tpu_custom_call.1} parent=11 // pred_check_branch
          %1062 = sbr.rel (%p1060) target = $region148
        $region147: #{tpu_custom_call.1} parent=11 // pred_region
          _
        $region148: #{tpu_custom_call.1} parent=11 // pred_fallthru
          _
        // Predicated region
        $region149: #{tpu_custom_call.1} parent=11 // pred_check
          %p1063 = pneg %p857
        $region150: #{tpu_custom_call.1} parent=11 // pred_check_branch
          %1065 = sbr.rel (%p1063) target = $region152
        $region151: #{tpu_custom_call.1} parent=11 // pred_region
          _
        $region152: #{tpu_custom_call.1} parent=11 // pred_fallthru
          _
        // Predicated region
        $region153: #{tpu_custom_call.1} parent=11 // pred_check
          %p1066 = pneg %p878
        $region154: #{tpu_custom_call.1} parent=11 // pred_check_branch
          %1068 = sbr.rel (%p1066) target = $region156
        $region155: #{tpu_custom_call.1} parent=11 // pred_region
          _
        $region156: #{tpu_custom_call.1} parent=11 // pred_fallthru
          _
        // Predicated region
        $region157: #{tpu_custom_call.1} parent=11 // pred_check
          %p1069 = pneg %p899
        $region158: #{tpu_custom_call.1} parent=11 // pred_check_branch
          %1071 = sbr.rel (%p1069) target = $region160
        $region159: #{tpu_custom_call.1} parent=11 // pred_region
          _
        $region160: #{tpu_custom_call.1} parent=11 // pred_fallthru
          _
        // Predicated region
        $region161: #{tpu_custom_call.1} parent=11 // pred_check
          %p1072 = pneg %p920
        $region162: #{tpu_custom_call.1} parent=11 // pred_check_branch
          %1074 = sbr.rel (%p1072) target = $region164
        $region163: #{tpu_custom_call.1} parent=11 // pred_region
          _
        $region164: #{tpu_custom_call.1} parent=11 // pred_fallthru
          _
      $region12: #{tpu_custom_call.1} parent=5 // pred_fallthru
        _
      %p1075 = scmp.lt.s32.totalorder %s96, 2
      // Predicated region
      $region165: #{tpu_custom_call.1} parent=5 // pred_check
        %p1076 = pneg %p1075
      $region166: #{tpu_custom_call.1} parent=5 // pred_check_branch
        %1078 = sbr.rel (%p1076) target = $region168
      $region167: #{tpu_custom_call.1} parent=5 // pred_region
        // Predicated region
        $region169: #{tpu_custom_call.1} parent=167 // pred_check
          %p1079 = pneg %p116
        $region170: #{tpu_custom_call.1} parent=167 // pred_check_branch
          %1081 = sbr.rel (%p1079) target = $region172
        $region171: #{tpu_custom_call.1} parent=167 // pred_region
          %p1082 = scmp.lt.s32.totalorder %s96, 1
          %s1083 = scalar_select %p1082, %s96, 1
          %s1084 = scalar_lea.vmem %s3, %s1083
        $region172: #{tpu_custom_call.1} parent=167 // pred_fallthru
          _
      $region168: #{tpu_custom_call.1} parent=5 // pred_fallthru
        _
      %p1085 = scmp.le.s32.totalorder 1, %s96
      %p1086 = scmp.lt.s32.totalorder %s96, 3
      %p1087 = pnand %p1085, %p1086
      %p1088 = pneg %p1087
      // Predicated region
      $region173: #{tpu_custom_call.1} parent=5 // pred_check
        _
      $region174: #{tpu_custom_call.1} parent=5 // pred_check_branch
        %1090 = sbr.rel (%p1087) target = $region176
      $region175: #{tpu_custom_call.1} parent=5 // pred_region
        %s1091 = ssub.s32 %s96, 1
        %p1092 = scmp.lt.s32.totalorder %s101, 1
        %s1093 = scalar_select %p1092, %s101, 1
        %s1094 = scalar_lea.vmem %s3, %s1093
        %p1095 = pneg %p122
        %p1096 = pneg %p119
        %p1097 = pneg %p143
        %p1098 = pneg %p140
        %p1099 = pneg %p164
        %p1100 = pneg %p161
        %p1101 = pneg %p185
        %p1102 = pneg %p182
        %p1103 = pneg %p206
        %p1104 = pneg %p203
        %p1105 = pneg %p227
        %p1106 = pneg %p224
        %p1107 = pneg %p248
        %p1108 = pneg %p245
        %p1109 = pneg %p269
        %p1110 = pneg %p266
        %p1111 = pneg %p290
        %p1112 = pneg %p287
        %p1113 = pneg %p311
        %p1114 = pneg %p308
        %p1115 = pneg %p332
        %p1116 = pneg %p329
        %p1117 = pneg %p353
        %p1118 = pneg %p350
        %p1119 = pneg %p374
        %p1120 = pneg %p371
        %p1121 = pneg %p395
        %p1122 = pneg %p392
        %p1123 = pneg %p416
        %p1124 = pneg %p413
        %p1125 = pneg %p437
        %p1126 = pneg %p434
        %p1127 = pneg %p458
        %p1128 = pneg %p455
        %p1129 = pneg %p479
        %p1130 = pneg %p476
        %p1131 = pneg %p500
        %p1132 = pneg %p497
        %p1133 = pneg %p521
        %p1134 = pneg %p518
        %p1135 = pneg %p542
        %p1136 = pneg %p539
        %p1137 = pneg %p563
        %p1138 = pneg %p560
        %p1139 = pneg %p584
        %p1140 = pneg %p581
        %p1141 = pneg %p605
        %p1142 = pneg %p602
        %p1143 = pneg %p626
        %p1144 = pneg %p623
        %p1145 = pneg %p647
        %p1146 = pneg %p644
        %p1147 = pneg %p668
        %p1148 = pneg %p665
        %p1149 = pneg %p689
        %p1150 = pneg %p686
        %p1151 = pneg %p710
        %p1152 = pneg %p707
        %p1153 = pneg %p731
        %p1154 = pneg %p728
        %p1155 = pneg %p752
        %p1156 = pneg %p749
        %p1157 = pneg %p773
        %p1158 = pneg %p770
        %p1159 = pneg %p794
        %p1160 = pneg %p791
        %p1161 = pneg %p815
        %p1162 = pneg %p812
        %p1163 = pneg %p836
        %p1164 = pneg %p833
        %p1165 = pneg %p857
        %p1166 = pneg %p854
        %p1167 = pneg %p878
        %p1168 = pneg %p875
        %p1169 = pneg %p899
        %p1170 = pneg %p896
        %p1171 = pneg %p920
        %p1172 = pneg %p917
        %p1173 = pneg %p946
        %p1174 = pneg %p943
        %s1175 = sand.u32 %s933, 1
        %s1176 = scalar_lea.sflag [#allocation6], %s1175
        %s1177 = sand.u32 %s933, 1
        %s1178 = scalar_lea.vmem [#allocation5], %s1177
        %p1179 = scmp.lt.s32.totalorder %s101, 1
        %s1180 = scalar_select %p1179, %s101, 1
        %s1181 = scalar_lea.vmem %s3, %s1180
        %s1183 = smul.u32 %s101, 8
        %s1184 = sld [smem:[#allocation4 + %s1183]]
        %s1185 = scalar_lea.vmem %s5, %s1184
        %v1186 = vld [vmem:[%s1185] sm:$0x1]
        %vm1187 = vcmask 253952
        %1188 = vst.msk [vmem:[#allocation2] sm:$0x1] %vm1187, %v1186
        %s1189 = sadd.s32 %s1183, 1
        %s1190 = sld [smem:[#allocation4 + %s1189]]
        %s1191 = scalar_lea.vmem %s5, %s1190
        %v1192 = vld [vmem:[%s1191] sm:$0x1]
        %1193 = vst.msk [vmem:[#allocation2 + $0x1] sm:$0x1] %vm1187, %v1192
        %s1194 = sadd.s32 %s1183, 2
        %s1195 = sld [smem:[#allocation4 + %s1194]]
        %s1196 = scalar_lea.vmem %s5, %s1195
        %v1197 = vld [vmem:[%s1196] sm:$0x1]
        %1198 = vst.msk [vmem:[#allocation2 + $0x2] sm:$0x1] %vm1187, %v1197
        %s1199 = sadd.s32 %s1183, 3
        %s1200 = sld [smem:[#allocation4 + %s1199]]
        %s1201 = scalar_lea.vmem %s5, %s1200
        %v1202 = vld [vmem:[%s1201] sm:$0x1]
        %1203 = vst.msk [vmem:[#allocation2 + $0x3] sm:$0x1] %vm1187, %v1202
        %s1204 = sadd.s32 %s1183, 4
        %s1205 = sld [smem:[#allocation4 + %s1204]]
        %s1206 = scalar_lea.vmem %s5, %s1205
        %v1207 = vld [vmem:[%s1206] sm:$0x1]
        %1208 = vst.msk [vmem:[#allocation2 + $0x4] sm:$0x1] %vm1187, %v1207
        %s1209 = sadd.s32 %s1183, 5
        %s1210 = sld [smem:[#allocation4 + %s1209]]
        %s1211 = scalar_lea.vmem %s5, %s1210
        %v1212 = vld [vmem:[%s1211] sm:$0x1]
        %1213 = vst.msk [vmem:[#allocation2 + $0x5] sm:$0x1] %vm1187, %v1212
        %s1214 = sadd.s32 %s1183, 6
        %s1215 = sld [smem:[#allocation4 + %s1214]]
        %s1216 = scalar_lea.vmem %s5, %s1215
        %v1217 = vld [vmem:[%s1216] sm:$0x1]
        %1218 = vst.msk [vmem:[#allocation2 + $0x6] sm:$0x1] %vm1187, %v1217
        %s1219 = sadd.s32 %s1183, 7
        %s1220 = sld [smem:[#allocation4 + %s1219]]
        %s1221 = scalar_lea.vmem %s5, %s1220
        %v1222 = vld [vmem:[%s1221] sm:$0x1]
        %1223 = vst.msk [vmem:[#allocation2 + $0x7] sm:$0x1] %vm1187, %v1222
        %v1224 = vld [vmem:[#allocation2] sm:$0xff]
        %v1225 = vld [vmem:[%s7] sm:$0xff]
        %v1226 = vadd.f32 %v1224, %v1225
        %v1227 = vld [vmem:[%s9] sm:$0x1]
        %v1228 = vld [vmem:[%s11] sm:$0x1]
        %vm1229 = vcmask 261120
        %v1230 = vsel %vm1229, %v1226, 0.0
        %1231 = vadd.xlane.f32.xlu0 %v1230
        %v1232 = vpop.xlane.xlu0 %1231
        %v1233 = vrcp.pop 32.0
        %v1234 = vmul.f32 %v1232, %v1233
        %v1235 = vsub.f32 %v1226, %v1234
        %v1236 = vmul.f32 %v1235, %v1235
        %v1237 = vsel %vm1229, %v1236, 0.0
        %1238 = vadd.xlane.f32.xlu0 %v1237
        %v1239 = vpop.xlane.xlu0 %1238
        %v1240 = vmul.f32 %v1239, %v1233
        %v1241 = vadd.f32 %v1240, 1e-12
        %v1242 = vrsqrt.pop %v1241
        %v1243 = vmul.f32 %v1235, %v1242
        %v1245 = vlaneseq
        %v1246 = vshrl.u32 %v1245, 7
        %v1247 = vsub.s32 0, %v1246
        %v1248 = vrot.slane %v1227, %v1247
        %v1250 = vmul.f32 %v1243, %v1248
        %v1252 = vlaneseq
        %v1253 = vshrl.u32 %v1252, 7
        %v1254 = vsub.s32 0, %v1253
        %v1255 = vrot.slane %v1228, %v1254
        %v1257 = vadd.f32 %v1250, %v1255
        %v1258 = vld [vmem:[%s1181] sm:$0x1]
        %vm1259 = vcmp.eq.f32.partialorder %v1258, 0.0
        %v1260 = vpack.c.bf16 %v1257, %v1257
        %v1261 = vld [vmem:[%s13] sm:$0xf]
        %v1262 = vld [vmem:[%s13 + $0x4] sm:$0xf]
        %v1263 = vld [vmem:[%s13 + $0x8] sm:$0xf]
        %v1264 = vld [vmem:[%s13 + $0xc] sm:$0xf]
        %v1265 = vld [vmem:[%s15] sm:$0x1]
        %v1267 = vlaneseq
        %v1268 = vshrl.u32 %v1267, 7
        %v1269 = vsub.s32 0, %v1268
        %v1270 = vrot.slane %v1265, %v1269
        %v1276 = vunpack.c.l.b16 %v1261
        %v1277 = vunpack.c.l.b16 %v1262
        %v1278 = vunpack.c.l.b16 %v1263
        %v1279 = vunpack.c.l.b16 %v1264
        %v1280 = vpack.c.b16 %v1277, %v1276
        %v1281 = vpack.c.b16 %v1279, %v1278
        %v1285 = vsel %vm1229, %v1260, 0
        %1287 = vmatprep.subr.bf16.mxu0 0
        %1288 = vmatpush1.bf16.msra.mxu0 0
        %1289 = vmatprep.subr.bf16.mxu0 0
        %1290 = vmatpush1.bf16.msra.mxu0 0
        %1291 = vmatprep.subr.bf16.mxu0 0
        %1292 = vmatpush1.bf16.msra.mxu0 0
        %1293 = vmatprep.subr.bf16.mxu0 0
        %1294 = vmatpush1.bf16.msra.mxu0 0
        %1295 = vmatprep.subr.bf16.mxu0 0
        %1296 = vmatpush1.bf16.msra.mxu0 0
        %1297 = vmatprep.subr.bf16.mxu0 0
        %1298 = vmatpush1.bf16.msra.mxu0 0
        %1299 = vmatprep.subr.bf16.mxu0 0
        %1300 = vmatpush1.bf16.msra.mxu0 %v1281
        %1301 = vmatprep.subr.bf16.mxu0 0
        %1302 = vmatpush1.bf16.msra.mxu0 %v1280
        %1303 = vmatprep.subr.bf16.mxu0 0
        %1304 = vmatpush2.bf16.msra.mxu0 0
        %1305 = vmatprep.subr.bf16.mxu0 0
        %1306 = vmatpush2.bf16.msra.mxu0 0
        %1307 = vmatprep.subr.bf16.mxu0 0
        %1308 = vmatpush2.bf16.msra.mxu0 0
        %1309 = vmatprep.subr.bf16.mxu0 0
        %1310 = vmatpush2.bf16.msra.mxu0 0
        %1311 = vmatprep.subr.bf16.mxu0 0
        %1312 = vmatpush2.bf16.msra.mxu0 0
        %1313 = vmatprep.subr.bf16.mxu0 0
        %1314 = vmatpush2.bf16.msra.mxu0 0
        %1315 = vmatprep.subr.bf16.mxu0 0
        %1316 = vmatpush2.bf16.msra.mxu0 0
        %1317 = vmatprep.subr.bf16.mxu0 0
        %1318 = vmatpush2.bf16.msra.mxu0 0
        %1319 = vmatprep.mubr.bf16.mxu0 0
        %1320 = vmatmul.mubr.bf16.gmra.mxu0 %v1285
        %v1321 = vpop.f32.mrf.mxu0
        %v1322 = vadd.f32 %v1270, %v1321
        %v1323 = vpop.f32.mrf.mxu0
        %v1324 = vpop.f32.mrf.mxu0
        %v1325 = vpop.f32.mrf.mxu0
        %1326 = vdwg.mxu0
        %v1327 = vld [vmem:[%s17] sm:$0xf]
        %v1328 = vld [vmem:[%s17 + $0x4] sm:$0xf]
        %v1329 = vld [vmem:[%s17 + $0x8] sm:$0xf]
        %v1330 = vld [vmem:[%s17 + $0xc] sm:$0xf]
        %v1331 = vld [vmem:[%s19] sm:$0x1]
        %v1333 = vlaneseq
        %v1334 = vshrl.u32 %v1333, 7
        %v1335 = vsub.s32 0, %v1334
        %v1336 = vrot.slane %v1331, %v1335
        %v1342 = vunpack.c.l.b16 %v1327
        %v1343 = vunpack.c.l.b16 %v1328
        %v1344 = vunpack.c.l.b16 %v1329
        %v1345 = vunpack.c.l.b16 %v1330
        %v1346 = vpack.c.b16 %v1343, %v1342
        %v1347 = vpack.c.b16 %v1345, %v1344
        %1350 = vmatprep.subr.bf16.mxu0 0
        %1351 = vmatpush1.bf16.msra.mxu0 0
        %1352 = vmatprep.subr.bf16.mxu0 0
        %1353 = vmatpush1.bf16.msra.mxu0 0
        %1354 = vmatprep.subr.bf16.mxu0 0
        %1355 = vmatpush1.bf16.msra.mxu0 0
        %1356 = vmatprep.subr.bf16.mxu0 0
        %1357 = vmatpush1.bf16.msra.mxu0 0
        %1358 = vmatprep.subr.bf16.mxu0 0
        %1359 = vmatpush1.bf16.msra.mxu0 0
        %1360 = vmatprep.subr.bf16.mxu0 0
        %1361 = vmatpush1.bf16.msra.mxu0 0
        %1362 = vmatprep.subr.bf16.mxu0 0
        %1363 = vmatpush1.bf16.msra.mxu0 %v1347
        %1364 = vmatprep.subr.bf16.mxu0 0
        %1365 = vmatpush1.bf16.msra.mxu0 %v1346
        %1366 = vmatprep.subr.bf16.mxu0 0
        %1367 = vmatpush2.bf16.msra.mxu0 0
        %1368 = vmatprep.subr.bf16.mxu0 0
        %1369 = vmatpush2.bf16.msra.mxu0 0
        %1370 = vmatprep.subr.bf16.mxu0 0
        %1371 = vmatpush2.bf16.msra.mxu0 0
        %1372 = vmatprep.subr.bf16.mxu0 0
        %1373 = vmatpush2.bf16.msra.mxu0 0
        %1374 = vmatprep.subr.bf16.mxu0 0
        %1375 = vmatpush2.bf16.msra.mxu0 0
        %1376 = vmatprep.subr.bf16.mxu0 0
        %1377 = vmatpush2.bf16.msra.mxu0 0
        %1378 = vmatprep.subr.bf16.mxu0 0
        %1379 = vmatpush2.bf16.msra.mxu0 0
        %1380 = vmatprep.subr.bf16.mxu0 0
        %1381 = vmatpush2.bf16.msra.mxu0 0
        %1382 = vmatprep.mubr.bf16.mxu0 0
        %1383 = vmatmul.mubr.bf16.gmra.mxu0 %v1285
        %v1384 = vpop.f32.mrf.mxu0
        %v1385 = vadd.f32 %v1336, %v1384
        %v1386 = vpop.f32.mrf.mxu0
        %v1387 = vpop.f32.mrf.mxu0
        %v1388 = vpop.f32.mrf.mxu0
        %1389 = vdwg.mxu0
        %v1390 = vld [vmem:[%s21] sm:$0xf]
        %v1391 = vld [vmem:[%s21 + $0x4] sm:$0xf]
        %v1392 = vld [vmem:[%s21 + $0x8] sm:$0xf]
        %v1393 = vld [vmem:[%s21 + $0xc] sm:$0xf]
        %v1394 = vld [vmem:[%s23] sm:$0x1]
        %v1396 = vlaneseq
        %v1397 = vshrl.u32 %v1396, 7
        %v1398 = vsub.s32 0, %v1397
        %v1399 = vrot.slane %v1394, %v1398
        %v1405 = vunpack.c.l.b16 %v1390
        %v1406 = vunpack.c.l.b16 %v1391
        %v1407 = vunpack.c.l.b16 %v1392
        %v1408 = vunpack.c.l.b16 %v1393
        %v1409 = vpack.c.b16 %v1406, %v1405
        %v1410 = vpack.c.b16 %v1408, %v1407
        %1413 = vmatprep.subr.bf16.mxu0 0
        %1414 = vmatpush1.bf16.msra.mxu0 0
        %1415 = vmatprep.subr.bf16.mxu0 0
        %1416 = vmatpush1.bf16.msra.mxu0 0
        %1417 = vmatprep.subr.bf16.mxu0 0
        %1418 = vmatpush1.bf16.msra.mxu0 0
        %1419 = vmatprep.subr.bf16.mxu0 0
        %1420 = vmatpush1.bf16.msra.mxu0 0
        %1421 = vmatprep.subr.bf16.mxu0 0
        %1422 = vmatpush1.bf16.msra.mxu0 0
        %1423 = vmatprep.subr.bf16.mxu0 0
        %1424 = vmatpush1.bf16.msra.mxu0 0
        %1425 = vmatprep.subr.bf16.mxu0 0
        %1426 = vmatpush1.bf16.msra.mxu0 %v1410
        %1427 = vmatprep.subr.bf16.mxu0 0
        %1428 = vmatpush1.bf16.msra.mxu0 %v1409
        %1429 = vmatprep.subr.bf16.mxu0 0
        %1430 = vmatpush2.bf16.msra.mxu0 0
        %1431 = vmatprep.subr.bf16.mxu0 0
        %1432 = vmatpush2.bf16.msra.mxu0 0
        %1433 = vmatprep.subr.bf16.mxu0 0
        %1434 = vmatpush2.bf16.msra.mxu0 0
        %1435 = vmatprep.subr.bf16.mxu0 0
        %1436 = vmatpush2.bf16.msra.mxu0 0
        %1437 = vmatprep.subr.bf16.mxu0 0
        %1438 = vmatpush2.bf16.msra.mxu0 0
        %1439 = vmatprep.subr.bf16.mxu0 0
        %1440 = vmatpush2.bf16.msra.mxu0 0
        %1441 = vmatprep.subr.bf16.mxu0 0
        %1442 = vmatpush2.bf16.msra.mxu0 0
        %1443 = vmatprep.subr.bf16.mxu0 0
        %1444 = vmatpush2.bf16.msra.mxu0 0
        %1445 = vmatprep.mubr.bf16.mxu0 0
        %1446 = vmatmul.mubr.bf16.gmra.mxu0 %v1285
        %v1447 = vpop.f32.mrf.mxu0
        %v1448 = vadd.f32 %v1399, %v1447
        %v1449 = vpop.f32.mrf.mxu0
        %v1450 = vpop.f32.mrf.mxu0
        %v1451 = vpop.f32.mrf.mxu0
        %1452 = vdwg.mxu0
        %v1453 = vmul.f32 %v1322, 0.35355338
        %v1454 = vpack.c.bf16 %v1453, %v1453
        %v1455 = vpack.c.bf16 %v1385, %v1385
        %vm1456 = vcmask 64512
        %v1458 = vsel %vm1456, %v1454, 0
        %v1461 = vsel %vm1456, %v1455, 0
        %1463 = vmatprep.subr.bf16.mxu0 0
        %1464 = vmatpush1.bf16.xpose.msra.mxu0 0
        %1465 = vmatprep.subr.bf16.mxu0 0
        %1466 = vmatpush1.bf16.xpose.msra.mxu0 0
        %1467 = vmatprep.subr.bf16.mxu0 0
        %1468 = vmatpush1.bf16.xpose.msra.mxu0 0
        %1469 = vmatprep.subr.bf16.mxu0 0
        %1470 = vmatpush1.bf16.xpose.msra.mxu0 0
        %1471 = vmatprep.subr.bf16.mxu0 0
        %1472 = vmatpush1.bf16.xpose.msra.mxu0 0
        %1473 = vmatprep.subr.bf16.mxu0 0
        %1474 = vmatpush1.bf16.xpose.msra.mxu0 0
        %1475 = vmatprep.subr.bf16.mxu0 0
        %1476 = vmatpush1.bf16.xpose.msra.mxu0 0
        %1477 = vmatprep.subr.bf16.mxu0 0
        %1478 = vmatpush1.bf16.xpose.msra.mxu0 %v1461
        %1479 = vmatprep.subr.bf16.mxu0 0
        %1480 = vmatpush2.bf16.xpose.msra.mxu0 0
        %1481 = vmatprep.subr.bf16.mxu0 0
        %1482 = vmatpush2.bf16.xpose.msra.mxu0 0
        %1483 = vmatprep.subr.bf16.mxu0 0
        %1484 = vmatpush2.bf16.xpose.msra.mxu0 0
        %1485 = vmatprep.subr.bf16.mxu0 0
        %1486 = vmatpush2.bf16.xpose.msra.mxu0 0
        %1487 = vmatprep.subr.bf16.mxu0 0
        %1488 = vmatpush2.bf16.xpose.msra.mxu0 0
        %1489 = vmatprep.subr.bf16.mxu0 0
        %1490 = vmatpush2.bf16.xpose.msra.mxu0 0
        %1491 = vmatprep.subr.bf16.mxu0 0
        %1492 = vmatpush2.bf16.xpose.msra.mxu0 0
        %1493 = vmatprep.subr.bf16.mxu0 0
        %1494 = vmatpush2.bf16.xpose.msra.mxu0 0
        %1495 = vmatprep.mubr.bf16.mxu0 0
        %1496 = vmatmul.mubr.bf16.gmra.mxu0 %v1458
        %v1497 = vpop.f32.mrf.mxu0
        %v1498 = vadd.f32 0.0, %v1497
        %v1499 = vpop.f32.mrf.mxu0
        %v1500 = vpop.f32.mrf.mxu0
        %v1501 = vpop.f32.mrf.mxu0
        %1502 = vdwg.mxu0
        %v1503 = vsel %vm1259, 1, 0
        %v1504 = vlaneseq
        %v1505 = vshrl.u32 %v1504, 7
        %v1506 = vsub.s32 0, %v1505
        %v1507 = vrot.slane %v1503, %v1506
        %vm1508 = vcmp.eq.s32.totalorder %v1507, 1
        %v1509 = vsel %vm1508, -3.4028235e+38, %v1498
        %v1510 = vsel %vm1456, %v1509, -inf
        %1511 = vmax.xlane.f32.xlu0 %v1510
        %v1512 = vpop.xlane.xlu0 %1511
        %v1513 = vsub.f32 %v1509, %v1512
        %v1514 = vmul.f32 %v1513, 1.442695
        %v1515 = vpow.pop %v1514
        %v1516 = vsel %vm1456, %v1515, 0.0
        %1517 = vadd.xlane.f32.xlu0 %v1516
        %v1518 = vpop.xlane.xlu0 %1517
        %v1519 = vrcp.pop %v1518
        %v1520 = vmul.f32 %v1515, %v1519
        %v1521 = vpack.c.bf16 %v1520, %v1520
        %v1522 = vpack.c.bf16 %v1448, %v1448
        %v1524 = vsel %vm1456, %v1521, 0
        %vm1526 = vcmask 1043456
        %v1528 = vsel %vm1526, %v1522, 0
        %1530 = vmatprep.subr.bf16.mxu0 0
        %1531 = vmatpush1.bf16.msra.mxu0 0
        %1532 = vmatprep.subr.bf16.mxu0 0
        %1533 = vmatpush1.bf16.msra.mxu0 0
        %1534 = vmatprep.subr.bf16.mxu0 0
        %1535 = vmatpush1.bf16.msra.mxu0 0
        %1536 = vmatprep.subr.bf16.mxu0 0
        %1537 = vmatpush1.bf16.msra.mxu0 0
        %1538 = vmatprep.subr.bf16.mxu0 0
        %1539 = vmatpush1.bf16.msra.mxu0 0
        %1540 = vmatprep.subr.bf16.mxu0 0
        %1541 = vmatpush1.bf16.msra.mxu0 0
        %1542 = vmatprep.subr.bf16.mxu0 0
        %1543 = vmatpush1.bf16.msra.mxu0 0
        %1544 = vmatprep.subr.bf16.mxu0 0
        %1545 = vmatpush1.bf16.msra.mxu0 %v1528
        %1546 = vmatprep.subr.bf16.mxu0 0
        %1547 = vmatpush2.bf16.msra.mxu0 0
        %1548 = vmatprep.subr.bf16.mxu0 0
        %1549 = vmatpush2.bf16.msra.mxu0 0
        %1550 = vmatprep.subr.bf16.mxu0 0
        %1551 = vmatpush2.bf16.msra.mxu0 0
        %1552 = vmatprep.subr.bf16.mxu0 0
        %1553 = vmatpush2.bf16.msra.mxu0 0
        %1554 = vmatprep.subr.bf16.mxu0 0
        %1555 = vmatpush2.bf16.msra.mxu0 0
        %1556 = vmatprep.subr.bf16.mxu0 0
        %1557 = vmatpush2.bf16.msra.mxu0 0
        %1558 = vmatprep.subr.bf16.mxu0 0
        %1559 = vmatpush2.bf16.msra.mxu0 0
        %1560 = vmatprep.subr.bf16.mxu0 0
        %1561 = vmatpush2.bf16.msra.mxu0 0
        %1562 = vmatprep.mubr.bf16.mxu0 0
        %1563 = vmatmul.mubr.bf16.gmra.mxu0 %v1524
        %v1564 = vpop.f32.mrf.mxu0
        %v1565 = vadd.f32 0.0, %v1564
        %v1566 = vpop.f32.mrf.mxu0
        %v1567 = vpop.f32.mrf.mxu0
        %v1568 = vpop.f32.mrf.mxu0
        %1569 = vdwg.mxu0
        %v1570 = vpack.c.bf16 %v1565, %v1565
        %v1571 = vld [vmem:[%s25] sm:$0xf]
        %s1572 = scalar_lea.vmem %s13, 16
        %v1573 = vld [vmem:[%s1572] sm:$0xf]
        %v1574 = vld [vmem:[%s1572 + $0x4] sm:$0xf]
        %v1575 = vld [vmem:[%s1572 + $0x8] sm:$0xf]
        %v1576 = vld [vmem:[%s1572 + $0xc] sm:$0xf]
        %s1577 = scalar_lea.vmem %s15, 1
        %v1578 = vld [vmem:[%s1577] sm:$0x1]
        %v1580 = vlaneseq
        %v1581 = vshrl.u32 %v1580, 7
        %v1582 = vsub.s32 0, %v1581
        %v1583 = vrot.slane %v1578, %v1582
        %v1589 = vunpack.c.l.b16 %v1573
        %v1590 = vunpack.c.l.b16 %v1574
        %v1591 = vunpack.c.l.b16 %v1575
        %v1592 = vunpack.c.l.b16 %v1576
        %v1593 = vpack.c.b16 %v1590, %v1589
        %v1594 = vpack.c.b16 %v1592, %v1591
        %1597 = vmatprep.subr.bf16.mxu0 0
        %1598 = vmatpush1.bf16.msra.mxu0 0
        %1599 = vmatprep.subr.bf16.mxu0 0
        %1600 = vmatpush1.bf16.msra.mxu0 0
        %1601 = vmatprep.subr.bf16.mxu0 0
        %1602 = vmatpush1.bf16.msra.mxu0 0
        %1603 = vmatprep.subr.bf16.mxu0 0
        %1604 = vmatpush1.bf16.msra.mxu0 0
        %1605 = vmatprep.subr.bf16.mxu0 0
        %1606 = vmatpush1.bf16.msra.mxu0 0
        %1607 = vmatprep.subr.bf16.mxu0 0
        %1608 = vmatpush1.bf16.msra.mxu0 0
        %1609 = vmatprep.subr.bf16.mxu0 0
        %1610 = vmatpush1.bf16.msra.mxu0 %v1594
        %1611 = vmatprep.subr.bf16.mxu0 0
        %1612 = vmatpush1.bf16.msra.mxu0 %v1593
        %1613 = vmatprep.subr.bf16.mxu0 0
        %1614 = vmatpush2.bf16.msra.mxu0 0
        %1615 = vmatprep.subr.bf16.mxu0 0
        %1616 = vmatpush2.bf16.msra.mxu0 0
        %1617 = vmatprep.subr.bf16.mxu0 0
        %1618 = vmatpush2.bf16.msra.mxu0 0
        %1619 = vmatprep.subr.bf16.mxu0 0
        %1620 = vmatpush2.bf16.msra.mxu0 0
        %1621 = vmatprep.subr.bf16.mxu0 0
        %1622 = vmatpush2.bf16.msra.mxu0 0
        %1623 = vmatprep.subr.bf16.mxu0 0
        %1624 = vmatpush2.bf16.msra.mxu0 0
        %1625 = vmatprep.subr.bf16.mxu0 0
        %1626 = vmatpush2.bf16.msra.mxu0 0
        %1627 = vmatprep.subr.bf16.mxu0 0
        %1628 = vmatpush2.bf16.msra.mxu0 0
        %1629 = vmatprep.mubr.bf16.mxu0 0
        %1630 = vmatmul.mubr.bf16.gmra.mxu0 %v1285
        %v1631 = vpop.f32.mrf.mxu0
        %v1632 = vadd.f32 %v1583, %v1631
        %v1633 = vpop.f32.mrf.mxu0
        %v1634 = vpop.f32.mrf.mxu0
        %v1635 = vpop.f32.mrf.mxu0
        %1636 = vdwg.mxu0
        %s1637 = scalar_lea.vmem %s17, 16
        %v1638 = vld [vmem:[%s1637] sm:$0xf]
        %v1639 = vld [vmem:[%s1637 + $0x4] sm:$0xf]
        %v1640 = vld [vmem:[%s1637 + $0x8] sm:$0xf]
        %v1641 = vld [vmem:[%s1637 + $0xc] sm:$0xf]
        %s1642 = scalar_lea.vmem %s19, 1
        %v1643 = vld [vmem:[%s1642] sm:$0x1]
        %v1645 = vlaneseq
        %v1646 = vshrl.u32 %v1645, 7
        %v1647 = vsub.s32 0, %v1646
        %v1648 = vrot.slane %v1643, %v1647
        %v1654 = vunpack.c.l.b16 %v1638
        %v1655 = vunpack.c.l.b16 %v1639
        %v1656 = vunpack.c.l.b16 %v1640
        %v1657 = vunpack.c.l.b16 %v1641
        %v1658 = vpack.c.b16 %v1655, %v1654
        %v1659 = vpack.c.b16 %v1657, %v1656
        %1662 = vmatprep.subr.bf16.mxu0 0
        %1663 = vmatpush1.bf16.msra.mxu0 0
        %1664 = vmatprep.subr.bf16.mxu0 0
        %1665 = vmatpush1.bf16.msra.mxu0 0
        %1666 = vmatprep.subr.bf16.mxu0 0
        %1667 = vmatpush1.bf16.msra.mxu0 0
        %1668 = vmatprep.subr.bf16.mxu0 0
        %1669 = vmatpush1.bf16.msra.mxu0 0
        %1670 = vmatprep.subr.bf16.mxu0 0
        %1671 = vmatpush1.bf16.msra.mxu0 0
        %1672 = vmatprep.subr.bf16.mxu0 0
        %1673 = vmatpush1.bf16.msra.mxu0 0
        %1674 = vmatprep.subr.bf16.mxu0 0
        %1675 = vmatpush1.bf16.msra.mxu0 %v1659
        %1676 = vmatprep.subr.bf16.mxu0 0
        %1677 = vmatpush1.bf16.msra.mxu0 %v1658
        %1678 = vmatprep.subr.bf16.mxu0 0
        %1679 = vmatpush2.bf16.msra.mxu0 0
        %1680 = vmatprep.subr.bf16.mxu0 0
        %1681 = vmatpush2.bf16.msra.mxu0 0
        %1682 = vmatprep.subr.bf16.mxu0 0
        %1683 = vmatpush2.bf16.msra.mxu0 0
        %1684 = vmatprep.subr.bf16.mxu0 0
        %1685 = vmatpush2.bf16.msra.mxu0 0
        %1686 = vmatprep.subr.bf16.mxu0 0
        %1687 = vmatpush2.bf16.msra.mxu0 0
        %1688 = vmatprep.subr.bf16.mxu0 0
        %1689 = vmatpush2.bf16.msra.mxu0 0
        %1690 = vmatprep.subr.bf16.mxu0 0
        %1691 = vmatpush2.bf16.msra.mxu0 0
        %1692 = vmatprep.subr.bf16.mxu0 0
        %1693 = vmatpush2.bf16.msra.mxu0 0
        %1694 = vmatprep.mubr.bf16.mxu0 0
        %1695 = vmatmul.mubr.bf16.gmra.mxu0 %v1285
        %v1696 = vpop.f32.mrf.mxu0
        %v1697 = vadd.f32 %v1648, %v1696
        %v1698 = vpop.f32.mrf.mxu0
        %v1699 = vpop.f32.mrf.mxu0
        %v1700 = vpop.f32.mrf.mxu0
        %1701 = vdwg.mxu0
        %s1702 = scalar_lea.vmem %s21, 16
        %v1703 = vld [vmem:[%s1702] sm:$0xf]
        %v1704 = vld [vmem:[%s1702 + $0x4] sm:$0xf]
        %v1705 = vld [vmem:[%s1702 + $0x8] sm:$0xf]
        %v1706 = vld [vmem:[%s1702 + $0xc] sm:$0xf]
        %s1707 = scalar_lea.vmem %s23, 1
        %v1708 = vld [vmem:[%s1707] sm:$0x1]
        %v1710 = vlaneseq
        %v1711 = vshrl.u32 %v1710, 7
        %v1712 = vsub.s32 0, %v1711
        %v1713 = vrot.slane %v1708, %v1712
        %v1719 = vunpack.c.l.b16 %v1703
        %v1720 = vunpack.c.l.b16 %v1704
        %v1721 = vunpack.c.l.b16 %v1705
        %v1722 = vunpack.c.l.b16 %v1706
        %v1723 = vpack.c.b16 %v1720, %v1719
        %v1724 = vpack.c.b16 %v1722, %v1721
        %1727 = vmatprep.subr.bf16.mxu0 0
        %1728 = vmatpush1.bf16.msra.mxu0 0
        %1729 = vmatprep.subr.bf16.mxu0 0
        %1730 = vmatpush1.bf16.msra.mxu0 0
        %1731 = vmatprep.subr.bf16.mxu0 0
        %1732 = vmatpush1.bf16.msra.mxu0 0
        %1733 = vmatprep.subr.bf16.mxu0 0
        %1734 = vmatpush1.bf16.msra.mxu0 0
        %1735 = vmatprep.subr.bf16.mxu0 0
        %1736 = vmatpush1.bf16.msra.mxu0 0
        %1737 = vmatprep.subr.bf16.mxu0 0
        %1738 = vmatpush1.bf16.msra.mxu0 0
        %1739 = vmatprep.subr.bf16.mxu0 0
        %1740 = vmatpush1.bf16.msra.mxu0 %v1724
        %1741 = vmatprep.subr.bf16.mxu0 0
        %1742 = vmatpush1.bf16.msra.mxu0 %v1723
        %1743 = vmatprep.subr.bf16.mxu0 0
        %1744 = vmatpush2.bf16.msra.mxu0 0
        %1745 = vmatprep.subr.bf16.mxu0 0
        %1746 = vmatpush2.bf16.msra.mxu0 0
        %1747 = vmatprep.subr.bf16.mxu0 0
        %1748 = vmatpush2.bf16.msra.mxu0 0
        %1749 = vmatprep.subr.bf16.mxu0 0
        %1750 = vmatpush2.bf16.msra.mxu0 0
        %1751 = vmatprep.subr.bf16.mxu0 0
        %1752 = vmatpush2.bf16.msra.mxu0 0
        %1753 = vmatprep.subr.bf16.mxu0 0
        %1754 = vmatpush2.bf16.msra.mxu0 0
        %1755 = vmatprep.subr.bf16.mxu0 0
        %1756 = vmatpush2.bf16.msra.mxu0 0
        %1757 = vmatprep.subr.bf16.mxu0 0
        %1758 = vmatpush2.bf16.msra.mxu0 0
        %1759 = vmatprep.mubr.bf16.mxu0 0
        %1760 = vmatmul.mubr.bf16.gmra.mxu0 %v1285
        %v1761 = vpop.f32.mrf.mxu0
        %v1762 = vadd.f32 %v1713, %v1761
        %v1763 = vpop.f32.mrf.mxu0
        %v1764 = vpop.f32.mrf.mxu0
        %v1765 = vpop.f32.mrf.mxu0
        %1766 = vdwg.mxu0
        %v1767 = vmul.f32 %v1632, 0.35355338
        %v1768 = vpack.c.bf16 %v1767, %v1767
        %v1769 = vpack.c.bf16 %v1697, %v1697
        %v1771 = vsel %vm1456, %v1768, 0
        %v1774 = vsel %vm1456, %v1769, 0
        %1776 = vmatprep.subr.bf16.mxu0 0
        %1777 = vmatpush1.bf16.xpose.msra.mxu0 0
        %1778 = vmatprep.subr.bf16.mxu0 0
        %1779 = vmatpush1.bf16.xpose.msra.mxu0 0
        %1780 = vmatprep.subr.bf16.mxu0 0
        %1781 = vmatpush1.bf16.xpose.msra.mxu0 0
        %1782 = vmatprep.subr.bf16.mxu0 0
        %1783 = vmatpush1.bf16.xpose.msra.mxu0 0
        %1784 = vmatprep.subr.bf16.mxu0 0
        %1785 = vmatpush1.bf16.xpose.msra.mxu0 0
        %1786 = vmatprep.subr.bf16.mxu0 0
        %1787 = vmatpush1.bf16.xpose.msra.mxu0 0
        %1788 = vmatprep.subr.bf16.mxu0 0
        %1789 = vmatpush1.bf16.xpose.msra.mxu0 0
        %1790 = vmatprep.subr.bf16.mxu0 0
        %1791 = vmatpush1.bf16.xpose.msra.mxu0 %v1774
        %1792 = vmatprep.subr.bf16.mxu0 0
        %1793 = vmatpush2.bf16.xpose.msra.mxu0 0
        %1794 = vmatprep.subr.bf16.mxu0 0
        %1795 = vmatpush2.bf16.xpose.msra.mxu0 0
        %1796 = vmatprep.subr.bf16.mxu0 0
        %1797 = vmatpush2.bf16.xpose.msra.mxu0 0
        %1798 = vmatprep.subr.bf16.mxu0 0
        %1799 = vmatpush2.bf16.xpose.msra.mxu0 0
        %1800 = vmatprep.subr.bf16.mxu0 0
        %1801 = vmatpush2.bf16.xpose.msra.mxu0 0
        %1802 = vmatprep.subr.bf16.mxu0 0
        %1803 = vmatpush2.bf16.xpose.msra.mxu0 0
        %1804 = vmatprep.subr.bf16.mxu0 0
        %1805 = vmatpush2.bf16.xpose.msra.mxu0 0
        %1806 = vmatprep.subr.bf16.mxu0 0
        %1807 = vmatpush2.bf16.xpose.msra.mxu0 0
        %1808 = vmatprep.mubr.bf16.mxu0 0
        %1809 = vmatmul.mubr.bf16.gmra.mxu0 %v1771
        %v1810 = vpop.f32.mrf.mxu0
        %v1811 = vadd.f32 0.0, %v1810
        %v1812 = vpop.f32.mrf.mxu0
        %v1813 = vpop.f32.mrf.mxu0
        %v1814 = vpop.f32.mrf.mxu0
        %1815 = vdwg.mxu0
        %v1816 = vsel %vm1508, -3.4028235e+38, %v1811
        %v1817 = vsel %vm1456, %v1816, -inf
        %1818 = vmax.xlane.f32.xlu0 %v1817
        %v1819 = vpop.xlane.xlu0 %1818
        %v1820 = vsub.f32 %v1816, %v1819
        %v1821 = vmul.f32 %v1820, 1.442695
        %v1822 = vpow.pop %v1821
        %v1823 = vsel %vm1456, %v1822, 0.0
        %1824 = vadd.xlane.f32.xlu0 %v1823
        %v1825 = vpop.xlane.xlu0 %1824
        %v1826 = vrcp.pop %v1825
        %v1827 = vmul.f32 %v1822, %v1826
        %v1828 = vpack.c.bf16 %v1827, %v1827
        %v1829 = vpack.c.bf16 %v1762, %v1762
        %v1831 = vsel %vm1456, %v1828, 0
        %v1834 = vsel %vm1526, %v1829, 0
        %1836 = vmatprep.subr.bf16.mxu0 0
        %1837 = vmatpush1.bf16.msra.mxu0 0
        %1838 = vmatprep.subr.bf16.mxu0 0
        %1839 = vmatpush1.bf16.msra.mxu0 0
        %1840 = vmatprep.subr.bf16.mxu0 0
        %1841 = vmatpush1.bf16.msra.mxu0 0
        %1842 = vmatprep.subr.bf16.mxu0 0
        %1843 = vmatpush1.bf16.msra.mxu0 0
        %1844 = vmatprep.subr.bf16.mxu0 0
        %1845 = vmatpush1.bf16.msra.mxu0 0
        %1846 = vmatprep.subr.bf16.mxu0 0
        %1847 = vmatpush1.bf16.msra.mxu0 0
        %1848 = vmatprep.subr.bf16.mxu0 0
        %1849 = vmatpush1.bf16.msra.mxu0 0
        %1850 = vmatprep.subr.bf16.mxu0 0
        %1851 = vmatpush1.bf16.msra.mxu0 %v1834
        %1852 = vmatprep.subr.bf16.mxu0 0
        %1853 = vmatpush2.bf16.msra.mxu0 0
        %1854 = vmatprep.subr.bf16.mxu0 0
        %1855 = vmatpush2.bf16.msra.mxu0 0
        %1856 = vmatprep.subr.bf16.mxu0 0
        %1857 = vmatpush2.bf16.msra.mxu0 0
        %1858 = vmatprep.subr.bf16.mxu0 0
        %1859 = vmatpush2.bf16.msra.mxu0 0
        %1860 = vmatprep.subr.bf16.mxu0 0
        %1861 = vmatpush2.bf16.msra.mxu0 0
        %1862 = vmatprep.subr.bf16.mxu0 0
        %1863 = vmatpush2.bf16.msra.mxu0 0
        %1864 = vmatprep.subr.bf16.mxu0 0
        %1865 = vmatpush2.bf16.msra.mxu0 0
        %1866 = vmatprep.subr.bf16.mxu0 0
        %1867 = vmatpush2.bf16.msra.mxu0 0
        %1868 = vmatprep.mubr.bf16.mxu0 0
        %1869 = vmatmul.mubr.bf16.gmra.mxu0 %v1831
        %v1870 = vpop.f32.mrf.mxu0
        %v1871 = vadd.f32 0.0, %v1870
        %v1872 = vpop.f32.mrf.mxu0
        %v1873 = vpop.f32.mrf.mxu0
        %v1874 = vpop.f32.mrf.mxu0
        %1875 = vdwg.mxu0
        %v1876 = vpack.c.bf16 %v1871, %v1871
        %s1877 = scalar_lea.vmem %s25, 4
        %v1878 = vld [vmem:[%s1877] sm:$0xf]
        %v1880 = vsel %vm1456, %v1876, 0
        %v1883 = vsel %vm1526, %v1878, 0
        %1885 = vmatprep.subr.bf16.mxu0 0
        %1886 = vmatpush1.bf16.msra.mxu0 0
        %1887 = vmatprep.subr.bf16.mxu0 0
        %1888 = vmatpush1.bf16.msra.mxu0 0
        %1889 = vmatprep.subr.bf16.mxu0 0
        %1890 = vmatpush1.bf16.msra.mxu0 0
        %1891 = vmatprep.subr.bf16.mxu0 0
        %1892 = vmatpush1.bf16.msra.mxu0 0
        %1893 = vmatprep.subr.bf16.mxu0 0
        %1894 = vmatpush1.bf16.msra.mxu0 0
        %1895 = vmatprep.subr.bf16.mxu0 0
        %1896 = vmatpush1.bf16.msra.mxu0 0
        %1897 = vmatprep.subr.bf16.mxu0 0
        %1898 = vmatpush1.bf16.msra.mxu0 0
        %1899 = vmatprep.subr.bf16.mxu0 0
        %1900 = vmatpush1.bf16.msra.mxu0 %v1883
        %1901 = vmatprep.subr.bf16.mxu0 0
        %1902 = vmatpush2.bf16.msra.mxu0 0
        %1903 = vmatprep.subr.bf16.mxu0 0
        %1904 = vmatpush2.bf16.msra.mxu0 0
        %1905 = vmatprep.subr.bf16.mxu0 0
        %1906 = vmatpush2.bf16.msra.mxu0 0
        %1907 = vmatprep.subr.bf16.mxu0 0
        %1908 = vmatpush2.bf16.msra.mxu0 0
        %1909 = vmatprep.subr.bf16.mxu0 0
        %1910 = vmatpush2.bf16.msra.mxu0 0
        %1911 = vmatprep.subr.bf16.mxu0 0
        %1912 = vmatpush2.bf16.msra.mxu0 0
        %1913 = vmatprep.subr.bf16.mxu0 0
        %1914 = vmatpush2.bf16.msra.mxu0 0
        %1915 = vmatprep.subr.bf16.mxu0 0
        %1916 = vmatpush2.bf16.msra.mxu0 0
        %1917 = vmatprep.mubr.bf16.mxu0 0
        %1918 = vmatmul.mubr.bf16.gmra.mxu0 %v1880
        %v1919 = vpop.f32.mrf.mxu0
        %v1920 = vadd.f32 0.0, %v1919
        %v1921 = vpop.f32.mrf.mxu0
        %v1922 = vpop.f32.mrf.mxu0
        %v1923 = vpop.f32.mrf.mxu0
        %1924 = vdwg.mxu0
        %v1926 = vsel %vm1456, %v1570, 0
        %v1929 = vsel %vm1526, %v1571, 0
        %1931 = vmatprep.subr.bf16.mxu0 0
        %1932 = vmatpush1.bf16.msra.mxu0 0
        %1933 = vmatprep.subr.bf16.mxu0 0
        %1934 = vmatpush1.bf16.msra.mxu0 0
        %1935 = vmatprep.subr.bf16.mxu0 0
        %1936 = vmatpush1.bf16.msra.mxu0 0
        %1937 = vmatprep.subr.bf16.mxu0 0
        %1938 = vmatpush1.bf16.msra.mxu0 0
        %1939 = vmatprep.subr.bf16.mxu0 0
        %1940 = vmatpush1.bf16.msra.mxu0 0
        %1941 = vmatprep.subr.bf16.mxu0 0
        %1942 = vmatpush1.bf16.msra.mxu0 0
        %1943 = vmatprep.subr.bf16.mxu0 0
        %1944 = vmatpush1.bf16.msra.mxu0 0
        %1945 = vmatprep.subr.bf16.mxu0 0
        %1946 = vmatpush1.bf16.msra.mxu0 %v1929
        %1947 = vmatprep.subr.bf16.mxu0 0
        %1948 = vmatpush2.bf16.msra.mxu0 0
        %1949 = vmatprep.subr.bf16.mxu0 0
        %1950 = vmatpush2.bf16.msra.mxu0 0
        %1951 = vmatprep.subr.bf16.mxu0 0
        %1952 = vmatpush2.bf16.msra.mxu0 0
        %1953 = vmatprep.subr.bf16.mxu0 0
        %1954 = vmatpush2.bf16.msra.mxu0 0
        %1955 = vmatprep.subr.bf16.mxu0 0
        %1956 = vmatpush2.bf16.msra.mxu0 0
        %1957 = vmatprep.subr.bf16.mxu0 0
        %1958 = vmatpush2.bf16.msra.mxu0 0
        %1959 = vmatprep.subr.bf16.mxu0 0
        %1960 = vmatpush2.bf16.msra.mxu0 0
        %1961 = vmatprep.subr.bf16.mxu0 0
        %1962 = vmatpush2.bf16.msra.mxu0 0
        %1963 = vmatprep.mubr.bf16.mxu0 0
        %1964 = vmatmul.mubr.bf16.gmra.mxu0 %v1926
        %v1965 = vpop.f32.mrf.mxu0
        %v1966 = vadd.f32 %v1920, %v1965
        %v1967 = vpop.f32.mrf.mxu0
        %v1968 = vpop.f32.mrf.mxu0
        %v1969 = vpop.f32.mrf.mxu0
        %1970 = vdwg.mxu0
        %s1971 = scalar_lea.vmem %s13, 32
        %v1972 = vld [vmem:[%s1971] sm:$0xf]
        %v1973 = vld [vmem:[%s1971 + $0x4] sm:$0xf]
        %v1974 = vld [vmem:[%s1971 + $0x8] sm:$0xf]
        %v1975 = vld [vmem:[%s1971 + $0xc] sm:$0xf]
        %s1976 = scalar_lea.vmem %s15, 2
        %v1977 = vld [vmem:[%s1976] sm:$0x1]
        %v1979 = vlaneseq
        %v1980 = vshrl.u32 %v1979, 7
        %v1981 = vsub.s32 0, %v1980
        %v1982 = vrot.slane %v1977, %v1981
        %v1988 = vunpack.c.l.b16 %v1972
        %v1989 = vunpack.c.l.b16 %v1973
        %v1990 = vunpack.c.l.b16 %v1974
        %v1991 = vunpack.c.l.b16 %v1975
        %v1992 = vpack.c.b16 %v1989, %v1988
        %v1993 = vpack.c.b16 %v1991, %v1990
        %1996 = vmatprep.subr.bf16.mxu0 0
        %1997 = vmatpush1.bf16.msra.mxu0 0
        %1998 = vmatprep.subr.bf16.mxu0 0
        %1999 = vmatpush1.bf16.msra.mxu0 0
        %2000 = vmatprep.subr.bf16.mxu0 0
        %2001 = vmatpush1.bf16.msra.mxu0 0
        %2002 = vmatprep.subr.bf16.mxu0 0
        %2003 = vmatpush1.bf16.msra.mxu0 0
        %2004 = vmatprep.subr.bf16.mxu0 0
        %2005 = vmatpush1.bf16.msra.mxu0 0
        %2006 = vmatprep.subr.bf16.mxu0 0
        %2007 = vmatpush1.bf16.msra.mxu0 0
        %2008 = vmatprep.subr.bf16.mxu0 0
        %2009 = vmatpush1.bf16.msra.mxu0 %v1993
        %2010 = vmatprep.subr.bf16.mxu0 0
        %2011 = vmatpush1.bf16.msra.mxu0 %v1992
        %2012 = vmatprep.subr.bf16.mxu0 0
        %2013 = vmatpush2.bf16.msra.mxu0 0
        %2014 = vmatprep.subr.bf16.mxu0 0
        %2015 = vmatpush2.bf16.msra.mxu0 0
        %2016 = vmatprep.subr.bf16.mxu0 0
        %2017 = vmatpush2.bf16.msra.mxu0 0
        %2018 = vmatprep.subr.bf16.mxu0 0
        %2019 = vmatpush2.bf16.msra.mxu0 0
        %2020 = vmatprep.subr.bf16.mxu0 0
        %2021 = vmatpush2.bf16.msra.mxu0 0
        %2022 = vmatprep.subr.bf16.mxu0 0
        %2023 = vmatpush2.bf16.msra.mxu0 0
        %2024 = vmatprep.subr.bf16.mxu0 0
        %2025 = vmatpush2.bf16.msra.mxu0 0
        %2026 = vmatprep.subr.bf16.mxu0 0
        %2027 = vmatpush2.bf16.msra.mxu0 0
        %2028 = vmatprep.mubr.bf16.mxu0 0
        %2029 = vmatmul.mubr.bf16.gmra.mxu0 %v1285
        %v2030 = vpop.f32.mrf.mxu0
        %v2031 = vadd.f32 %v1982, %v2030
        %v2032 = vpop.f32.mrf.mxu0
        %v2033 = vpop.f32.mrf.mxu0
        %v2034 = vpop.f32.mrf.mxu0
        %2035 = vdwg.mxu0
        %s2036 = scalar_lea.vmem %s17, 32
        %v2037 = vld [vmem:[%s2036] sm:$0xf]
        %v2038 = vld [vmem:[%s2036 + $0x4] sm:$0xf]
        %v2039 = vld [vmem:[%s2036 + $0x8] sm:$0xf]
        %v2040 = vld [vmem:[%s2036 + $0xc] sm:$0xf]
        %s2041 = scalar_lea.vmem %s19, 2
        %v2042 = vld [vmem:[%s2041] sm:$0x1]
        %v2044 = vlaneseq
        %v2045 = vshrl.u32 %v2044, 7
        %v2046 = vsub.s32 0, %v2045
        %v2047 = vrot.slane %v2042, %v2046
        %v2053 = vunpack.c.l.b16 %v2037
        %v2054 = vunpack.c.l.b16 %v2038
        %v2055 = vunpack.c.l.b16 %v2039
        %v2056 = vunpack.c.l.b16 %v2040
        %v2057 = vpack.c.b16 %v2054, %v2053
        %v2058 = vpack.c.b16 %v2056, %v2055
        %2061 = vmatprep.subr.bf16.mxu0 0
        %2062 = vmatpush1.bf16.msra.mxu0 0
        %2063 = vmatprep.subr.bf16.mxu0 0
        %2064 = vmatpush1.bf16.msra.mxu0 0
        %2065 = vmatprep.subr.bf16.mxu0 0
        %2066 = vmatpush1.bf16.msra.mxu0 0
        %2067 = vmatprep.subr.bf16.mxu0 0
        %2068 = vmatpush1.bf16.msra.mxu0 0
        %2069 = vmatprep.subr.bf16.mxu0 0
        %2070 = vmatpush1.bf16.msra.mxu0 0
        %2071 = vmatprep.subr.bf16.mxu0 0
        %2072 = vmatpush1.bf16.msra.mxu0 0
        %2073 = vmatprep.subr.bf16.mxu0 0
        %2074 = vmatpush1.bf16.msra.mxu0 %v2058
        %2075 = vmatprep.subr.bf16.mxu0 0
        %2076 = vmatpush1.bf16.msra.mxu0 %v2057
        %2077 = vmatprep.subr.bf16.mxu0 0
        %2078 = vmatpush2.bf16.msra.mxu0 0
        %2079 = vmatprep.subr.bf16.mxu0 0
        %2080 = vmatpush2.bf16.msra.mxu0 0
        %2081 = vmatprep.subr.bf16.mxu0 0
        %2082 = vmatpush2.bf16.msra.mxu0 0
        %2083 = vmatprep.subr.bf16.mxu0 0
        %2084 = vmatpush2.bf16.msra.mxu0 0
        %2085 = vmatprep.subr.bf16.mxu0 0
        %2086 = vmatpush2.bf16.msra.mxu0 0
        %2087 = vmatprep.subr.bf16.mxu0 0
        %2088 = vmatpush2.bf16.msra.mxu0 0
        %2089 = vmatprep.subr.bf16.mxu0 0
        %2090 = vmatpush2.bf16.msra.mxu0 0
        %2091 = vmatprep.subr.bf16.mxu0 0
        %2092 = vmatpush2.bf16.msra.mxu0 0
        %2093 = vmatprep.mubr.bf16.mxu0 0
        %2094 = vmatmul.mubr.bf16.gmra.mxu0 %v1285
        %v2095 = vpop.f32.mrf.mxu0
        %v2096 = vadd.f32 %v2047, %v2095
        %v2097 = vpop.f32.mrf.mxu0
        %v2098 = vpop.f32.mrf.mxu0
        %v2099 = vpop.f32.mrf.mxu0
        %2100 = vdwg.mxu0
        %s2101 = scalar_lea.vmem %s21, 32
        %v2102 = vld [vmem:[%s2101] sm:$0xf]
        %v2103 = vld [vmem:[%s2101 + $0x4] sm:$0xf]
        %v2104 = vld [vmem:[%s2101 + $0x8] sm:$0xf]
        %v2105 = vld [vmem:[%s2101 + $0xc] sm:$0xf]
        %s2106 = scalar_lea.vmem %s23, 2
        %v2107 = vld [vmem:[%s2106] sm:$0x1]
        %v2109 = vlaneseq
        %v2110 = vshrl.u32 %v2109, 7
        %v2111 = vsub.s32 0, %v2110
        %v2112 = vrot.slane %v2107, %v2111
        %v2118 = vunpack.c.l.b16 %v2102
        %v2119 = vunpack.c.l.b16 %v2103
        %v2120 = vunpack.c.l.b16 %v2104
        %v2121 = vunpack.c.l.b16 %v2105
        %v2122 = vpack.c.b16 %v2119, %v2118
        %v2123 = vpack.c.b16 %v2121, %v2120
        %2126 = vmatprep.subr.bf16.mxu0 0
        %2127 = vmatpush1.bf16.msra.mxu0 0
        %2128 = vmatprep.subr.bf16.mxu0 0
        %2129 = vmatpush1.bf16.msra.mxu0 0
        %2130 = vmatprep.subr.bf16.mxu0 0
        %2131 = vmatpush1.bf16.msra.mxu0 0
        %2132 = vmatprep.subr.bf16.mxu0 0
        %2133 = vmatpush1.bf16.msra.mxu0 0
        %2134 = vmatprep.subr.bf16.mxu0 0
        %2135 = vmatpush1.bf16.msra.mxu0 0
        %2136 = vmatprep.subr.bf16.mxu0 0
        %2137 = vmatpush1.bf16.msra.mxu0 0
        %2138 = vmatprep.subr.bf16.mxu0 0
        %2139 = vmatpush1.bf16.msra.mxu0 %v2123
        %2140 = vmatprep.subr.bf16.mxu0 0
        %2141 = vmatpush1.bf16.msra.mxu0 %v2122
        %2142 = vmatprep.subr.bf16.mxu0 0
        %2143 = vmatpush2.bf16.msra.mxu0 0
        %2144 = vmatprep.subr.bf16.mxu0 0
        %2145 = vmatpush2.bf16.msra.mxu0 0
        %2146 = vmatprep.subr.bf16.mxu0 0
        %2147 = vmatpush2.bf16.msra.mxu0 0
        %2148 = vmatprep.subr.bf16.mxu0 0
        %2149 = vmatpush2.bf16.msra.mxu0 0
        %2150 = vmatprep.subr.bf16.mxu0 0
        %2151 = vmatpush2.bf16.msra.mxu0 0
        %2152 = vmatprep.subr.bf16.mxu0 0
        %2153 = vmatpush2.bf16.msra.mxu0 0
        %2154 = vmatprep.subr.bf16.mxu0 0
        %2155 = vmatpush2.bf16.msra.mxu0 0
        %2156 = vmatprep.subr.bf16.mxu0 0
        %2157 = vmatpush2.bf16.msra.mxu0 0
        %2158 = vmatprep.mubr.bf16.mxu0 0
        %2159 = vmatmul.mubr.bf16.gmra.mxu0 %v1285
        %v2160 = vpop.f32.mrf.mxu0
        %v2161 = vadd.f32 %v2112, %v2160
        %v2162 = vpop.f32.mrf.mxu0
        %v2163 = vpop.f32.mrf.mxu0
        %v2164 = vpop.f32.mrf.mxu0
        %2165 = vdwg.mxu0
        %v2166 = vmul.f32 %v2031, 0.35355338
        %v2167 = vpack.c.bf16 %v2166, %v2166
        %v2168 = vpack.c.bf16 %v2096, %v2096
        %v2170 = vsel %vm1456, %v2167, 0
        %v2173 = vsel %vm1456, %v2168, 0
        %2175 = vmatprep.subr.bf16.mxu0 0
        %2176 = vmatpush1.bf16.xpose.msra.mxu0 0
        %2177 = vmatprep.subr.bf16.mxu0 0
        %2178 = vmatpush1.bf16.xpose.msra.mxu0 0
        %2179 = vmatprep.subr.bf16.mxu0 0
        %2180 = vmatpush1.bf16.xpose.msra.mxu0 0
        %2181 = vmatprep.subr.bf16.mxu0 0
        %2182 = vmatpush1.bf16.xpose.msra.mxu0 0
        %2183 = vmatprep.subr.bf16.mxu0 0
        %2184 = vmatpush1.bf16.xpose.msra.mxu0 0
        %2185 = vmatprep.subr.bf16.mxu0 0
        %2186 = vmatpush1.bf16.xpose.msra.mxu0 0
        %2187 = vmatprep.subr.bf16.mxu0 0
        %2188 = vmatpush1.bf16.xpose.msra.mxu0 0
        %2189 = vmatprep.subr.bf16.mxu0 0
        %2190 = vmatpush1.bf16.xpose.msra.mxu0 %v2173
        %2191 = vmatprep.subr.bf16.mxu0 0
        %2192 = vmatpush2.bf16.xpose.msra.mxu0 0
        %2193 = vmatprep.subr.bf16.mxu0 0
        %2194 = vmatpush2.bf16.xpose.msra.mxu0 0
        %2195 = vmatprep.subr.bf16.mxu0 0
        %2196 = vmatpush2.bf16.xpose.msra.mxu0 0
        %2197 = vmatprep.subr.bf16.mxu0 0
        %2198 = vmatpush2.bf16.xpose.msra.mxu0 0
        %2199 = vmatprep.subr.bf16.mxu0 0
        %2200 = vmatpush2.bf16.xpose.msra.mxu0 0
        %2201 = vmatprep.subr.bf16.mxu0 0
        %2202 = vmatpush2.bf16.xpose.msra.mxu0 0
        %2203 = vmatprep.subr.bf16.mxu0 0
        %2204 = vmatpush2.bf16.xpose.msra.mxu0 0
        %2205 = vmatprep.subr.bf16.mxu0 0
        %2206 = vmatpush2.bf16.xpose.msra.mxu0 0
        %2207 = vmatprep.mubr.bf16.mxu0 0
        %2208 = vmatmul.mubr.bf16.gmra.mxu0 %v2170
        %v2209 = vpop.f32.mrf.mxu0
        %v2210 = vadd.f32 0.0, %v2209
        %v2211 = vpop.f32.mrf.mxu0
        %v2212 = vpop.f32.mrf.mxu0
        %v2213 = vpop.f32.mrf.mxu0
        %2214 = vdwg.mxu0
        %v2215 = vsel %vm1508, -3.4028235e+38, %v2210
        %v2216 = vsel %vm1456, %v2215, -inf
        %2217 = vmax.xlane.f32.xlu0 %v2216
        %v2218 = vpop.xlane.xlu0 %2217
        %v2219 = vsub.f32 %v2215, %v2218
        %v2220 = vmul.f32 %v2219, 1.442695
        %v2221 = vpow.pop %v2220
        %v2222 = vsel %vm1456, %v2221, 0.0
        %2223 = vadd.xlane.f32.xlu0 %v2222
        %v2224 = vpop.xlane.xlu0 %2223
        %v2225 = vrcp.pop %v2224
        %v2226 = vmul.f32 %v2221, %v2225
        %v2227 = vpack.c.bf16 %v2226, %v2226
        %v2228 = vpack.c.bf16 %v2161, %v2161
        %v2230 = vsel %vm1456, %v2227, 0
        %v2233 = vsel %vm1526, %v2228, 0
        %2235 = vmatprep.subr.bf16.mxu0 0
        %2236 = vmatpush1.bf16.msra.mxu0 0
        %2237 = vmatprep.subr.bf16.mxu0 0
        %2238 = vmatpush1.bf16.msra.mxu0 0
        %2239 = vmatprep.subr.bf16.mxu0 0
        %2240 = vmatpush1.bf16.msra.mxu0 0
        %2241 = vmatprep.subr.bf16.mxu0 0
        %2242 = vmatpush1.bf16.msra.mxu0 0
        %2243 = vmatprep.subr.bf16.mxu0 0
        %2244 = vmatpush1.bf16.msra.mxu0 0
        %2245 = vmatprep.subr.bf16.mxu0 0
        %2246 = vmatpush1.bf16.msra.mxu0 0
        %2247 = vmatprep.subr.bf16.mxu0 0
        %2248 = vmatpush1.bf16.msra.mxu0 0
        %2249 = vmatprep.subr.bf16.mxu0 0
        %2250 = vmatpush1.bf16.msra.mxu0 %v2233
        %2251 = vmatprep.subr.bf16.mxu0 0
        %2252 = vmatpush2.bf16.msra.mxu0 0
        %2253 = vmatprep.subr.bf16.mxu0 0
        %2254 = vmatpush2.bf16.msra.mxu0 0
        %2255 = vmatprep.subr.bf16.mxu0 0
        %2256 = vmatpush2.bf16.msra.mxu0 0
        %2257 = vmatprep.subr.bf16.mxu0 0
        %2258 = vmatpush2.bf16.msra.mxu0 0
        %2259 = vmatprep.subr.bf16.mxu0 0
        %2260 = vmatpush2.bf16.msra.mxu0 0
        %2261 = vmatprep.subr.bf16.mxu0 0
        %2262 = vmatpush2.bf16.msra.mxu0 0
        %2263 = vmatprep.subr.bf16.mxu0 0
        %2264 = vmatpush2.bf16.msra.mxu0 0
        %2265 = vmatprep.subr.bf16.mxu0 0
        %2266 = vmatpush2.bf16.msra.mxu0 0
        %2267 = vmatprep.mubr.bf16.mxu0 0
        %2268 = vmatmul.mubr.bf16.gmra.mxu0 %v2230
        %v2269 = vpop.f32.mrf.mxu0
        %v2270 = vadd.f32 0.0, %v2269
        %v2271 = vpop.f32.mrf.mxu0
        %v2272 = vpop.f32.mrf.mxu0
        %v2273 = vpop.f32.mrf.mxu0
        %2274 = vdwg.mxu0
        %v2275 = vpack.c.bf16 %v2270, %v2270
        %s2276 = scalar_lea.vmem %s25, 8
        %v2277 = vld [vmem:[%s2276] sm:$0xf]
        %v2279 = vsel %vm1456, %v2275, 0
        %v2282 = vsel %vm1526, %v2277, 0
        %2284 = vmatprep.subr.bf16.mxu0 0
        %2285 = vmatpush1.bf16.msra.mxu0 0
        %2286 = vmatprep.subr.bf16.mxu0 0
        %2287 = vmatpush1.bf16.msra.mxu0 0
        %2288 = vmatprep.subr.bf16.mxu0 0
        %2289 = vmatpush1.bf16.msra.mxu0 0
        %2290 = vmatprep.subr.bf16.mxu0 0
        %2291 = vmatpush1.bf16.msra.mxu0 0
        %2292 = vmatprep.subr.bf16.mxu0 0
        %2293 = vmatpush1.bf16.msra.mxu0 0
        %2294 = vmatprep.subr.bf16.mxu0 0
        %2295 = vmatpush1.bf16.msra.mxu0 0
        %2296 = vmatprep.subr.bf16.mxu0 0
        %2297 = vmatpush1.bf16.msra.mxu0 0
        %2298 = vmatprep.subr.bf16.mxu0 0
        %2299 = vmatpush1.bf16.msra.mxu0 %v2282
        %2300 = vmatprep.subr.bf16.mxu0 0
        %2301 = vmatpush2.bf16.msra.mxu0 0
        %2302 = vmatprep.subr.bf16.mxu0 0
        %2303 = vmatpush2.bf16.msra.mxu0 0
        %2304 = vmatprep.subr.bf16.mxu0 0
        %2305 = vmatpush2.bf16.msra.mxu0 0
        %2306 = vmatprep.subr.bf16.mxu0 0
        %2307 = vmatpush2.bf16.msra.mxu0 0
        %2308 = vmatprep.subr.bf16.mxu0 0
        %2309 = vmatpush2.bf16.msra.mxu0 0
        %2310 = vmatprep.subr.bf16.mxu0 0
        %2311 = vmatpush2.bf16.msra.mxu0 0
        %2312 = vmatprep.subr.bf16.mxu0 0
        %2313 = vmatpush2.bf16.msra.mxu0 0
        %2314 = vmatprep.subr.bf16.mxu0 0
        %2315 = vmatpush2.bf16.msra.mxu0 0
        %2316 = vmatprep.mubr.bf16.mxu0 0
        %2317 = vmatmul.mubr.bf16.gmra.mxu0 %v2279
        %v2318 = vpop.f32.mrf.mxu0
        %v2319 = vadd.f32 0.0, %v2318
        %v2320 = vpop.f32.mrf.mxu0
        %v2321 = vpop.f32.mrf.mxu0
        %v2322 = vpop.f32.mrf.mxu0
        %2323 = vdwg.mxu0
        %v2324 = vadd.f32 %v1966, %v2319
        %s2325 = scalar_lea.vmem %s13, 48
        %v2326 = vld [vmem:[%s2325] sm:$0xf]
        %v2327 = vld [vmem:[%s2325 + $0x4] sm:$0xf]
        %v2328 = vld [vmem:[%s2325 + $0x8] sm:$0xf]
        %v2329 = vld [vmem:[%s2325 + $0xc] sm:$0xf]
        %s2330 = scalar_lea.vmem %s15, 3
        %v2331 = vld [vmem:[%s2330] sm:$0x1]
        %v2333 = vlaneseq
        %v2334 = vshrl.u32 %v2333, 7
        %v2335 = vsub.s32 0, %v2334
        %v2336 = vrot.slane %v2331, %v2335
        %v2342 = vunpack.c.l.b16 %v2326
        %v2343 = vunpack.c.l.b16 %v2327
        %v2344 = vunpack.c.l.b16 %v2328
        %v2345 = vunpack.c.l.b16 %v2329
        %v2346 = vpack.c.b16 %v2343, %v2342
        %v2347 = vpack.c.b16 %v2345, %v2344
        %2350 = vmatprep.subr.bf16.mxu0 0
        %2351 = vmatpush1.bf16.msra.mxu0 0
        %2352 = vmatprep.subr.bf16.mxu0 0
        %2353 = vmatpush1.bf16.msra.mxu0 0
        %2354 = vmatprep.subr.bf16.mxu0 0
        %2355 = vmatpush1.bf16.msra.mxu0 0
        %2356 = vmatprep.subr.bf16.mxu0 0
        %2357 = vmatpush1.bf16.msra.mxu0 0
        %2358 = vmatprep.subr.bf16.mxu0 0
        %2359 = vmatpush1.bf16.msra.mxu0 0
        %2360 = vmatprep.subr.bf16.mxu0 0
        %2361 = vmatpush1.bf16.msra.mxu0 0
        %2362 = vmatprep.subr.bf16.mxu0 0
        %2363 = vmatpush1.bf16.msra.mxu0 %v2347
        %2364 = vmatprep.subr.bf16.mxu0 0
        %2365 = vmatpush1.bf16.msra.mxu0 %v2346
        %2366 = vmatprep.subr.bf16.mxu0 0
        %2367 = vmatpush2.bf16.msra.mxu0 0
        %2368 = vmatprep.subr.bf16.mxu0 0
        %2369 = vmatpush2.bf16.msra.mxu0 0
        %2370 = vmatprep.subr.bf16.mxu0 0
        %2371 = vmatpush2.bf16.msra.mxu0 0
        %2372 = vmatprep.subr.bf16.mxu0 0
        %2373 = vmatpush2.bf16.msra.mxu0 0
        %2374 = vmatprep.subr.bf16.mxu0 0
        %2375 = vmatpush2.bf16.msra.mxu0 0
        %2376 = vmatprep.subr.bf16.mxu0 0
        %2377 = vmatpush2.bf16.msra.mxu0 0
        %2378 = vmatprep.subr.bf16.mxu0 0
        %2379 = vmatpush2.bf16.msra.mxu0 0
        %2380 = vmatprep.subr.bf16.mxu0 0
        %2381 = vmatpush2.bf16.msra.mxu0 0
        %2382 = vmatprep.mubr.bf16.mxu0 0
        %2383 = vmatmul.mubr.bf16.gmra.mxu0 %v1285
        %v2384 = vpop.f32.mrf.mxu0
        %v2385 = vadd.f32 %v2336, %v2384
        %v2386 = vpop.f32.mrf.mxu0
        %v2387 = vpop.f32.mrf.mxu0
        %v2388 = vpop.f32.mrf.mxu0
        %2389 = vdwg.mxu0
        %s2390 = scalar_lea.vmem %s17, 48
        %v2391 = vld [vmem:[%s2390] sm:$0xf]
        %v2392 = vld [vmem:[%s2390 + $0x4] sm:$0xf]
        %v2393 = vld [vmem:[%s2390 + $0x8] sm:$0xf]
        %v2394 = vld [vmem:[%s2390 + $0xc] sm:$0xf]
        %s2395 = scalar_lea.vmem %s19, 3
        %v2396 = vld [vmem:[%s2395] sm:$0x1]
        %v2398 = vlaneseq
        %v2399 = vshrl.u32 %v2398, 7
        %v2400 = vsub.s32 0, %v2399
        %v2401 = vrot.slane %v2396, %v2400
        %v2407 = vunpack.c.l.b16 %v2391
        %v2408 = vunpack.c.l.b16 %v2392
        %v2409 = vunpack.c.l.b16 %v2393
        %v2410 = vunpack.c.l.b16 %v2394
        %v2411 = vpack.c.b16 %v2408, %v2407
        %v2412 = vpack.c.b16 %v2410, %v2409
        %2415 = vmatprep.subr.bf16.mxu0 0
        %2416 = vmatpush1.bf16.msra.mxu0 0
        %2417 = vmatprep.subr.bf16.mxu0 0
        %2418 = vmatpush1.bf16.msra.mxu0 0
        %2419 = vmatprep.subr.bf16.mxu0 0
        %2420 = vmatpush1.bf16.msra.mxu0 0
        %2421 = vmatprep.subr.bf16.mxu0 0
        %2422 = vmatpush1.bf16.msra.mxu0 0
        %2423 = vmatprep.subr.bf16.mxu0 0
        %2424 = vmatpush1.bf16.msra.mxu0 0
        %2425 = vmatprep.subr.bf16.mxu0 0
        %2426 = vmatpush1.bf16.msra.mxu0 0
        %2427 = vmatprep.subr.bf16.mxu0 0
        %2428 = vmatpush1.bf16.msra.mxu0 %v2412
        %2429 = vmatprep.subr.bf16.mxu0 0
        %2430 = vmatpush1.bf16.msra.mxu0 %v2411
        %2431 = vmatprep.subr.bf16.mxu0 0
        %2432 = vmatpush2.bf16.msra.mxu0 0
        %2433 = vmatprep.subr.bf16.mxu0 0
        %2434 = vmatpush2.bf16.msra.mxu0 0
        %2435 = vmatprep.subr.bf16.mxu0 0
        %2436 = vmatpush2.bf16.msra.mxu0 0
        %2437 = vmatprep.subr.bf16.mxu0 0
        %2438 = vmatpush2.bf16.msra.mxu0 0
        %2439 = vmatprep.subr.bf16.mxu0 0
        %2440 = vmatpush2.bf16.msra.mxu0 0
        %2441 = vmatprep.subr.bf16.mxu0 0
        %2442 = vmatpush2.bf16.msra.mxu0 0
        %2443 = vmatprep.subr.bf16.mxu0 0
        %2444 = vmatpush2.bf16.msra.mxu0 0
        %2445 = vmatprep.subr.bf16.mxu0 0
        %2446 = vmatpush2.bf16.msra.mxu0 0
        %2447 = vmatprep.mubr.bf16.mxu0 0
        %2448 = vmatmul.mubr.bf16.gmra.mxu0 %v1285
        %v2449 = vpop.f32.mrf.mxu0
        %v2450 = vadd.f32 %v2401, %v2449
        %v2451 = vpop.f32.mrf.mxu0
        %v2452 = vpop.f32.mrf.mxu0
        %v2453 = vpop.f32.mrf.mxu0
        %2454 = vdwg.mxu0
        %s2455 = scalar_lea.vmem %s21, 48
        %v2456 = vld [vmem:[%s2455] sm:$0xf]
        %v2457 = vld [vmem:[%s2455 + $0x4] sm:$0xf]
        %v2458 = vld [vmem:[%s2455 + $0x8] sm:$0xf]
        %v2459 = vld [vmem:[%s2455 + $0xc] sm:$0xf]
        %s2460 = scalar_lea.vmem %s23, 3
        %v2461 = vld [vmem:[%s2460] sm:$0x1]
        %v2463 = vlaneseq
        %v2464 = vshrl.u32 %v2463, 7
        %v2465 = vsub.s32 0, %v2464
        %v2466 = vrot.slane %v2461, %v2465
        %v2472 = vunpack.c.l.b16 %v2456
        %v2473 = vunpack.c.l.b16 %v2457
        %v2474 = vunpack.c.l.b16 %v2458
        %v2475 = vunpack.c.l.b16 %v2459
        %v2476 = vpack.c.b16 %v2473, %v2472
        %v2477 = vpack.c.b16 %v2475, %v2474
        %2480 = vmatprep.subr.bf16.mxu0 0
        %2481 = vmatpush1.bf16.msra.mxu0 0
        %2482 = vmatprep.subr.bf16.mxu0 0
        %2483 = vmatpush1.bf16.msra.mxu0 0
        %2484 = vmatprep.subr.bf16.mxu0 0
        %2485 = vmatpush1.bf16.msra.mxu0 0
        %2486 = vmatprep.subr.bf16.mxu0 0
        %2487 = vmatpush1.bf16.msra.mxu0 0
        %2488 = vmatprep.subr.bf16.mxu0 0
        %2489 = vmatpush1.bf16.msra.mxu0 0
        %2490 = vmatprep.subr.bf16.mxu0 0
        %2491 = vmatpush1.bf16.msra.mxu0 0
        %2492 = vmatprep.subr.bf16.mxu0 0
        %2493 = vmatpush1.bf16.msra.mxu0 %v2477
        %2494 = vmatprep.subr.bf16.mxu0 0
        %2495 = vmatpush1.bf16.msra.mxu0 %v2476
        %2496 = vmatprep.subr.bf16.mxu0 0
        %2497 = vmatpush2.bf16.msra.mxu0 0
        %2498 = vmatprep.subr.bf16.mxu0 0
        %2499 = vmatpush2.bf16.msra.mxu0 0
        %2500 = vmatprep.subr.bf16.mxu0 0
        %2501 = vmatpush2.bf16.msra.mxu0 0
        %2502 = vmatprep.subr.bf16.mxu0 0
        %2503 = vmatpush2.bf16.msra.mxu0 0
        %2504 = vmatprep.subr.bf16.mxu0 0
        %2505 = vmatpush2.bf16.msra.mxu0 0
        %2506 = vmatprep.subr.bf16.mxu0 0
        %2507 = vmatpush2.bf16.msra.mxu0 0
        %2508 = vmatprep.subr.bf16.mxu0 0
        %2509 = vmatpush2.bf16.msra.mxu0 0
        %2510 = vmatprep.subr.bf16.mxu0 0
        %2511 = vmatpush2.bf16.msra.mxu0 0
        %2512 = vmatprep.mubr.bf16.mxu0 0
        %2513 = vmatmul.mubr.bf16.gmra.mxu0 %v1285
        %v2514 = vpop.f32.mrf.mxu0
        %v2515 = vadd.f32 %v2466, %v2514
        %v2516 = vpop.f32.mrf.mxu0
        %v2517 = vpop.f32.mrf.mxu0
        %v2518 = vpop.f32.mrf.mxu0
        %2519 = vdwg.mxu0
        %v2520 = vmul.f32 %v2385, 0.35355338
        %v2521 = vpack.c.bf16 %v2520, %v2520
        %v2522 = vpack.c.bf16 %v2450, %v2450
        %v2524 = vsel %vm1456, %v2521, 0
        %v2527 = vsel %vm1456, %v2522, 0
        %2529 = vmatprep.subr.bf16.mxu0 0
        %2530 = vmatpush1.bf16.xpose.msra.mxu0 0
        %2531 = vmatprep.subr.bf16.mxu0 0
        %2532 = vmatpush1.bf16.xpose.msra.mxu0 0
        %2533 = vmatprep.subr.bf16.mxu0 0
        %2534 = vmatpush1.bf16.xpose.msra.mxu0 0
        %2535 = vmatprep.subr.bf16.mxu0 0
        %2536 = vmatpush1.bf16.xpose.msra.mxu0 0
        %2537 = vmatprep.subr.bf16.mxu0 0
        %2538 = vmatpush1.bf16.xpose.msra.mxu0 0
        %2539 = vmatprep.subr.bf16.mxu0 0
        %2540 = vmatpush1.bf16.xpose.msra.mxu0 0
        %2541 = vmatprep.subr.bf16.mxu0 0
        %2542 = vmatpush1.bf16.xpose.msra.mxu0 0
        %2543 = vmatprep.subr.bf16.mxu0 0
        %2544 = vmatpush1.bf16.xpose.msra.mxu0 %v2527
        %2545 = vmatprep.subr.bf16.mxu0 0
        %2546 = vmatpush2.bf16.xpose.msra.mxu0 0
        %2547 = vmatprep.subr.bf16.mxu0 0
        %2548 = vmatpush2.bf16.xpose.msra.mxu0 0
        %2549 = vmatprep.subr.bf16.mxu0 0
        %2550 = vmatpush2.bf16.xpose.msra.mxu0 0
        %2551 = vmatprep.subr.bf16.mxu0 0
        %2552 = vmatpush2.bf16.xpose.msra.mxu0 0
        %2553 = vmatprep.subr.bf16.mxu0 0
        %2554 = vmatpush2.bf16.xpose.msra.mxu0 0
        %2555 = vmatprep.subr.bf16.mxu0 0
        %2556 = vmatpush2.bf16.xpose.msra.mxu0 0
        %2557 = vmatprep.subr.bf16.mxu0 0
        %2558 = vmatpush2.bf16.xpose.msra.mxu0 0
        %2559 = vmatprep.subr.bf16.mxu0 0
        %2560 = vmatpush2.bf16.xpose.msra.mxu0 0
        %2561 = vmatprep.mubr.bf16.mxu0 0
        %2562 = vmatmul.mubr.bf16.gmra.mxu0 %v2524
        %v2563 = vpop.f32.mrf.mxu0
        %v2564 = vadd.f32 0.0, %v2563
        %v2565 = vpop.f32.mrf.mxu0
        %v2566 = vpop.f32.mrf.mxu0
        %v2567 = vpop.f32.mrf.mxu0
        %2568 = vdwg.mxu0
        %v2569 = vsel %vm1508, -3.4028235e+38, %v2564
        %v2570 = vsel %vm1456, %v2569, -inf
        %2571 = vmax.xlane.f32.xlu0 %v2570
        %v2572 = vpop.xlane.xlu0 %2571
        %v2573 = vsub.f32 %v2569, %v2572
        %v2574 = vmul.f32 %v2573, 1.442695
        %v2575 = vpow.pop %v2574
        %v2576 = vsel %vm1456, %v2575, 0.0
        %2577 = vadd.xlane.f32.xlu0 %v2576
        %v2578 = vpop.xlane.xlu0 %2577
        %v2579 = vrcp.pop %v2578
        %v2580 = vmul.f32 %v2575, %v2579
        %v2581 = vpack.c.bf16 %v2580, %v2580
        %v2582 = vpack.c.bf16 %v2515, %v2515
        %v2584 = vsel %vm1456, %v2581, 0
        %v2587 = vsel %vm1526, %v2582, 0
        %2589 = vmatprep.subr.bf16.mxu0 0
        %2590 = vmatpush1.bf16.msra.mxu0 0
        %2591 = vmatprep.subr.bf16.mxu0 0
        %2592 = vmatpush1.bf16.msra.mxu0 0
        %2593 = vmatprep.subr.bf16.mxu0 0
        %2594 = vmatpush1.bf16.msra.mxu0 0
        %2595 = vmatprep.subr.bf16.mxu0 0
        %2596 = vmatpush1.bf16.msra.mxu0 0
        %2597 = vmatprep.subr.bf16.mxu0 0
        %2598 = vmatpush1.bf16.msra.mxu0 0
        %2599 = vmatprep.subr.bf16.mxu0 0
        %2600 = vmatpush1.bf16.msra.mxu0 0
        %2601 = vmatprep.subr.bf16.mxu0 0
        %2602 = vmatpush1.bf16.msra.mxu0 0
        %2603 = vmatprep.subr.bf16.mxu0 0
        %2604 = vmatpush1.bf16.msra.mxu0 %v2587
        %2605 = vmatprep.subr.bf16.mxu0 0
        %2606 = vmatpush2.bf16.msra.mxu0 0
        %2607 = vmatprep.subr.bf16.mxu0 0
        %2608 = vmatpush2.bf16.msra.mxu0 0
        %2609 = vmatprep.subr.bf16.mxu0 0
        %2610 = vmatpush2.bf16.msra.mxu0 0
        %2611 = vmatprep.subr.bf16.mxu0 0
        %2612 = vmatpush2.bf16.msra.mxu0 0
        %2613 = vmatprep.subr.bf16.mxu0 0
        %2614 = vmatpush2.bf16.msra.mxu0 0
        %2615 = vmatprep.subr.bf16.mxu0 0
        %2616 = vmatpush2.bf16.msra.mxu0 0
        %2617 = vmatprep.subr.bf16.mxu0 0
        %2618 = vmatpush2.bf16.msra.mxu0 0
        %2619 = vmatprep.subr.bf16.mxu0 0
        %2620 = vmatpush2.bf16.msra.mxu0 0
        %2621 = vmatprep.mubr.bf16.mxu0 0
        %2622 = vmatmul.mubr.bf16.gmra.mxu0 %v2584
        %v2623 = vpop.f32.mrf.mxu0
        %v2624 = vadd.f32 0.0, %v2623
        %v2625 = vpop.f32.mrf.mxu0
        %v2626 = vpop.f32.mrf.mxu0
        %v2627 = vpop.f32.mrf.mxu0
        %2628 = vdwg.mxu0
        %v2629 = vpack.c.bf16 %v2624, %v2624
        %s2630 = scalar_lea.vmem %s25, 12
        %v2631 = vld [vmem:[%s2630] sm:$0xf]
        %v2633 = vsel %vm1456, %v2629, 0
        %v2636 = vsel %vm1526, %v2631, 0
        %2638 = vmatprep.subr.bf16.mxu0 0
        %2639 = vmatpush1.bf16.msra.mxu0 0
        %2640 = vmatprep.subr.bf16.mxu0 0
        %2641 = vmatpush1.bf16.msra.mxu0 0
        %2642 = vmatprep.subr.bf16.mxu0 0
        %2643 = vmatpush1.bf16.msra.mxu0 0
        %2644 = vmatprep.subr.bf16.mxu0 0
        %2645 = vmatpush1.bf16.msra.mxu0 0
        %2646 = vmatprep.subr.bf16.mxu0 0
        %2647 = vmatpush1.bf16.msra.mxu0 0
        %2648 = vmatprep.subr.bf16.mxu0 0
        %2649 = vmatpush1.bf16.msra.mxu0 0
        %2650 = vmatprep.subr.bf16.mxu0 0
        %2651 = vmatpush1.bf16.msra.mxu0 0
        %2652 = vmatprep.subr.bf16.mxu0 0
        %2653 = vmatpush1.bf16.msra.mxu0 %v2636
        %2654 = vmatprep.subr.bf16.mxu0 0
        %2655 = vmatpush2.bf16.msra.mxu0 0
        %2656 = vmatprep.subr.bf16.mxu0 0
        %2657 = vmatpush2.bf16.msra.mxu0 0
        %2658 = vmatprep.subr.bf16.mxu0 0
        %2659 = vmatpush2.bf16.msra.mxu0 0
        %2660 = vmatprep.subr.bf16.mxu0 0
        %2661 = vmatpush2.bf16.msra.mxu0 0
        %2662 = vmatprep.subr.bf16.mxu0 0
        %2663 = vmatpush2.bf16.msra.mxu0 0
        %2664 = vmatprep.subr.bf16.mxu0 0
        %2665 = vmatpush2.bf16.msra.mxu0 0
        %2666 = vmatprep.subr.bf16.mxu0 0
        %2667 = vmatpush2.bf16.msra.mxu0 0
        %2668 = vmatprep.subr.bf16.mxu0 0
        %2669 = vmatpush2.bf16.msra.mxu0 0
        %2670 = vmatprep.mubr.bf16.mxu0 0
        %2671 = vmatmul.mubr.bf16.gmra.mxu0 %v2633
        %v2672 = vpop.f32.mrf.mxu0
        %v2673 = vadd.f32 0.0, %v2672
        %v2674 = vpop.f32.mrf.mxu0
        %v2675 = vpop.f32.mrf.mxu0
        %v2676 = vpop.f32.mrf.mxu0
        %2677 = vdwg.mxu0
        %v2678 = vadd.f32 %v2324, %v2673
        %v2679 = vld [vmem:[%s27] sm:$0x1]
        %v2681 = vlaneseq
        %v2682 = vshrl.u32 %v2681, 7
        %v2683 = vsub.s32 0, %v2682
        %v2684 = vrot.slane %v2679, %v2683
        %v2686 = vadd.f32 %v2678, %v2684
        %v2687 = vadd.f32 %v1257, %v2686
        %v2688 = vld [vmem:[%s29] sm:$0x1]
        %v2689 = vld [vmem:[%s31] sm:$0x1]
        %v2690 = vsel %vm1229, %v2687, 0.0
        %2691 = vadd.xlane.f32.xlu0 %v2690
        %v2692 = vpop.xlane.xlu0 %2691
        %v2693 = vmul.f32 %v2692, %v1233
        %v2694 = vsub.f32 %v2687, %v2693
        %v2695 = vmul.f32 %v2694, %v2694
        %v2696 = vsel %vm1229, %v2695, 0.0
        %2697 = vadd.xlane.f32.xlu0 %v2696
        %v2698 = vpop.xlane.xlu0 %2697
        %v2699 = vmul.f32 %v2698, %v1233
        %v2700 = vadd.f32 %v2699, 1e-12
        %v2701 = vrsqrt.pop %v2700
        %v2702 = vmul.f32 %v2694, %v2701
        %v2704 = vlaneseq
        %v2705 = vshrl.u32 %v2704, 7
        %v2706 = vsub.s32 0, %v2705
        %v2707 = vrot.slane %v2688, %v2706
        %v2709 = vmul.f32 %v2702, %v2707
        %v2711 = vlaneseq
        %v2712 = vshrl.u32 %v2711, 7
        %v2713 = vsub.s32 0, %v2712
        %v2714 = vrot.slane %v2689, %v2713
        %v2716 = vadd.f32 %v2709, %v2714
        %v2717 = vld [vmem:[%s33] sm:$0xf]
        %v2718 = vld [vmem:[%s33 + $0x4] sm:$0xf]
        %v2719 = vld [vmem:[%s33 + $0x8] sm:$0xf]
        %v2720 = vld [vmem:[%s33 + $0xc] sm:$0xf]
        %v2721 = vld [vmem:[%s35] sm:$0x1]
        %v2722 = vpack.c.bf16 %v2716, %v2716
        %v2724 = vlaneseq
        %v2725 = vshrl.u32 %v2724, 7
        %v2726 = vsub.s32 0, %v2725
        %v2727 = vrot.slane %v2721, %v2726
        %v2733 = vunpack.c.l.b16 %v2717
        %v2734 = vunpack.c.l.b16 %v2718
        %v2735 = vunpack.c.l.b16 %v2719
        %v2736 = vunpack.c.l.b16 %v2720
        %v2737 = vpack.c.b16 %v2734, %v2733
        %v2738 = vpack.c.b16 %v2736, %v2735
        %v2742 = vsel %vm1229, %v2722, 0
        %2744 = vmatprep.subr.bf16.mxu0 0
        %2745 = vmatpush1.bf16.msra.mxu0 0
        %2746 = vmatprep.subr.bf16.mxu0 0
        %2747 = vmatpush1.bf16.msra.mxu0 0
        %2748 = vmatprep.subr.bf16.mxu0 0
        %2749 = vmatpush1.bf16.msra.mxu0 0
        %2750 = vmatprep.subr.bf16.mxu0 0
        %2751 = vmatpush1.bf16.msra.mxu0 0
        %2752 = vmatprep.subr.bf16.mxu0 0
        %2753 = vmatpush1.bf16.msra.mxu0 0
        %2754 = vmatprep.subr.bf16.mxu0 0
        %2755 = vmatpush1.bf16.msra.mxu0 0
        %2756 = vmatprep.subr.bf16.mxu0 0
        %2757 = vmatpush1.bf16.msra.mxu0 %v2738
        %2758 = vmatprep.subr.bf16.mxu0 0
        %2759 = vmatpush1.bf16.msra.mxu0 %v2737
        %2760 = vmatprep.subr.bf16.mxu0 0
        %2761 = vmatpush2.bf16.msra.mxu0 0
        %2762 = vmatprep.subr.bf16.mxu0 0
        %2763 = vmatpush2.bf16.msra.mxu0 0
        %2764 = vmatprep.subr.bf16.mxu0 0
        %2765 = vmatpush2.bf16.msra.mxu0 0
        %2766 = vmatprep.subr.bf16.mxu0 0
        %2767 = vmatpush2.bf16.msra.mxu0 0
        %2768 = vmatprep.subr.bf16.mxu0 0
        %2769 = vmatpush2.bf16.msra.mxu0 0
        %2770 = vmatprep.subr.bf16.mxu0 0
        %2771 = vmatpush2.bf16.msra.mxu0 0
        %2772 = vmatprep.subr.bf16.mxu0 0
        %2773 = vmatpush2.bf16.msra.mxu0 0
        %2774 = vmatprep.subr.bf16.mxu0 0
        %2775 = vmatpush2.bf16.msra.mxu0 0
        %2776 = vmatprep.mubr.bf16.mxu0 0
        %2777 = vmatmul.mubr.bf16.gmra.mxu0 %v2742
        %v2778 = vpop.f32.mrf.mxu0
        %v2779 = vadd.f32 %v2727, %v2778
        %v2780 = vpop.f32.mrf.mxu0
        %v2781 = vpop.f32.mrf.mxu0
        %v2782 = vpop.f32.mrf.mxu0
        %2783 = vdwg.mxu0
        %v2784 = vmul.f32 %v2779, 0.5
        %v2785 = vmul.f32 %v2779, 0.70710677
        %v2786 = verf.f32.pop %v2785
        %v2787 = vadd.f32 %v2786, 1.0
        %v2788 = vmul.f32 %v2784, %v2787
        %v2789 = vld [vmem:[%s37] sm:$0xf]
        %v2790 = vld [vmem:[%s37 + $0x4] sm:$0xf]
        %v2791 = vld [vmem:[%s37 + $0x8] sm:$0xf]
        %v2792 = vld [vmem:[%s37 + $0xc] sm:$0xf]
        %v2793 = vld [vmem:[%s37 + $0x10] sm:$0xf]
        %v2794 = vld [vmem:[%s37 + $0x14] sm:$0xf]
        %v2795 = vld [vmem:[%s37 + $0x18] sm:$0xf]
        %v2796 = vld [vmem:[%s37 + $0x1c] sm:$0xf]
        %v2797 = vld [vmem:[%s39] sm:$0x1]
        %v2798 = vpack.c.bf16 %v2788, %v2788
        %v2800 = vlaneseq
        %v2801 = vshrl.u32 %v2800, 7
        %v2802 = vsub.s32 0, %v2801
        %v2803 = vrot.slane %v2797, %v2802
        %v2813 = vunpack.c.l.b16 %v2789
        %v2814 = vunpack.c.l.b16 %v2790
        %v2815 = vunpack.c.l.b16 %v2791
        %v2816 = vunpack.c.l.b16 %v2792
        %v2817 = vunpack.c.l.b16 %v2793
        %v2818 = vunpack.c.l.b16 %v2794
        %v2819 = vunpack.c.l.b16 %v2795
        %v2820 = vunpack.c.l.b16 %v2796
        %v2821 = vpack.c.b16 %v2814, %v2813
        %v2822 = vpack.c.b16 %v2816, %v2815
        %v2823 = vpack.c.b16 %v2818, %v2817
        %v2824 = vpack.c.b16 %v2820, %v2819
        %vm2829 = vcmask 523264
        %v2831 = vsel %vm2829, %v2798, 0
        %2833 = vmatprep.subr.bf16.mxu0 0
        %2834 = vmatpush1.bf16.msra.mxu0 0
        %2835 = vmatprep.subr.bf16.mxu0 0
        %2836 = vmatpush1.bf16.msra.mxu0 0
        %2837 = vmatprep.subr.bf16.mxu0 0
        %2838 = vmatpush1.bf16.msra.mxu0 0
        %2839 = vmatprep.subr.bf16.mxu0 0
        %2840 = vmatpush1.bf16.msra.mxu0 0
        %2841 = vmatprep.subr.bf16.mxu0 0
        %2842 = vmatpush1.bf16.msra.mxu0 %v2824
        %2843 = vmatprep.subr.bf16.mxu0 0
        %2844 = vmatpush1.bf16.msra.mxu0 %v2823
        %2845 = vmatprep.subr.bf16.mxu0 0
        %2846 = vmatpush1.bf16.msra.mxu0 %v2822
        %2847 = vmatprep.subr.bf16.mxu0 0
        %2848 = vmatpush1.bf16.msra.mxu0 %v2821
        %2849 = vmatprep.subr.bf16.mxu0 0
        %2850 = vmatpush2.bf16.msra.mxu0 0
        %2851 = vmatprep.subr.bf16.mxu0 0
        %2852 = vmatpush2.bf16.msra.mxu0 0
        %2853 = vmatprep.subr.bf16.mxu0 0
        %2854 = vmatpush2.bf16.msra.mxu0 0
        %2855 = vmatprep.subr.bf16.mxu0 0
        %2856 = vmatpush2.bf16.msra.mxu0 0
        %2857 = vmatprep.subr.bf16.mxu0 0
        %2858 = vmatpush2.bf16.msra.mxu0 0
        %2859 = vmatprep.subr.bf16.mxu0 0
        %2860 = vmatpush2.bf16.msra.mxu0 0
        %2861 = vmatprep.subr.bf16.mxu0 0
        %2862 = vmatpush2.bf16.msra.mxu0 0
        %2863 = vmatprep.subr.bf16.mxu0 0
        %2864 = vmatpush2.bf16.msra.mxu0 0
        %2865 = vmatprep.mubr.bf16.mxu0 0
        %2866 = vmatmul.mubr.bf16.gmra.mxu0 %v2831
        %v2867 = vpop.f32.mrf.mxu0
        %v2868 = vadd.f32 %v2803, %v2867
        %v2869 = vpop.f32.mrf.mxu0
        %v2870 = vpop.f32.mrf.mxu0
        %v2871 = vpop.f32.mrf.mxu0
        %2872 = vdwg.mxu0
        %v2873 = vadd.f32 %v2716, %v2868
        %v2874 = vld [vmem:[%s41] sm:$0x1]
        %v2875 = vld [vmem:[%s43] sm:$0x1]
        %v2876 = vsel %vm1229, %v2873, 0.0
        %2877 = vadd.xlane.f32.xlu0 %v2876
        %v2878 = vpop.xlane.xlu0 %2877
        %v2879 = vmul.f32 %v2878, %v1233
        %v2880 = vsub.f32 %v2873, %v2879
        %v2881 = vmul.f32 %v2880, %v2880
        %v2882 = vsel %vm1229, %v2881, 0.0
        %2883 = vadd.xlane.f32.xlu0 %v2882
        %v2884 = vpop.xlane.xlu0 %2883
        %v2885 = vmul.f32 %v2884, %v1233
        %v2886 = vadd.f32 %v2885, 1e-12
        %v2887 = vrsqrt.pop %v2886
        %v2888 = vmul.f32 %v2880, %v2887
        %v2890 = vlaneseq
        %v2891 = vshrl.u32 %v2890, 7
        %v2892 = vsub.s32 0, %v2891
        %v2893 = vrot.slane %v2874, %v2892
        %v2895 = vmul.f32 %v2888, %v2893
        %v2897 = vlaneseq
        %v2898 = vshrl.u32 %v2897, 7
        %v2899 = vsub.s32 0, %v2898
        %v2900 = vrot.slane %v2875, %v2899
        %v2902 = vadd.f32 %v2895, %v2900
        %v2903 = vpack.c.bf16 %v2902, %v2902
        %v2904 = vld [vmem:[%s45] sm:$0xf]
        %v2905 = vld [vmem:[%s45 + $0x4] sm:$0xf]
        %v2906 = vld [vmem:[%s45 + $0x8] sm:$0xf]
        %v2907 = vld [vmem:[%s45 + $0xc] sm:$0xf]
        %v2908 = vld [vmem:[%s47] sm:$0x1]
        %v2910 = vlaneseq
        %v2911 = vshrl.u32 %v2910, 7
        %v2912 = vsub.s32 0, %v2911
        %v2913 = vrot.slane %v2908, %v2912
        %v2919 = vunpack.c.l.b16 %v2904
        %v2920 = vunpack.c.l.b16 %v2905
        %v2921 = vunpack.c.l.b16 %v2906
        %v2922 = vunpack.c.l.b16 %v2907
        %v2923 = vpack.c.b16 %v2920, %v2919
        %v2924 = vpack.c.b16 %v2922, %v2921
        %v2928 = vsel %vm1229, %v2903, 0
        %2930 = vmatprep.subr.bf16.mxu0 0
        %2931 = vmatpush1.bf16.msra.mxu0 0
        %2932 = vmatprep.subr.bf16.mxu0 0
        %2933 = vmatpush1.bf16.msra.mxu0 0
        %2934 = vmatprep.subr.bf16.mxu0 0
        %2935 = vmatpush1.bf16.msra.mxu0 0
        %2936 = vmatprep.subr.bf16.mxu0 0
        %2937 = vmatpush1.bf16.msra.mxu0 0
        %2938 = vmatprep.subr.bf16.mxu0 0
        %2939 = vmatpush1.bf16.msra.mxu0 0
        %2940 = vmatprep.subr.bf16.mxu0 0
        %2941 = vmatpush1.bf16.msra.mxu0 0
        %2942 = vmatprep.subr.bf16.mxu0 0
        %2943 = vmatpush1.bf16.msra.mxu0 %v2924
        %2944 = vmatprep.subr.bf16.mxu0 0
        %2945 = vmatpush1.bf16.msra.mxu0 %v2923
        %2946 = vmatprep.subr.bf16.mxu0 0
        %2947 = vmatpush2.bf16.msra.mxu0 0
        %2948 = vmatprep.subr.bf16.mxu0 0
        %2949 = vmatpush2.bf16.msra.mxu0 0
        %2950 = vmatprep.subr.bf16.mxu0 0
        %2951 = vmatpush2.bf16.msra.mxu0 0
        %2952 = vmatprep.subr.bf16.mxu0 0
        %2953 = vmatpush2.bf16.msra.mxu0 0
        %2954 = vmatprep.subr.bf16.mxu0 0
        %2955 = vmatpush2.bf16.msra.mxu0 0
        %2956 = vmatprep.subr.bf16.mxu0 0
        %2957 = vmatpush2.bf16.msra.mxu0 0
        %2958 = vmatprep.subr.bf16.mxu0 0
        %2959 = vmatpush2.bf16.msra.mxu0 0
        %2960 = vmatprep.subr.bf16.mxu0 0
        %2961 = vmatpush2.bf16.msra.mxu0 0
        %2962 = vmatprep.mubr.bf16.mxu0 0
        %2963 = vmatmul.mubr.bf16.gmra.mxu0 %v2928
        %v2964 = vpop.f32.mrf.mxu0
        %v2965 = vadd.f32 %v2913, %v2964
        %v2966 = vpop.f32.mrf.mxu0
        %v2967 = vpop.f32.mrf.mxu0
        %v2968 = vpop.f32.mrf.mxu0
        %2969 = vdwg.mxu0
        %v2970 = vld [vmem:[%s49] sm:$0xf]
        %v2971 = vld [vmem:[%s49 + $0x4] sm:$0xf]
        %v2972 = vld [vmem:[%s49 + $0x8] sm:$0xf]
        %v2973 = vld [vmem:[%s49 + $0xc] sm:$0xf]
        %v2974 = vld [vmem:[%s51] sm:$0x1]
        %v2976 = vlaneseq
        %v2977 = vshrl.u32 %v2976, 7
        %v2978 = vsub.s32 0, %v2977
        %v2979 = vrot.slane %v2974, %v2978
        %v2985 = vunpack.c.l.b16 %v2970
        %v2986 = vunpack.c.l.b16 %v2971
        %v2987 = vunpack.c.l.b16 %v2972
        %v2988 = vunpack.c.l.b16 %v2973
        %v2989 = vpack.c.b16 %v2986, %v2985
        %v2990 = vpack.c.b16 %v2988, %v2987
        %2993 = vmatprep.subr.bf16.mxu0 0
        %2994 = vmatpush1.bf16.msra.mxu0 0
        %2995 = vmatprep.subr.bf16.mxu0 0
        %2996 = vmatpush1.bf16.msra.mxu0 0
        %2997 = vmatprep.subr.bf16.mxu0 0
        %2998 = vmatpush1.bf16.msra.mxu0 0
        %2999 = vmatprep.subr.bf16.mxu0 0
        %3000 = vmatpush1.bf16.msra.mxu0 0
        %3001 = vmatprep.subr.bf16.mxu0 0
        %3002 = vmatpush1.bf16.msra.mxu0 0
        %3003 = vmatprep.subr.bf16.mxu0 0
        %3004 = vmatpush1.bf16.msra.mxu0 0
        %3005 = vmatprep.subr.bf16.mxu0 0
        %3006 = vmatpush1.bf16.msra.mxu0 %v2990
        %3007 = vmatprep.subr.bf16.mxu0 0
        %3008 = vmatpush1.bf16.msra.mxu0 %v2989
        %3009 = vmatprep.subr.bf16.mxu0 0
        %3010 = vmatpush2.bf16.msra.mxu0 0
        %3011 = vmatprep.subr.bf16.mxu0 0
        %3012 = vmatpush2.bf16.msra.mxu0 0
        %3013 = vmatprep.subr.bf16.mxu0 0
        %3014 = vmatpush2.bf16.msra.mxu0 0
        %3015 = vmatprep.subr.bf16.mxu0 0
        %3016 = vmatpush2.bf16.msra.mxu0 0
        %3017 = vmatprep.subr.bf16.mxu0 0
        %3018 = vmatpush2.bf16.msra.mxu0 0
        %3019 = vmatprep.subr.bf16.mxu0 0
        %3020 = vmatpush2.bf16.msra.mxu0 0
        %3021 = vmatprep.subr.bf16.mxu0 0
        %3022 = vmatpush2.bf16.msra.mxu0 0
        %3023 = vmatprep.subr.bf16.mxu0 0
        %3024 = vmatpush2.bf16.msra.mxu0 0
        %3025 = vmatprep.mubr.bf16.mxu0 0
        %3026 = vmatmul.mubr.bf16.gmra.mxu0 %v2928
        %v3027 = vpop.f32.mrf.mxu0
        %v3028 = vadd.f32 %v2979, %v3027
        %v3029 = vpop.f32.mrf.mxu0
        %v3030 = vpop.f32.mrf.mxu0
        %v3031 = vpop.f32.mrf.mxu0
        %3032 = vdwg.mxu0
        %v3033 = vld [vmem:[%s53] sm:$0xf]
        %v3034 = vld [vmem:[%s53 + $0x4] sm:$0xf]
        %v3035 = vld [vmem:[%s53 + $0x8] sm:$0xf]
        %v3036 = vld [vmem:[%s53 + $0xc] sm:$0xf]
        %v3037 = vld [vmem:[%s55] sm:$0x1]
        %v3039 = vlaneseq
        %v3040 = vshrl.u32 %v3039, 7
        %v3041 = vsub.s32 0, %v3040
        %v3042 = vrot.slane %v3037, %v3041
        %v3048 = vunpack.c.l.b16 %v3033
        %v3049 = vunpack.c.l.b16 %v3034
        %v3050 = vunpack.c.l.b16 %v3035
        %v3051 = vunpack.c.l.b16 %v3036
        %v3052 = vpack.c.b16 %v3049, %v3048
        %v3053 = vpack.c.b16 %v3051, %v3050
        %3056 = vmatprep.subr.bf16.mxu0 0
        %3057 = vmatpush1.bf16.msra.mxu0 0
        %3058 = vmatprep.subr.bf16.mxu0 0
        %3059 = vmatpush1.bf16.msra.mxu0 0
        %3060 = vmatprep.subr.bf16.mxu0 0
        %3061 = vmatpush1.bf16.msra.mxu0 0
        %3062 = vmatprep.subr.bf16.mxu0 0
        %3063 = vmatpush1.bf16.msra.mxu0 0
        %3064 = vmatprep.subr.bf16.mxu0 0
        %3065 = vmatpush1.bf16.msra.mxu0 0
        %3066 = vmatprep.subr.bf16.mxu0 0
        %3067 = vmatpush1.bf16.msra.mxu0 0
        %3068 = vmatprep.subr.bf16.mxu0 0
        %3069 = vmatpush1.bf16.msra.mxu0 %v3053
        %3070 = vmatprep.subr.bf16.mxu0 0
        %3071 = vmatpush1.bf16.msra.mxu0 %v3052
        %3072 = vmatprep.subr.bf16.mxu0 0
        %3073 = vmatpush2.bf16.msra.mxu0 0
        %3074 = vmatprep.subr.bf16.mxu0 0
        %3075 = vmatpush2.bf16.msra.mxu0 0
        %3076 = vmatprep.subr.bf16.mxu0 0
        %3077 = vmatpush2.bf16.msra.mxu0 0
        %3078 = vmatprep.subr.bf16.mxu0 0
        %3079 = vmatpush2.bf16.msra.mxu0 0
        %3080 = vmatprep.subr.bf16.mxu0 0
        %3081 = vmatpush2.bf16.msra.mxu0 0
        %3082 = vmatprep.subr.bf16.mxu0 0
        %3083 = vmatpush2.bf16.msra.mxu0 0
        %3084 = vmatprep.subr.bf16.mxu0 0
        %3085 = vmatpush2.bf16.msra.mxu0 0
        %3086 = vmatprep.subr.bf16.mxu0 0
        %3087 = vmatpush2.bf16.msra.mxu0 0
        %3088 = vmatprep.mubr.bf16.mxu0 0
        %3089 = vmatmul.mubr.bf16.gmra.mxu0 %v2928
        %v3090 = vpop.f32.mrf.mxu0
        %v3091 = vadd.f32 %v3042, %v3090
        %v3092 = vpop.f32.mrf.mxu0
        %v3093 = vpop.f32.mrf.mxu0
        %v3094 = vpop.f32.mrf.mxu0
        %3095 = vdwg.mxu0
        %v3096 = vmul.f32 %v2965, 0.35355338
        %v3097 = vpack.c.bf16 %v3096, %v3096
        %v3098 = vpack.c.bf16 %v3028, %v3028
        %v3100 = vsel %vm1456, %v3097, 0
        %v3103 = vsel %vm1456, %v3098, 0
        %3105 = vmatprep.subr.bf16.mxu0 0
        %3106 = vmatpush1.bf16.xpose.msra.mxu0 0
        %3107 = vmatprep.subr.bf16.mxu0 0
        %3108 = vmatpush1.bf16.xpose.msra.mxu0 0
        %3109 = vmatprep.subr.bf16.mxu0 0
        %3110 = vmatpush1.bf16.xpose.msra.mxu0 0
        %3111 = vmatprep.subr.bf16.mxu0 0
        %3112 = vmatpush1.bf16.xpose.msra.mxu0 0
        %3113 = vmatprep.subr.bf16.mxu0 0
        %3114 = vmatpush1.bf16.xpose.msra.mxu0 0
        %3115 = vmatprep.subr.bf16.mxu0 0
        %3116 = vmatpush1.bf16.xpose.msra.mxu0 0
        %3117 = vmatprep.subr.bf16.mxu0 0
        %3118 = vmatpush1.bf16.xpose.msra.mxu0 0
        %3119 = vmatprep.subr.bf16.mxu0 0
        %3120 = vmatpush1.bf16.xpose.msra.mxu0 %v3103
        %3121 = vmatprep.subr.bf16.mxu0 0
        %3122 = vmatpush2.bf16.xpose.msra.mxu0 0
        %3123 = vmatprep.subr.bf16.mxu0 0
        %3124 = vmatpush2.bf16.xpose.msra.mxu0 0
        %3125 = vmatprep.subr.bf16.mxu0 0
        %3126 = vmatpush2.bf16.xpose.msra.mxu0 0
        %3127 = vmatprep.subr.bf16.mxu0 0
        %3128 = vmatpush2.bf16.xpose.msra.mxu0 0
        %3129 = vmatprep.subr.bf16.mxu0 0
        %3130 = vmatpush2.bf16.xpose.msra.mxu0 0
        %3131 = vmatprep.subr.bf16.mxu0 0
        %3132 = vmatpush2.bf16.xpose.msra.mxu0 0
        %3133 = vmatprep.subr.bf16.mxu0 0
        %3134 = vmatpush2.bf16.xpose.msra.mxu0 0
        %3135 = vmatprep.subr.bf16.mxu0 0
        %3136 = vmatpush2.bf16.xpose.msra.mxu0 0
        %3137 = vmatprep.mubr.bf16.mxu0 0
        %3138 = vmatmul.mubr.bf16.gmra.mxu0 %v3100
        %v3139 = vpop.f32.mrf.mxu0
        %v3140 = vadd.f32 0.0, %v3139
        %v3141 = vpop.f32.mrf.mxu0
        %v3142 = vpop.f32.mrf.mxu0
        %v3143 = vpop.f32.mrf.mxu0
        %3144 = vdwg.mxu0
        %v3145 = vsel %vm1508, -3.4028235e+38, %v3140
        %v3146 = vsel %vm1456, %v3145, -inf
        %3147 = vmax.xlane.f32.xlu0 %v3146
        %v3148 = vpop.xlane.xlu0 %3147
        %v3149 = vsub.f32 %v3145, %v3148
        %v3150 = vmul.f32 %v3149, 1.442695
        %v3151 = vpow.pop %v3150
        %v3152 = vsel %vm1456, %v3151, 0.0
        %3153 = vadd.xlane.f32.xlu0 %v3152
        %v3154 = vpop.xlane.xlu0 %3153
        %v3155 = vrcp.pop %v3154
        %v3156 = vmul.f32 %v3151, %v3155
        %v3157 = vpack.c.bf16 %v3156, %v3156
        %v3158 = vpack.c.bf16 %v3091, %v3091
        %v3160 = vsel %vm1456, %v3157, 0
        %v3163 = vsel %vm1526, %v3158, 0
        %3165 = vmatprep.subr.bf16.mxu0 0
        %3166 = vmatpush1.bf16.msra.mxu0 0
        %3167 = vmatprep.subr.bf16.mxu0 0
        %3168 = vmatpush1.bf16.msra.mxu0 0
        %3169 = vmatprep.subr.bf16.mxu0 0
        %3170 = vmatpush1.bf16.msra.mxu0 0
        %3171 = vmatprep.subr.bf16.mxu0 0
        %3172 = vmatpush1.bf16.msra.mxu0 0
        %3173 = vmatprep.subr.bf16.mxu0 0
        %3174 = vmatpush1.bf16.msra.mxu0 0
        %3175 = vmatprep.subr.bf16.mxu0 0
        %3176 = vmatpush1.bf16.msra.mxu0 0
        %3177 = vmatprep.subr.bf16.mxu0 0
        %3178 = vmatpush1.bf16.msra.mxu0 0
        %3179 = vmatprep.subr.bf16.mxu0 0
        %3180 = vmatpush1.bf16.msra.mxu0 %v3163
        %3181 = vmatprep.subr.bf16.mxu0 0
        %3182 = vmatpush2.bf16.msra.mxu0 0
        %3183 = vmatprep.subr.bf16.mxu0 0
        %3184 = vmatpush2.bf16.msra.mxu0 0
        %3185 = vmatprep.subr.bf16.mxu0 0
        %3186 = vmatpush2.bf16.msra.mxu0 0
        %3187 = vmatprep.subr.bf16.mxu0 0
        %3188 = vmatpush2.bf16.msra.mxu0 0
        %3189 = vmatprep.subr.bf16.mxu0 0
        %3190 = vmatpush2.bf16.msra.mxu0 0
        %3191 = vmatprep.subr.bf16.mxu0 0
        %3192 = vmatpush2.bf16.msra.mxu0 0
        %3193 = vmatprep.subr.bf16.mxu0 0
        %3194 = vmatpush2.bf16.msra.mxu0 0
        %3195 = vmatprep.subr.bf16.mxu0 0
        %3196 = vmatpush2.bf16.msra.mxu0 0
        %3197 = vmatprep.mubr.bf16.mxu0 0
        %3198 = vmatmul.mubr.bf16.gmra.mxu0 %v3160
        %v3199 = vpop.f32.mrf.mxu0
        %v3200 = vadd.f32 0.0, %v3199
        %v3201 = vpop.f32.mrf.mxu0
        %v3202 = vpop.f32.mrf.mxu0
        %v3203 = vpop.f32.mrf.mxu0
        %3204 = vdwg.mxu0
        %v3205 = vpack.c.bf16 %v3200, %v3200
        %v3206 = vld [vmem:[%s57] sm:$0xf]
        %s3207 = scalar_lea.vmem %s45, 16
        %v3208 = vld [vmem:[%s3207] sm:$0xf]
        %v3209 = vld [vmem:[%s3207 + $0x4] sm:$0xf]
        %v3210 = vld [vmem:[%s3207 + $0x8] sm:$0xf]
        %v3211 = vld [vmem:[%s3207 + $0xc] sm:$0xf]
        %s3212 = scalar_lea.vmem %s47, 1
        %v3213 = vld [vmem:[%s3212] sm:$0x1]
        %v3215 = vlaneseq
        %v3216 = vshrl.u32 %v3215, 7
        %v3217 = vsub.s32 0, %v3216
        %v3218 = vrot.slane %v3213, %v3217
        %v3224 = vunpack.c.l.b16 %v3208
        %v3225 = vunpack.c.l.b16 %v3209
        %v3226 = vunpack.c.l.b16 %v3210
        %v3227 = vunpack.c.l.b16 %v3211
        %v3228 = vpack.c.b16 %v3225, %v3224
        %v3229 = vpack.c.b16 %v3227, %v3226
        %3232 = vmatprep.subr.bf16.mxu0 0
        %3233 = vmatpush1.bf16.msra.mxu0 0
        %3234 = vmatprep.subr.bf16.mxu0 0
        %3235 = vmatpush1.bf16.msra.mxu0 0
        %3236 = vmatprep.subr.bf16.mxu0 0
        %3237 = vmatpush1.bf16.msra.mxu0 0
        %3238 = vmatprep.subr.bf16.mxu0 0
        %3239 = vmatpush1.bf16.msra.mxu0 0
        %3240 = vmatprep.subr.bf16.mxu0 0
        %3241 = vmatpush1.bf16.msra.mxu0 0
        %3242 = vmatprep.subr.bf16.mxu0 0
        %3243 = vmatpush1.bf16.msra.mxu0 0
        %3244 = vmatprep.subr.bf16.mxu0 0
        %3245 = vmatpush1.bf16.msra.mxu0 %v3229
        %3246 = vmatprep.subr.bf16.mxu0 0
        %3247 = vmatpush1.bf16.msra.mxu0 %v3228
        %3248 = vmatprep.subr.bf16.mxu0 0
        %3249 = vmatpush2.bf16.msra.mxu0 0
        %3250 = vmatprep.subr.bf16.mxu0 0
        %3251 = vmatpush2.bf16.msra.mxu0 0
        %3252 = vmatprep.subr.bf16.mxu0 0
        %3253 = vmatpush2.bf16.msra.mxu0 0
        %3254 = vmatprep.subr.bf16.mxu0 0
        %3255 = vmatpush2.bf16.msra.mxu0 0
        %3256 = vmatprep.subr.bf16.mxu0 0
        %3257 = vmatpush2.bf16.msra.mxu0 0
        %3258 = vmatprep.subr.bf16.mxu0 0
        %3259 = vmatpush2.bf16.msra.mxu0 0
        %3260 = vmatprep.subr.bf16.mxu0 0
        %3261 = vmatpush2.bf16.msra.mxu0 0
        %3262 = vmatprep.subr.bf16.mxu0 0
        %3263 = vmatpush2.bf16.msra.mxu0 0
        %3264 = vmatprep.mubr.bf16.mxu0 0
        %3265 = vmatmul.mubr.bf16.gmra.mxu0 %v2928
        %v3266 = vpop.f32.mrf.mxu0
        %v3267 = vadd.f32 %v3218, %v3266
        %v3268 = vpop.f32.mrf.mxu0
        %v3269 = vpop.f32.mrf.mxu0
        %v3270 = vpop.f32.mrf.mxu0
        %3271 = vdwg.mxu0
        %s3272 = scalar_lea.vmem %s49, 16
        %v3273 = vld [vmem:[%s3272] sm:$0xf]
        %v3274 = vld [vmem:[%s3272 + $0x4] sm:$0xf]
        %v3275 = vld [vmem:[%s3272 + $0x8] sm:$0xf]
        %v3276 = vld [vmem:[%s3272 + $0xc] sm:$0xf]
        %s3277 = scalar_lea.vmem %s51, 1
        %v3278 = vld [vmem:[%s3277] sm:$0x1]
        %v3280 = vlaneseq
        %v3281 = vshrl.u32 %v3280, 7
        %v3282 = vsub.s32 0, %v3281
        %v3283 = vrot.slane %v3278, %v3282
        %v3289 = vunpack.c.l.b16 %v3273
        %v3290 = vunpack.c.l.b16 %v3274
        %v3291 = vunpack.c.l.b16 %v3275
        %v3292 = vunpack.c.l.b16 %v3276
        %v3293 = vpack.c.b16 %v3290, %v3289
        %v3294 = vpack.c.b16 %v3292, %v3291
        %3297 = vmatprep.subr.bf16.mxu0 0
        %3298 = vmatpush1.bf16.msra.mxu0 0
        %3299 = vmatprep.subr.bf16.mxu0 0
        %3300 = vmatpush1.bf16.msra.mxu0 0
        %3301 = vmatprep.subr.bf16.mxu0 0
        %3302 = vmatpush1.bf16.msra.mxu0 0
        %3303 = vmatprep.subr.bf16.mxu0 0
        %3304 = vmatpush1.bf16.msra.mxu0 0
        %3305 = vmatprep.subr.bf16.mxu0 0
        %3306 = vmatpush1.bf16.msra.mxu0 0
        %3307 = vmatprep.subr.bf16.mxu0 0
        %3308 = vmatpush1.bf16.msra.mxu0 0
        %3309 = vmatprep.subr.bf16.mxu0 0
        %3310 = vmatpush1.bf16.msra.mxu0 %v3294
        %3311 = vmatprep.subr.bf16.mxu0 0
        %3312 = vmatpush1.bf16.msra.mxu0 %v3293
        %3313 = vmatprep.subr.bf16.mxu0 0
        %3314 = vmatpush2.bf16.msra.mxu0 0
        %3315 = vmatprep.subr.bf16.mxu0 0
        %3316 = vmatpush2.bf16.msra.mxu0 0
        %3317 = vmatprep.subr.bf16.mxu0 0
        %3318 = vmatpush2.bf16.msra.mxu0 0
        %3319 = vmatprep.subr.bf16.mxu0 0
        %3320 = vmatpush2.bf16.msra.mxu0 0
        %3321 = vmatprep.subr.bf16.mxu0 0
        %3322 = vmatpush2.bf16.msra.mxu0 0
        %3323 = vmatprep.subr.bf16.mxu0 0
        %3324 = vmatpush2.bf16.msra.mxu0 0
        %3325 = vmatprep.subr.bf16.mxu0 0
        %3326 = vmatpush2.bf16.msra.mxu0 0
        %3327 = vmatprep.subr.bf16.mxu0 0
        %3328 = vmatpush2.bf16.msra.mxu0 0
        %3329 = vmatprep.mubr.bf16.mxu0 0
        %3330 = vmatmul.mubr.bf16.gmra.mxu0 %v2928
        %v3331 = vpop.f32.mrf.mxu0
        %v3332 = vadd.f32 %v3283, %v3331
        %v3333 = vpop.f32.mrf.mxu0
        %v3334 = vpop.f32.mrf.mxu0
        %v3335 = vpop.f32.mrf.mxu0
        %3336 = vdwg.mxu0
        %s3337 = scalar_lea.vmem %s53, 16
        %v3338 = vld [vmem:[%s3337] sm:$0xf]
        %v3339 = vld [vmem:[%s3337 + $0x4] sm:$0xf]
        %v3340 = vld [vmem:[%s3337 + $0x8] sm:$0xf]
        %v3341 = vld [vmem:[%s3337 + $0xc] sm:$0xf]
        %s3342 = scalar_lea.vmem %s55, 1
        %v3343 = vld [vmem:[%s3342] sm:$0x1]
        %v3345 = vlaneseq
        %v3346 = vshrl.u32 %v3345, 7
        %v3347 = vsub.s32 0, %v3346
        %v3348 = vrot.slane %v3343, %v3347
        %v3354 = vunpack.c.l.b16 %v3338
        %v3355 = vunpack.c.l.b16 %v3339
        %v3356 = vunpack.c.l.b16 %v3340
        %v3357 = vunpack.c.l.b16 %v3341
        %v3358 = vpack.c.b16 %v3355, %v3354
        %v3359 = vpack.c.b16 %v3357, %v3356
        %3362 = vmatprep.subr.bf16.mxu0 0
        %3363 = vmatpush1.bf16.msra.mxu0 0
        %3364 = vmatprep.subr.bf16.mxu0 0
        %3365 = vmatpush1.bf16.msra.mxu0 0
        %3366 = vmatprep.subr.bf16.mxu0 0
        %3367 = vmatpush1.bf16.msra.mxu0 0
        %3368 = vmatprep.subr.bf16.mxu0 0
        %3369 = vmatpush1.bf16.msra.mxu0 0
        %3370 = vmatprep.subr.bf16.mxu0 0
        %3371 = vmatpush1.bf16.msra.mxu0 0
        %3372 = vmatprep.subr.bf16.mxu0 0
        %3373 = vmatpush1.bf16.msra.mxu0 0
        %3374 = vmatprep.subr.bf16.mxu0 0
        %3375 = vmatpush1.bf16.msra.mxu0 %v3359
        %3376 = vmatprep.subr.bf16.mxu0 0
        %3377 = vmatpush1.bf16.msra.mxu0 %v3358
        %3378 = vmatprep.subr.bf16.mxu0 0
        %3379 = vmatpush2.bf16.msra.mxu0 0
        %3380 = vmatprep.subr.bf16.mxu0 0
        %3381 = vmatpush2.bf16.msra.mxu0 0
        %3382 = vmatprep.subr.bf16.mxu0 0
        %3383 = vmatpush2.bf16.msra.mxu0 0
        %3384 = vmatprep.subr.bf16.mxu0 0
        %3385 = vmatpush2.bf16.msra.mxu0 0
        %3386 = vmatprep.subr.bf16.mxu0 0
        %3387 = vmatpush2.bf16.msra.mxu0 0
        %3388 = vmatprep.subr.bf16.mxu0 0
        %3389 = vmatpush2.bf16.msra.mxu0 0
        %3390 = vmatprep.subr.bf16.mxu0 0
        %3391 = vmatpush2.bf16.msra.mxu0 0
        %3392 = vmatprep.subr.bf16.mxu0 0
        %3393 = vmatpush2.bf16.msra.mxu0 0
        %3394 = vmatprep.mubr.bf16.mxu0 0
        %3395 = vmatmul.mubr.bf16.gmra.mxu0 %v2928
        %v3396 = vpop.f32.mrf.mxu0
        %v3397 = vadd.f32 %v3348, %v3396
        %v3398 = vpop.f32.mrf.mxu0
        %v3399 = vpop.f32.mrf.mxu0
        %v3400 = vpop.f32.mrf.mxu0
        %3401 = vdwg.mxu0
        %v3402 = vmul.f32 %v3267, 0.35355338
        %v3403 = vpack.c.bf16 %v3402, %v3402
        %v3404 = vpack.c.bf16 %v3332, %v3332
        %v3406 = vsel %vm1456, %v3403, 0
        %v3409 = vsel %vm1456, %v3404, 0
        %3411 = vmatprep.subr.bf16.mxu0 0
        %3412 = vmatpush1.bf16.xpose.msra.mxu0 0
        %3413 = vmatprep.subr.bf16.mxu0 0
        %3414 = vmatpush1.bf16.xpose.msra.mxu0 0
        %3415 = vmatprep.subr.bf16.mxu0 0
        %3416 = vmatpush1.bf16.xpose.msra.mxu0 0
        %3417 = vmatprep.subr.bf16.mxu0 0
        %3418 = vmatpush1.bf16.xpose.msra.mxu0 0
        %3419 = vmatprep.subr.bf16.mxu0 0
        %3420 = vmatpush1.bf16.xpose.msra.mxu0 0
        %3421 = vmatprep.subr.bf16.mxu0 0
        %3422 = vmatpush1.bf16.xpose.msra.mxu0 0
        %3423 = vmatprep.subr.bf16.mxu0 0
        %3424 = vmatpush1.bf16.xpose.msra.mxu0 0
        %3425 = vmatprep.subr.bf16.mxu0 0
        %3426 = vmatpush1.bf16.xpose.msra.mxu0 %v3409
        %3427 = vmatprep.subr.bf16.mxu0 0
        %3428 = vmatpush2.bf16.xpose.msra.mxu0 0
        %3429 = vmatprep.subr.bf16.mxu0 0
        %3430 = vmatpush2.bf16.xpose.msra.mxu0 0
        %3431 = vmatprep.subr.bf16.mxu0 0
        %3432 = vmatpush2.bf16.xpose.msra.mxu0 0
        %3433 = vmatprep.subr.bf16.mxu0 0
        %3434 = vmatpush2.bf16.xpose.msra.mxu0 0
        %3435 = vmatprep.subr.bf16.mxu0 0
        %3436 = vmatpush2.bf16.xpose.msra.mxu0 0
        %3437 = vmatprep.subr.bf16.mxu0 0
        %3438 = vmatpush2.bf16.xpose.msra.mxu0 0
        %3439 = vmatprep.subr.bf16.mxu0 0
        %3440 = vmatpush2.bf16.xpose.msra.mxu0 0
        %3441 = vmatprep.subr.bf16.mxu0 0
        %3442 = vmatpush2.bf16.xpose.msra.mxu0 0
        %3443 = vmatprep.mubr.bf16.mxu0 0
        %3444 = vmatmul.mubr.bf16.gmra.mxu0 %v3406
        %v3445 = vpop.f32.mrf.mxu0
        %v3446 = vadd.f32 0.0, %v3445
        %v3447 = vpop.f32.mrf.mxu0
        %v3448 = vpop.f32.mrf.mxu0
        %v3449 = vpop.f32.mrf.mxu0
        %3450 = vdwg.mxu0
        %v3451 = vsel %vm1508, -3.4028235e+38, %v3446
        %v3452 = vsel %vm1456, %v3451, -inf
        %3453 = vmax.xlane.f32.xlu0 %v3452
        %v3454 = vpop.xlane.xlu0 %3453
        %v3455 = vsub.f32 %v3451, %v3454
        %v3456 = vmul.f32 %v3455, 1.442695
        %v3457 = vpow.pop %v3456
        %v3458 = vsel %vm1456, %v3457, 0.0
        %3459 = vadd.xlane.f32.xlu0 %v3458
        %v3460 = vpop.xlane.xlu0 %3459
        %v3461 = vrcp.pop %v3460
        %v3462 = vmul.f32 %v3457, %v3461
        %v3463 = vpack.c.bf16 %v3462, %v3462
        %v3464 = vpack.c.bf16 %v3397, %v3397
        %v3466 = vsel %vm1456, %v3463, 0
        %v3469 = vsel %vm1526, %v3464, 0
        %3471 = vmatprep.subr.bf16.mxu0 0
        %3472 = vmatpush1.bf16.msra.mxu0 0
        %3473 = vmatprep.subr.bf16.mxu0 0
        %3474 = vmatpush1.bf16.msra.mxu0 0
        %3475 = vmatprep.subr.bf16.mxu0 0
        %3476 = vmatpush1.bf16.msra.mxu0 0
        %3477 = vmatprep.subr.bf16.mxu0 0
        %3478 = vmatpush1.bf16.msra.mxu0 0
        %3479 = vmatprep.subr.bf16.mxu0 0
        %3480 = vmatpush1.bf16.msra.mxu0 0
        %3481 = vmatprep.subr.bf16.mxu0 0
        %3482 = vmatpush1.bf16.msra.mxu0 0
        %3483 = vmatprep.subr.bf16.mxu0 0
        %3484 = vmatpush1.bf16.msra.mxu0 0
        %3485 = vmatprep.subr.bf16.mxu0 0
        %3486 = vmatpush1.bf16.msra.mxu0 %v3469
        %3487 = vmatprep.subr.bf16.mxu0 0
        %3488 = vmatpush2.bf16.msra.mxu0 0
        %3489 = vmatprep.subr.bf16.mxu0 0
        %3490 = vmatpush2.bf16.msra.mxu0 0
        %3491 = vmatprep.subr.bf16.mxu0 0
        %3492 = vmatpush2.bf16.msra.mxu0 0
        %3493 = vmatprep.subr.bf16.mxu0 0
        %3494 = vmatpush2.bf16.msra.mxu0 0
        %3495 = vmatprep.subr.bf16.mxu0 0
        %3496 = vmatpush2.bf16.msra.mxu0 0
        %3497 = vmatprep.subr.bf16.mxu0 0
        %3498 = vmatpush2.bf16.msra.mxu0 0
        %3499 = vmatprep.subr.bf16.mxu0 0
        %3500 = vmatpush2.bf16.msra.mxu0 0
        %3501 = vmatprep.subr.bf16.mxu0 0
        %3502 = vmatpush2.bf16.msra.mxu0 0
        %3503 = vmatprep.mubr.bf16.mxu0 0
        %3504 = vmatmul.mubr.bf16.gmra.mxu0 %v3466
        %v3505 = vpop.f32.mrf.mxu0
        %v3506 = vadd.f32 0.0, %v3505
        %v3507 = vpop.f32.mrf.mxu0
        %v3508 = vpop.f32.mrf.mxu0
        %v3509 = vpop.f32.mrf.mxu0
        %3510 = vdwg.mxu0
        %v3511 = vpack.c.bf16 %v3506, %v3506
        %s3512 = scalar_lea.vmem %s57, 4
        %v3513 = vld [vmem:[%s3512] sm:$0xf]
        %v3515 = vsel %vm1456, %v3511, 0
        %v3518 = vsel %vm1526, %v3513, 0
        %3520 = vmatprep.subr.bf16.mxu0 0
        %3521 = vmatpush1.bf16.msra.mxu0 0
        %3522 = vmatprep.subr.bf16.mxu0 0
        %3523 = vmatpush1.bf16.msra.mxu0 0
        %3524 = vmatprep.subr.bf16.mxu0 0
        %3525 = vmatpush1.bf16.msra.mxu0 0
        %3526 = vmatprep.subr.bf16.mxu0 0
        %3527 = vmatpush1.bf16.msra.mxu0 0
        %3528 = vmatprep.subr.bf16.mxu0 0
        %3529 = vmatpush1.bf16.msra.mxu0 0
        %3530 = vmatprep.subr.bf16.mxu0 0
        %3531 = vmatpush1.bf16.msra.mxu0 0
        %3532 = vmatprep.subr.bf16.mxu0 0
        %3533 = vmatpush1.bf16.msra.mxu0 0
        %3534 = vmatprep.subr.bf16.mxu0 0
        %3535 = vmatpush1.bf16.msra.mxu0 %v3518
        %3536 = vmatprep.subr.bf16.mxu0 0
        %3537 = vmatpush2.bf16.msra.mxu0 0
        %3538 = vmatprep.subr.bf16.mxu0 0
        %3539 = vmatpush2.bf16.msra.mxu0 0
        %3540 = vmatprep.subr.bf16.mxu0 0
        %3541 = vmatpush2.bf16.msra.mxu0 0
        %3542 = vmatprep.subr.bf16.mxu0 0
        %3543 = vmatpush2.bf16.msra.mxu0 0
        %3544 = vmatprep.subr.bf16.mxu0 0
        %3545 = vmatpush2.bf16.msra.mxu0 0
        %3546 = vmatprep.subr.bf16.mxu0 0
        %3547 = vmatpush2.bf16.msra.mxu0 0
        %3548 = vmatprep.subr.bf16.mxu0 0
        %3549 = vmatpush2.bf16.msra.mxu0 0
        %3550 = vmatprep.subr.bf16.mxu0 0
        %3551 = vmatpush2.bf16.msra.mxu0 0
        %3552 = vmatprep.mubr.bf16.mxu0 0
        %3553 = vmatmul.mubr.bf16.gmra.mxu0 %v3515
        %v3554 = vpop.f32.mrf.mxu0
        %v3555 = vadd.f32 0.0, %v3554
        %v3556 = vpop.f32.mrf.mxu0
        %v3557 = vpop.f32.mrf.mxu0
        %v3558 = vpop.f32.mrf.mxu0
        %3559 = vdwg.mxu0
        %v3561 = vsel %vm1456, %v3205, 0
        %v3564 = vsel %vm1526, %v3206, 0
        %3566 = vmatprep.subr.bf16.mxu0 0
        %3567 = vmatpush1.bf16.msra.mxu0 0
        %3568 = vmatprep.subr.bf16.mxu0 0
        %3569 = vmatpush1.bf16.msra.mxu0 0
        %3570 = vmatprep.subr.bf16.mxu0 0
        %3571 = vmatpush1.bf16.msra.mxu0 0
        %3572 = vmatprep.subr.bf16.mxu0 0
        %3573 = vmatpush1.bf16.msra.mxu0 0
        %3574 = vmatprep.subr.bf16.mxu0 0
        %3575 = vmatpush1.bf16.msra.mxu0 0
        %3576 = vmatprep.subr.bf16.mxu0 0
        %3577 = vmatpush1.bf16.msra.mxu0 0
        %3578 = vmatprep.subr.bf16.mxu0 0
        %3579 = vmatpush1.bf16.msra.mxu0 0
        %3580 = vmatprep.subr.bf16.mxu0 0
        %3581 = vmatpush1.bf16.msra.mxu0 %v3564
        %3582 = vmatprep.subr.bf16.mxu0 0
        %3583 = vmatpush2.bf16.msra.mxu0 0
        %3584 = vmatprep.subr.bf16.mxu0 0
        %3585 = vmatpush2.bf16.msra.mxu0 0
        %3586 = vmatprep.subr.bf16.mxu0 0
        %3587 = vmatpush2.bf16.msra.mxu0 0
        %3588 = vmatprep.subr.bf16.mxu0 0
        %3589 = vmatpush2.bf16.msra.mxu0 0
        %3590 = vmatprep.subr.bf16.mxu0 0
        %3591 = vmatpush2.bf16.msra.mxu0 0
        %3592 = vmatprep.subr.bf16.mxu0 0
        %3593 = vmatpush2.bf16.msra.mxu0 0
        %3594 = vmatprep.subr.bf16.mxu0 0
        %3595 = vmatpush2.bf16.msra.mxu0 0
        %3596 = vmatprep.subr.bf16.mxu0 0
        %3597 = vmatpush2.bf16.msra.mxu0 0
        %3598 = vmatprep.mubr.bf16.mxu0 0
        %3599 = vmatmul.mubr.bf16.gmra.mxu0 %v3561
        %v3600 = vpop.f32.mrf.mxu0
        %v3601 = vadd.f32 %v3555, %v3600
        %v3602 = vpop.f32.mrf.mxu0
        %v3603 = vpop.f32.mrf.mxu0
        %v3604 = vpop.f32.mrf.mxu0
        %3605 = vdwg.mxu0
        %s3606 = scalar_lea.vmem %s45, 32
        %v3607 = vld [vmem:[%s3606] sm:$0xf]
        %v3608 = vld [vmem:[%s3606 + $0x4] sm:$0xf]
        %v3609 = vld [vmem:[%s3606 + $0x8] sm:$0xf]
        %v3610 = vld [vmem:[%s3606 + $0xc] sm:$0xf]
        %s3611 = scalar_lea.vmem %s47, 2
        %v3612 = vld [vmem:[%s3611] sm:$0x1]
        %v3614 = vlaneseq
        %v3615 = vshrl.u32 %v3614, 7
        %v3616 = vsub.s32 0, %v3615
        %v3617 = vrot.slane %v3612, %v3616
        %v3623 = vunpack.c.l.b16 %v3607
        %v3624 = vunpack.c.l.b16 %v3608
        %v3625 = vunpack.c.l.b16 %v3609
        %v3626 = vunpack.c.l.b16 %v3610
        %v3627 = vpack.c.b16 %v3624, %v3623
        %v3628 = vpack.c.b16 %v3626, %v3625
        %3631 = vmatprep.subr.bf16.mxu0 0
        %3632 = vmatpush1.bf16.msra.mxu0 0
        %3633 = vmatprep.subr.bf16.mxu0 0
        %3634 = vmatpush1.bf16.msra.mxu0 0
        %3635 = vmatprep.subr.bf16.mxu0 0
        %3636 = vmatpush1.bf16.msra.mxu0 0
        %3637 = vmatprep.subr.bf16.mxu0 0
        %3638 = vmatpush1.bf16.msra.mxu0 0
        %3639 = vmatprep.subr.bf16.mxu0 0
        %3640 = vmatpush1.bf16.msra.mxu0 0
        %3641 = vmatprep.subr.bf16.mxu0 0
        %3642 = vmatpush1.bf16.msra.mxu0 0
        %3643 = vmatprep.subr.bf16.mxu0 0
        %3644 = vmatpush1.bf16.msra.mxu0 %v3628
        %3645 = vmatprep.subr.bf16.mxu0 0
        %3646 = vmatpush1.bf16.msra.mxu0 %v3627
        %3647 = vmatprep.subr.bf16.mxu0 0
        %3648 = vmatpush2.bf16.msra.mxu0 0
        %3649 = vmatprep.subr.bf16.mxu0 0
        %3650 = vmatpush2.bf16.msra.mxu0 0
        %3651 = vmatprep.subr.bf16.mxu0 0
        %3652 = vmatpush2.bf16.msra.mxu0 0
        %3653 = vmatprep.subr.bf16.mxu0 0
        %3654 = vmatpush2.bf16.msra.mxu0 0
        %3655 = vmatprep.subr.bf16.mxu0 0
        %3656 = vmatpush2.bf16.msra.mxu0 0
        %3657 = vmatprep.subr.bf16.mxu0 0
        %3658 = vmatpush2.bf16.msra.mxu0 0
        %3659 = vmatprep.subr.bf16.mxu0 0
        %3660 = vmatpush2.bf16.msra.mxu0 0
        %3661 = vmatprep.subr.bf16.mxu0 0
        %3662 = vmatpush2.bf16.msra.mxu0 0
        %3663 = vmatprep.mubr.bf16.mxu0 0
        %3664 = vmatmul.mubr.bf16.gmra.mxu0 %v2928
        %v3665 = vpop.f32.mrf.mxu0
        %v3666 = vadd.f32 %v3617, %v3665
        %v3667 = vpop.f32.mrf.mxu0
        %v3668 = vpop.f32.mrf.mxu0
        %v3669 = vpop.f32.mrf.mxu0
        %3670 = vdwg.mxu0
        %s3671 = scalar_lea.vmem %s49, 32
        %v3672 = vld [vmem:[%s3671] sm:$0xf]
        %v3673 = vld [vmem:[%s3671 + $0x4] sm:$0xf]
        %v3674 = vld [vmem:[%s3671 + $0x8] sm:$0xf]
        %v3675 = vld [vmem:[%s3671 + $0xc] sm:$0xf]
        %s3676 = scalar_lea.vmem %s51, 2
        %v3677 = vld [vmem:[%s3676] sm:$0x1]
        %v3679 = vlaneseq
        %v3680 = vshrl.u32 %v3679, 7
        %v3681 = vsub.s32 0, %v3680
        %v3682 = vrot.slane %v3677, %v3681
        %v3688 = vunpack.c.l.b16 %v3672
        %v3689 = vunpack.c.l.b16 %v3673
        %v3690 = vunpack.c.l.b16 %v3674
        %v3691 = vunpack.c.l.b16 %v3675
        %v3692 = vpack.c.b16 %v3689, %v3688
        %v3693 = vpack.c.b16 %v3691, %v3690
        %3696 = vmatprep.subr.bf16.mxu0 0
        %3697 = vmatpush1.bf16.msra.mxu0 0
        %3698 = vmatprep.subr.bf16.mxu0 0
        %3699 = vmatpush1.bf16.msra.mxu0 0
        %3700 = vmatprep.subr.bf16.mxu0 0
        %3701 = vmatpush1.bf16.msra.mxu0 0
        %3702 = vmatprep.subr.bf16.mxu0 0
        %3703 = vmatpush1.bf16.msra.mxu0 0
        %3704 = vmatprep.subr.bf16.mxu0 0
        %3705 = vmatpush1.bf16.msra.mxu0 0
        %3706 = vmatprep.subr.bf16.mxu0 0
        %3707 = vmatpush1.bf16.msra.mxu0 0
        %3708 = vmatprep.subr.bf16.mxu0 0
        %3709 = vmatpush1.bf16.msra.mxu0 %v3693
        %3710 = vmatprep.subr.bf16.mxu0 0
        %3711 = vmatpush1.bf16.msra.mxu0 %v3692
        %3712 = vmatprep.subr.bf16.mxu0 0
        %3713 = vmatpush2.bf16.msra.mxu0 0
        %3714 = vmatprep.subr.bf16.mxu0 0
        %3715 = vmatpush2.bf16.msra.mxu0 0
        %3716 = vmatprep.subr.bf16.mxu0 0
        %3717 = vmatpush2.bf16.msra.mxu0 0
        %3718 = vmatprep.subr.bf16.mxu0 0
        %3719 = vmatpush2.bf16.msra.mxu0 0
        %3720 = vmatprep.subr.bf16.mxu0 0
        %3721 = vmatpush2.bf16.msra.mxu0 0
        %3722 = vmatprep.subr.bf16.mxu0 0
        %3723 = vmatpush2.bf16.msra.mxu0 0
        %3724 = vmatprep.subr.bf16.mxu0 0
        %3725 = vmatpush2.bf16.msra.mxu0 0
        %3726 = vmatprep.subr.bf16.mxu0 0
        %3727 = vmatpush2.bf16.msra.mxu0 0
        %3728 = vmatprep.mubr.bf16.mxu0 0
        %3729 = vmatmul.mubr.bf16.gmra.mxu0 %v2928
        %v3730 = vpop.f32.mrf.mxu0
        %v3731 = vadd.f32 %v3682, %v3730
        %v3732 = vpop.f32.mrf.mxu0
        %v3733 = vpop.f32.mrf.mxu0
        %v3734 = vpop.f32.mrf.mxu0
        %3735 = vdwg.mxu0
        %s3736 = scalar_lea.vmem %s53, 32
        %v3737 = vld [vmem:[%s3736] sm:$0xf]
        %v3738 = vld [vmem:[%s3736 + $0x4] sm:$0xf]
        %v3739 = vld [vmem:[%s3736 + $0x8] sm:$0xf]
        %v3740 = vld [vmem:[%s3736 + $0xc] sm:$0xf]
        %s3741 = scalar_lea.vmem %s55, 2
        %v3742 = vld [vmem:[%s3741] sm:$0x1]
        %v3744 = vlaneseq
        %v3745 = vshrl.u32 %v3744, 7
        %v3746 = vsub.s32 0, %v3745
        %v3747 = vrot.slane %v3742, %v3746
        %v3753 = vunpack.c.l.b16 %v3737
        %v3754 = vunpack.c.l.b16 %v3738
        %v3755 = vunpack.c.l.b16 %v3739
        %v3756 = vunpack.c.l.b16 %v3740
        %v3757 = vpack.c.b16 %v3754, %v3753
        %v3758 = vpack.c.b16 %v3756, %v3755
        %3761 = vmatprep.subr.bf16.mxu0 0
        %3762 = vmatpush1.bf16.msra.mxu0 0
        %3763 = vmatprep.subr.bf16.mxu0 0
        %3764 = vmatpush1.bf16.msra.mxu0 0
        %3765 = vmatprep.subr.bf16.mxu0 0
        %3766 = vmatpush1.bf16.msra.mxu0 0
        %3767 = vmatprep.subr.bf16.mxu0 0
        %3768 = vmatpush1.bf16.msra.mxu0 0
        %3769 = vmatprep.subr.bf16.mxu0 0
        %3770 = vmatpush1.bf16.msra.mxu0 0
        %3771 = vmatprep.subr.bf16.mxu0 0
        %3772 = vmatpush1.bf16.msra.mxu0 0
        %3773 = vmatprep.subr.bf16.mxu0 0
        %3774 = vmatpush1.bf16.msra.mxu0 %v3758
        %3775 = vmatprep.subr.bf16.mxu0 0
        %3776 = vmatpush1.bf16.msra.mxu0 %v3757
        %3777 = vmatprep.subr.bf16.mxu0 0
        %3778 = vmatpush2.bf16.msra.mxu0 0
        %3779 = vmatprep.subr.bf16.mxu0 0
        %3780 = vmatpush2.bf16.msra.mxu0 0
        %3781 = vmatprep.subr.bf16.mxu0 0
        %3782 = vmatpush2.bf16.msra.mxu0 0
        %3783 = vmatprep.subr.bf16.mxu0 0
        %3784 = vmatpush2.bf16.msra.mxu0 0
        %3785 = vmatprep.subr.bf16.mxu0 0
        %3786 = vmatpush2.bf16.msra.mxu0 0
        %3787 = vmatprep.subr.bf16.mxu0 0
        %3788 = vmatpush2.bf16.msra.mxu0 0
        %3789 = vmatprep.subr.bf16.mxu0 0
        %3790 = vmatpush2.bf16.msra.mxu0 0
        %3791 = vmatprep.subr.bf16.mxu0 0
        %3792 = vmatpush2.bf16.msra.mxu0 0
        %3793 = vmatprep.mubr.bf16.mxu0 0
        %3794 = vmatmul.mubr.bf16.gmra.mxu0 %v2928
        %v3795 = vpop.f32.mrf.mxu0
        %v3796 = vadd.f32 %v3747, %v3795
        %v3797 = vpop.f32.mrf.mxu0
        %v3798 = vpop.f32.mrf.mxu0
        %v3799 = vpop.f32.mrf.mxu0
        %3800 = vdwg.mxu0
        %v3801 = vmul.f32 %v3666, 0.35355338
        %v3802 = vpack.c.bf16 %v3801, %v3801
        %v3803 = vpack.c.bf16 %v3731, %v3731
        %v3805 = vsel %vm1456, %v3802, 0
        %v3808 = vsel %vm1456, %v3803, 0
        %3810 = vmatprep.subr.bf16.mxu0 0
        %3811 = vmatpush1.bf16.xpose.msra.mxu0 0
        %3812 = vmatprep.subr.bf16.mxu0 0
        %3813 = vmatpush1.bf16.xpose.msra.mxu0 0
        %3814 = vmatprep.subr.bf16.mxu0 0
        %3815 = vmatpush1.bf16.xpose.msra.mxu0 0
        %3816 = vmatprep.subr.bf16.mxu0 0
        %3817 = vmatpush1.bf16.xpose.msra.mxu0 0
        %3818 = vmatprep.subr.bf16.mxu0 0
        %3819 = vmatpush1.bf16.xpose.msra.mxu0 0
        %3820 = vmatprep.subr.bf16.mxu0 0
        %3821 = vmatpush1.bf16.xpose.msra.mxu0 0
        %3822 = vmatprep.subr.bf16.mxu0 0
        %3823 = vmatpush1.bf16.xpose.msra.mxu0 0
        %3824 = vmatprep.subr.bf16.mxu0 0
        %3825 = vmatpush1.bf16.xpose.msra.mxu0 %v3808
        %3826 = vmatprep.subr.bf16.mxu0 0
        %3827 = vmatpush2.bf16.xpose.msra.mxu0 0
        %3828 = vmatprep.subr.bf16.mxu0 0
        %3829 = vmatpush2.bf16.xpose.msra.mxu0 0
        %3830 = vmatprep.subr.bf16.mxu0 0
        %3831 = vmatpush2.bf16.xpose.msra.mxu0 0
        %3832 = vmatprep.subr.bf16.mxu0 0
        %3833 = vmatpush2.bf16.xpose.msra.mxu0 0
        %3834 = vmatprep.subr.bf16.mxu0 0
        %3835 = vmatpush2.bf16.xpose.msra.mxu0 0
        %3836 = vmatprep.subr.bf16.mxu0 0
        %3837 = vmatpush2.bf16.xpose.msra.mxu0 0
        %3838 = vmatprep.subr.bf16.mxu0 0
        %3839 = vmatpush2.bf16.xpose.msra.mxu0 0
        %3840 = vmatprep.subr.bf16.mxu0 0
        %3841 = vmatpush2.bf16.xpose.msra.mxu0 0
        %3842 = vmatprep.mubr.bf16.mxu0 0
        %3843 = vmatmul.mubr.bf16.gmra.mxu0 %v3805
        %v3844 = vpop.f32.mrf.mxu0
        %v3845 = vadd.f32 0.0, %v3844
        %v3846 = vpop.f32.mrf.mxu0
        %v3847 = vpop.f32.mrf.mxu0
        %v3848 = vpop.f32.mrf.mxu0
        %3849 = vdwg.mxu0
        %v3850 = vsel %vm1508, -3.4028235e+38, %v3845
        %v3851 = vsel %vm1456, %v3850, -inf
        %3852 = vmax.xlane.f32.xlu0 %v3851
        %v3853 = vpop.xlane.xlu0 %3852
        %v3854 = vsub.f32 %v3850, %v3853
        %v3855 = vmul.f32 %v3854, 1.442695
        %v3856 = vpow.pop %v3855
        %v3857 = vsel %vm1456, %v3856, 0.0
        %3858 = vadd.xlane.f32.xlu0 %v3857
        %v3859 = vpop.xlane.xlu0 %3858
        %v3860 = vrcp.pop %v3859
        %v3861 = vmul.f32 %v3856, %v3860
        %v3862 = vpack.c.bf16 %v3861, %v3861
        %v3863 = vpack.c.bf16 %v3796, %v3796
        %v3865 = vsel %vm1456, %v3862, 0
        %v3868 = vsel %vm1526, %v3863, 0
        %3870 = vmatprep.subr.bf16.mxu0 0
        %3871 = vmatpush1.bf16.msra.mxu0 0
        %3872 = vmatprep.subr.bf16.mxu0 0
        %3873 = vmatpush1.bf16.msra.mxu0 0
        %3874 = vmatprep.subr.bf16.mxu0 0
        %3875 = vmatpush1.bf16.msra.mxu0 0
        %3876 = vmatprep.subr.bf16.mxu0 0
        %3877 = vmatpush1.bf16.msra.mxu0 0
        %3878 = vmatprep.subr.bf16.mxu0 0
        %3879 = vmatpush1.bf16.msra.mxu0 0
        %3880 = vmatprep.subr.bf16.mxu0 0
        %3881 = vmatpush1.bf16.msra.mxu0 0
        %3882 = vmatprep.subr.bf16.mxu0 0
        %3883 = vmatpush1.bf16.msra.mxu0 0
        %3884 = vmatprep.subr.bf16.mxu0 0
        %3885 = vmatpush1.bf16.msra.mxu0 %v3868
        %3886 = vmatprep.subr.bf16.mxu0 0
        %3887 = vmatpush2.bf16.msra.mxu0 0
        %3888 = vmatprep.subr.bf16.mxu0 0
        %3889 = vmatpush2.bf16.msra.mxu0 0
        %3890 = vmatprep.subr.bf16.mxu0 0
        %3891 = vmatpush2.bf16.msra.mxu0 0
        %3892 = vmatprep.subr.bf16.mxu0 0
        %3893 = vmatpush2.bf16.msra.mxu0 0
        %3894 = vmatprep.subr.bf16.mxu0 0
        %3895 = vmatpush2.bf16.msra.mxu0 0
        %3896 = vmatprep.subr.bf16.mxu0 0
        %3897 = vmatpush2.bf16.msra.mxu0 0
        %3898 = vmatprep.subr.bf16.mxu0 0
        %3899 = vmatpush2.bf16.msra.mxu0 0
        %3900 = vmatprep.subr.bf16.mxu0 0
        %3901 = vmatpush2.bf16.msra.mxu0 0
        %3902 = vmatprep.mubr.bf16.mxu0 0
        %3903 = vmatmul.mubr.bf16.gmra.mxu0 %v3865
        %v3904 = vpop.f32.mrf.mxu0
        %v3905 = vadd.f32 0.0, %v3904
        %v3906 = vpop.f32.mrf.mxu0
        %v3907 = vpop.f32.mrf.mxu0
        %v3908 = vpop.f32.mrf.mxu0
        %3909 = vdwg.mxu0
        %v3910 = vpack.c.bf16 %v3905, %v3905
        %s3911 = scalar_lea.vmem %s57, 8
        %v3912 = vld [vmem:[%s3911] sm:$0xf]
        %v3914 = vsel %vm1456, %v3910, 0
        %v3917 = vsel %vm1526, %v3912, 0
        %3919 = vmatprep.subr.bf16.mxu0 0
        %3920 = vmatpush1.bf16.msra.mxu0 0
        %3921 = vmatprep.subr.bf16.mxu0 0
        %3922 = vmatpush1.bf16.msra.mxu0 0
        %3923 = vmatprep.subr.bf16.mxu0 0
        %3924 = vmatpush1.bf16.msra.mxu0 0
        %3925 = vmatprep.subr.bf16.mxu0 0
        %3926 = vmatpush1.bf16.msra.mxu0 0
        %3927 = vmatprep.subr.bf16.mxu0 0
        %3928 = vmatpush1.bf16.msra.mxu0 0
        %3929 = vmatprep.subr.bf16.mxu0 0
        %3930 = vmatpush1.bf16.msra.mxu0 0
        %3931 = vmatprep.subr.bf16.mxu0 0
        %3932 = vmatpush1.bf16.msra.mxu0 0
        %3933 = vmatprep.subr.bf16.mxu0 0
        %3934 = vmatpush1.bf16.msra.mxu0 %v3917
        %3935 = vmatprep.subr.bf16.mxu0 0
        %3936 = vmatpush2.bf16.msra.mxu0 0
        %3937 = vmatprep.subr.bf16.mxu0 0
        %3938 = vmatpush2.bf16.msra.mxu0 0
        %3939 = vmatprep.subr.bf16.mxu0 0
        %3940 = vmatpush2.bf16.msra.mxu0 0
        %3941 = vmatprep.subr.bf16.mxu0 0
        %3942 = vmatpush2.bf16.msra.mxu0 0
        %3943 = vmatprep.subr.bf16.mxu0 0
        %3944 = vmatpush2.bf16.msra.mxu0 0
        %3945 = vmatprep.subr.bf16.mxu0 0
        %3946 = vmatpush2.bf16.msra.mxu0 0
        %3947 = vmatprep.subr.bf16.mxu0 0
        %3948 = vmatpush2.bf16.msra.mxu0 0
        %3949 = vmatprep.subr.bf16.mxu0 0
        %3950 = vmatpush2.bf16.msra.mxu0 0
        %3951 = vmatprep.mubr.bf16.mxu0 0
        %3952 = vmatmul.mubr.bf16.gmra.mxu0 %v3914
        %v3953 = vpop.f32.mrf.mxu0
        %v3954 = vadd.f32 0.0, %v3953
        %v3955 = vpop.f32.mrf.mxu0
        %v3956 = vpop.f32.mrf.mxu0
        %v3957 = vpop.f32.mrf.mxu0
        %3958 = vdwg.mxu0
        %v3959 = vadd.f32 %v3601, %v3954
        %s3960 = scalar_lea.vmem %s45, 48
        %v3961 = vld [vmem:[%s3960] sm:$0xf]
        %v3962 = vld [vmem:[%s3960 + $0x4] sm:$0xf]
        %v3963 = vld [vmem:[%s3960 + $0x8] sm:$0xf]
        %v3964 = vld [vmem:[%s3960 + $0xc] sm:$0xf]
        %s3965 = scalar_lea.vmem %s47, 3
        %v3966 = vld [vmem:[%s3965] sm:$0x1]
        %v3968 = vlaneseq
        %v3969 = vshrl.u32 %v3968, 7
        %v3970 = vsub.s32 0, %v3969
        %v3971 = vrot.slane %v3966, %v3970
        %v3977 = vunpack.c.l.b16 %v3961
        %v3978 = vunpack.c.l.b16 %v3962
        %v3979 = vunpack.c.l.b16 %v3963
        %v3980 = vunpack.c.l.b16 %v3964
        %v3981 = vpack.c.b16 %v3978, %v3977
        %v3982 = vpack.c.b16 %v3980, %v3979
        %3985 = vmatprep.subr.bf16.mxu0 0
        %3986 = vmatpush1.bf16.msra.mxu0 0
        %3987 = vmatprep.subr.bf16.mxu0 0
        %3988 = vmatpush1.bf16.msra.mxu0 0
        %3989 = vmatprep.subr.bf16.mxu0 0
        %3990 = vmatpush1.bf16.msra.mxu0 0
        %3991 = vmatprep.subr.bf16.mxu0 0
        %3992 = vmatpush1.bf16.msra.mxu0 0
        %3993 = vmatprep.subr.bf16.mxu0 0
        %3994 = vmatpush1.bf16.msra.mxu0 0
        %3995 = vmatprep.subr.bf16.mxu0 0
        %3996 = vmatpush1.bf16.msra.mxu0 0
        %3997 = vmatprep.subr.bf16.mxu0 0
        %3998 = vmatpush1.bf16.msra.mxu0 %v3982
        %3999 = vmatprep.subr.bf16.mxu0 0
        %4000 = vmatpush1.bf16.msra.mxu0 %v3981
        %4001 = vmatprep.subr.bf16.mxu0 0
        %4002 = vmatpush2.bf16.msra.mxu0 0
        %4003 = vmatprep.subr.bf16.mxu0 0
        %4004 = vmatpush2.bf16.msra.mxu0 0
        %4005 = vmatprep.subr.bf16.mxu0 0
        %4006 = vmatpush2.bf16.msra.mxu0 0
        %4007 = vmatprep.subr.bf16.mxu0 0
        %4008 = vmatpush2.bf16.msra.mxu0 0
        %4009 = vmatprep.subr.bf16.mxu0 0
        %4010 = vmatpush2.bf16.msra.mxu0 0
        %4011 = vmatprep.subr.bf16.mxu0 0
        %4012 = vmatpush2.bf16.msra.mxu0 0
        %4013 = vmatprep.subr.bf16.mxu0 0
        %4014 = vmatpush2.bf16.msra.mxu0 0
        %4015 = vmatprep.subr.bf16.mxu0 0
        %4016 = vmatpush2.bf16.msra.mxu0 0
        %4017 = vmatprep.mubr.bf16.mxu0 0
        %4018 = vmatmul.mubr.bf16.gmra.mxu0 %v2928
        %v4019 = vpop.f32.mrf.mxu0
        %v4020 = vadd.f32 %v3971, %v4019
        %v4021 = vpop.f32.mrf.mxu0
        %v4022 = vpop.f32.mrf.mxu0
        %v4023 = vpop.f32.mrf.mxu0
        %4024 = vdwg.mxu0
        %s4025 = scalar_lea.vmem %s49, 48
        %v4026 = vld [vmem:[%s4025] sm:$0xf]
        %v4027 = vld [vmem:[%s4025 + $0x4] sm:$0xf]
        %v4028 = vld [vmem:[%s4025 + $0x8] sm:$0xf]
        %v4029 = vld [vmem:[%s4025 + $0xc] sm:$0xf]
        %s4030 = scalar_lea.vmem %s51, 3
        %v4031 = vld [vmem:[%s4030] sm:$0x1]
        %v4033 = vlaneseq
        %v4034 = vshrl.u32 %v4033, 7
        %v4035 = vsub.s32 0, %v4034
        %v4036 = vrot.slane %v4031, %v4035
        %v4042 = vunpack.c.l.b16 %v4026
        %v4043 = vunpack.c.l.b16 %v4027
        %v4044 = vunpack.c.l.b16 %v4028
        %v4045 = vunpack.c.l.b16 %v4029
        %v4046 = vpack.c.b16 %v4043, %v4042
        %v4047 = vpack.c.b16 %v4045, %v4044
        %4050 = vmatprep.subr.bf16.mxu0 0
        %4051 = vmatpush1.bf16.msra.mxu0 0
        %4052 = vmatprep.subr.bf16.mxu0 0
        %4053 = vmatpush1.bf16.msra.mxu0 0
        %4054 = vmatprep.subr.bf16.mxu0 0
        %4055 = vmatpush1.bf16.msra.mxu0 0
        %4056 = vmatprep.subr.bf16.mxu0 0
        %4057 = vmatpush1.bf16.msra.mxu0 0
        %4058 = vmatprep.subr.bf16.mxu0 0
        %4059 = vmatpush1.bf16.msra.mxu0 0
        %4060 = vmatprep.subr.bf16.mxu0 0
        %4061 = vmatpush1.bf16.msra.mxu0 0
        %4062 = vmatprep.subr.bf16.mxu0 0
        %4063 = vmatpush1.bf16.msra.mxu0 %v4047
        %4064 = vmatprep.subr.bf16.mxu0 0
        %4065 = vmatpush1.bf16.msra.mxu0 %v4046
        %4066 = vmatprep.subr.bf16.mxu0 0
        %4067 = vmatpush2.bf16.msra.mxu0 0
        %4068 = vmatprep.subr.bf16.mxu0 0
        %4069 = vmatpush2.bf16.msra.mxu0 0
        %4070 = vmatprep.subr.bf16.mxu0 0
        %4071 = vmatpush2.bf16.msra.mxu0 0
        %4072 = vmatprep.subr.bf16.mxu0 0
        %4073 = vmatpush2.bf16.msra.mxu0 0
        %4074 = vmatprep.subr.bf16.mxu0 0
        %4075 = vmatpush2.bf16.msra.mxu0 0
        %4076 = vmatprep.subr.bf16.mxu0 0
        %4077 = vmatpush2.bf16.msra.mxu0 0
        %4078 = vmatprep.subr.bf16.mxu0 0
        %4079 = vmatpush2.bf16.msra.mxu0 0
        %4080 = vmatprep.subr.bf16.mxu0 0
        %4081 = vmatpush2.bf16.msra.mxu0 0
        %4082 = vmatprep.mubr.bf16.mxu0 0
        %4083 = vmatmul.mubr.bf16.gmra.mxu0 %v2928
        %v4084 = vpop.f32.mrf.mxu0
        %v4085 = vadd.f32 %v4036, %v4084
        %v4086 = vpop.f32.mrf.mxu0
        %v4087 = vpop.f32.mrf.mxu0
        %v4088 = vpop.f32.mrf.mxu0
        %4089 = vdwg.mxu0
        %s4090 = scalar_lea.vmem %s53, 48
        %v4091 = vld [vmem:[%s4090] sm:$0xf]
        %v4092 = vld [vmem:[%s4090 + $0x4] sm:$0xf]
        %v4093 = vld [vmem:[%s4090 + $0x8] sm:$0xf]
        %v4094 = vld [vmem:[%s4090 + $0xc] sm:$0xf]
        %s4095 = scalar_lea.vmem %s55, 3
        %v4096 = vld [vmem:[%s4095] sm:$0x1]
        %v4098 = vlaneseq
        %v4099 = vshrl.u32 %v4098, 7
        %v4100 = vsub.s32 0, %v4099
        %v4101 = vrot.slane %v4096, %v4100
        %v4107 = vunpack.c.l.b16 %v4091
        %v4108 = vunpack.c.l.b16 %v4092
        %v4109 = vunpack.c.l.b16 %v4093
        %v4110 = vunpack.c.l.b16 %v4094
        %v4111 = vpack.c.b16 %v4108, %v4107
        %v4112 = vpack.c.b16 %v4110, %v4109
        %4115 = vmatprep.subr.bf16.mxu0 0
        %4116 = vmatpush1.bf16.msra.mxu0 0
        %4117 = vmatprep.subr.bf16.mxu0 0
        %4118 = vmatpush1.bf16.msra.mxu0 0
        %4119 = vmatprep.subr.bf16.mxu0 0
        %4120 = vmatpush1.bf16.msra.mxu0 0
        %4121 = vmatprep.subr.bf16.mxu0 0
        %4122 = vmatpush1.bf16.msra.mxu0 0
        %4123 = vmatprep.subr.bf16.mxu0 0
        %4124 = vmatpush1.bf16.msra.mxu0 0
        %4125 = vmatprep.subr.bf16.mxu0 0
        %4126 = vmatpush1.bf16.msra.mxu0 0
        %4127 = vmatprep.subr.bf16.mxu0 0
        %4128 = vmatpush1.bf16.msra.mxu0 %v4112
        %4129 = vmatprep.subr.bf16.mxu0 0
        %4130 = vmatpush1.bf16.msra.mxu0 %v4111
        %4131 = vmatprep.subr.bf16.mxu0 0
        %4132 = vmatpush2.bf16.msra.mxu0 0
        %4133 = vmatprep.subr.bf16.mxu0 0
        %4134 = vmatpush2.bf16.msra.mxu0 0
        %4135 = vmatprep.subr.bf16.mxu0 0
        %4136 = vmatpush2.bf16.msra.mxu0 0
        %4137 = vmatprep.subr.bf16.mxu0 0
        %4138 = vmatpush2.bf16.msra.mxu0 0
        %4139 = vmatprep.subr.bf16.mxu0 0
        %4140 = vmatpush2.bf16.msra.mxu0 0
        %4141 = vmatprep.subr.bf16.mxu0 0
        %4142 = vmatpush2.bf16.msra.mxu0 0
        %4143 = vmatprep.subr.bf16.mxu0 0
        %4144 = vmatpush2.bf16.msra.mxu0 0
        %4145 = vmatprep.subr.bf16.mxu0 0
        %4146 = vmatpush2.bf16.msra.mxu0 0
        %4147 = vmatprep.mubr.bf16.mxu0 0
        %4148 = vmatmul.mubr.bf16.gmra.mxu0 %v2928
        %v4149 = vpop.f32.mrf.mxu0
        %v4150 = vadd.f32 %v4101, %v4149
        %v4151 = vpop.f32.mrf.mxu0
        %v4152 = vpop.f32.mrf.mxu0
        %v4153 = vpop.f32.mrf.mxu0
        %4154 = vdwg.mxu0
        %v4155 = vmul.f32 %v4020, 0.35355338
        %v4156 = vpack.c.bf16 %v4155, %v4155
        %v4157 = vpack.c.bf16 %v4085, %v4085
        %v4159 = vsel %vm1456, %v4156, 0
        %v4162 = vsel %vm1456, %v4157, 0
        %4164 = vmatprep.subr.bf16.mxu0 0
        %4165 = vmatpush1.bf16.xpose.msra.mxu0 0
        %4166 = vmatprep.subr.bf16.mxu0 0
        %4167 = vmatpush1.bf16.xpose.msra.mxu0 0
        %4168 = vmatprep.subr.bf16.mxu0 0
        %4169 = vmatpush1.bf16.xpose.msra.mxu0 0
        %4170 = vmatprep.subr.bf16.mxu0 0
        %4171 = vmatpush1.bf16.xpose.msra.mxu0 0
        %4172 = vmatprep.subr.bf16.mxu0 0
        %4173 = vmatpush1.bf16.xpose.msra.mxu0 0
        %4174 = vmatprep.subr.bf16.mxu0 0
        %4175 = vmatpush1.bf16.xpose.msra.mxu0 0
        %4176 = vmatprep.subr.bf16.mxu0 0
        %4177 = vmatpush1.bf16.xpose.msra.mxu0 0
        %4178 = vmatprep.subr.bf16.mxu0 0
        %4179 = vmatpush1.bf16.xpose.msra.mxu0 %v4162
        %4180 = vmatprep.subr.bf16.mxu0 0
        %4181 = vmatpush2.bf16.xpose.msra.mxu0 0
        %4182 = vmatprep.subr.bf16.mxu0 0
        %4183 = vmatpush2.bf16.xpose.msra.mxu0 0
        %4184 = vmatprep.subr.bf16.mxu0 0
        %4185 = vmatpush2.bf16.xpose.msra.mxu0 0
        %4186 = vmatprep.subr.bf16.mxu0 0
        %4187 = vmatpush2.bf16.xpose.msra.mxu0 0
        %4188 = vmatprep.subr.bf16.mxu0 0
        %4189 = vmatpush2.bf16.xpose.msra.mxu0 0
        %4190 = vmatprep.subr.bf16.mxu0 0
        %4191 = vmatpush2.bf16.xpose.msra.mxu0 0
        %4192 = vmatprep.subr.bf16.mxu0 0
        %4193 = vmatpush2.bf16.xpose.msra.mxu0 0
        %4194 = vmatprep.subr.bf16.mxu0 0
        %4195 = vmatpush2.bf16.xpose.msra.mxu0 0
        %4196 = vmatprep.mubr.bf16.mxu0 0
        %4197 = vmatmul.mubr.bf16.gmra.mxu0 %v4159
        %v4198 = vpop.f32.mrf.mxu0
        %v4199 = vadd.f32 0.0, %v4198
        %v4200 = vpop.f32.mrf.mxu0
        %v4201 = vpop.f32.mrf.mxu0
        %v4202 = vpop.f32.mrf.mxu0
        %4203 = vdwg.mxu0
        %v4204 = vsel %vm1508, -3.4028235e+38, %v4199
        %v4205 = vsel %vm1456, %v4204, -inf
        %4206 = vmax.xlane.f32.xlu0 %v4205
        %v4207 = vpop.xlane.xlu0 %4206
        %v4208 = vsub.f32 %v4204, %v4207
        %v4209 = vmul.f32 %v4208, 1.442695
        %v4210 = vpow.pop %v4209
        %v4211 = vsel %vm1456, %v4210, 0.0
        %4212 = vadd.xlane.f32.xlu0 %v4211
        %v4213 = vpop.xlane.xlu0 %4212
        %v4214 = vrcp.pop %v4213
        %v4215 = vmul.f32 %v4210, %v4214
        %v4216 = vpack.c.bf16 %v4215, %v4215
        %v4217 = vpack.c.bf16 %v4150, %v4150
        %v4219 = vsel %vm1456, %v4216, 0
        %v4222 = vsel %vm1526, %v4217, 0
        %4224 = vmatprep.subr.bf16.mxu0 0
        %4225 = vmatpush1.bf16.msra.mxu0 0
        %4226 = vmatprep.subr.bf16.mxu0 0
        %4227 = vmatpush1.bf16.msra.mxu0 0
        %4228 = vmatprep.subr.bf16.mxu0 0
        %4229 = vmatpush1.bf16.msra.mxu0 0
        %4230 = vmatprep.subr.bf16.mxu0 0
        %4231 = vmatpush1.bf16.msra.mxu0 0
        %4232 = vmatprep.subr.bf16.mxu0 0
        %4233 = vmatpush1.bf16.msra.mxu0 0
        %4234 = vmatprep.subr.bf16.mxu0 0
        %4235 = vmatpush1.bf16.msra.mxu0 0
        %4236 = vmatprep.subr.bf16.mxu0 0
        %4237 = vmatpush1.bf16.msra.mxu0 0
        %4238 = vmatprep.subr.bf16.mxu0 0
        %4239 = vmatpush1.bf16.msra.mxu0 %v4222
        %4240 = vmatprep.subr.bf16.mxu0 0
        %4241 = vmatpush2.bf16.msra.mxu0 0
        %4242 = vmatprep.subr.bf16.mxu0 0
        %4243 = vmatpush2.bf16.msra.mxu0 0
        %4244 = vmatprep.subr.bf16.mxu0 0
        %4245 = vmatpush2.bf16.msra.mxu0 0
        %4246 = vmatprep.subr.bf16.mxu0 0
        %4247 = vmatpush2.bf16.msra.mxu0 0
        %4248 = vmatprep.subr.bf16.mxu0 0
        %4249 = vmatpush2.bf16.msra.mxu0 0
        %4250 = vmatprep.subr.bf16.mxu0 0
        %4251 = vmatpush2.bf16.msra.mxu0 0
        %4252 = vmatprep.subr.bf16.mxu0 0
        %4253 = vmatpush2.bf16.msra.mxu0 0
        %4254 = vmatprep.subr.bf16.mxu0 0
        %4255 = vmatpush2.bf16.msra.mxu0 0
        %4256 = vmatprep.mubr.bf16.mxu0 0
        %4257 = vmatmul.mubr.bf16.gmra.mxu0 %v4219
        %v4258 = vpop.f32.mrf.mxu0
        %v4259 = vadd.f32 0.0, %v4258
        %v4260 = vpop.f32.mrf.mxu0
        %v4261 = vpop.f32.mrf.mxu0
        %v4262 = vpop.f32.mrf.mxu0
        %4263 = vdwg.mxu0
        %v4264 = vpack.c.bf16 %v4259, %v4259
        %s4265 = scalar_lea.vmem %s57, 12
        %v4266 = vld [vmem:[%s4265] sm:$0xf]
        %v4268 = vsel %vm1456, %v4264, 0
        %v4271 = vsel %vm1526, %v4266, 0
        %4273 = vmatprep.subr.bf16.mxu0 0
        %4274 = vmatpush1.bf16.msra.mxu0 0
        %4275 = vmatprep.subr.bf16.mxu0 0
        %4276 = vmatpush1.bf16.msra.mxu0 0
        %4277 = vmatprep.subr.bf16.mxu0 0
        %4278 = vmatpush1.bf16.msra.mxu0 0
        %4279 = vmatprep.subr.bf16.mxu0 0
        %4280 = vmatpush1.bf16.msra.mxu0 0
        %4281 = vmatprep.subr.bf16.mxu0 0
        %4282 = vmatpush1.bf16.msra.mxu0 0
        %4283 = vmatprep.subr.bf16.mxu0 0
        %4284 = vmatpush1.bf16.msra.mxu0 0
        %4285 = vmatprep.subr.bf16.mxu0 0
        %4286 = vmatpush1.bf16.msra.mxu0 0
        %4287 = vmatprep.subr.bf16.mxu0 0
        %4288 = vmatpush1.bf16.msra.mxu0 %v4271
        %4289 = vmatprep.subr.bf16.mxu0 0
        %4290 = vmatpush2.bf16.msra.mxu0 0
        %4291 = vmatprep.subr.bf16.mxu0 0
        %4292 = vmatpush2.bf16.msra.mxu0 0
        %4293 = vmatprep.subr.bf16.mxu0 0
        %4294 = vmatpush2.bf16.msra.mxu0 0
        %4295 = vmatprep.subr.bf16.mxu0 0
        %4296 = vmatpush2.bf16.msra.mxu0 0
        %4297 = vmatprep.subr.bf16.mxu0 0
        %4298 = vmatpush2.bf16.msra.mxu0 0
        %4299 = vmatprep.subr.bf16.mxu0 0
        %4300 = vmatpush2.bf16.msra.mxu0 0
        %4301 = vmatprep.subr.bf16.mxu0 0
        %4302 = vmatpush2.bf16.msra.mxu0 0
        %4303 = vmatprep.subr.bf16.mxu0 0
        %4304 = vmatpush2.bf16.msra.mxu0 0
        %4305 = vmatprep.mubr.bf16.mxu0 0
        %4306 = vmatmul.mubr.bf16.gmra.mxu0 %v4268
        %v4307 = vpop.f32.mrf.mxu0
        %v4308 = vadd.f32 0.0, %v4307
        %v4309 = vpop.f32.mrf.mxu0
        %v4310 = vpop.f32.mrf.mxu0
        %v4311 = vpop.f32.mrf.mxu0
        %4312 = vdwg.mxu0
        %v4313 = vadd.f32 %v3959, %v4308
        %v4314 = vld [vmem:[%s59] sm:$0x1]
        %v4316 = vlaneseq
        %v4317 = vshrl.u32 %v4316, 7
        %v4318 = vsub.s32 0, %v4317
        %v4319 = vrot.slane %v4314, %v4318
        %v4321 = vadd.f32 %v4313, %v4319
        %v4322 = vadd.f32 %v2902, %v4321
        %v4323 = vld [vmem:[%s61] sm:$0x1]
        %v4324 = vld [vmem:[%s63] sm:$0x1]
        %v4325 = vsel %vm1229, %v4322, 0.0
        %4326 = vadd.xlane.f32.xlu0 %v4325
        %v4327 = vpop.xlane.xlu0 %4326
        %v4328 = vmul.f32 %v4327, %v1233
        %v4329 = vsub.f32 %v4322, %v4328
        %v4330 = vmul.f32 %v4329, %v4329
        %v4331 = vsel %vm1229, %v4330, 0.0
        %4332 = vadd.xlane.f32.xlu0 %v4331
        %v4333 = vpop.xlane.xlu0 %4332
        %v4334 = vmul.f32 %v4333, %v1233
        %v4335 = vadd.f32 %v4334, 1e-12
        %v4336 = vrsqrt.pop %v4335
        %v4337 = vmul.f32 %v4329, %v4336
        %v4339 = vlaneseq
        %v4340 = vshrl.u32 %v4339, 7
        %v4341 = vsub.s32 0, %v4340
        %v4342 = vrot.slane %v4323, %v4341
        %v4344 = vmul.f32 %v4337, %v4342
        %v4346 = vlaneseq
        %v4347 = vshrl.u32 %v4346, 7
        %v4348 = vsub.s32 0, %v4347
        %v4349 = vrot.slane %v4324, %v4348
        %v4351 = vadd.f32 %v4344, %v4349
        %v4352 = vld [vmem:[%s65] sm:$0xf]
        %v4353 = vld [vmem:[%s65 + $0x4] sm:$0xf]
        %v4354 = vld [vmem:[%s65 + $0x8] sm:$0xf]
        %v4355 = vld [vmem:[%s65 + $0xc] sm:$0xf]
        %v4356 = vld [vmem:[%s67] sm:$0x1]
        %v4357 = vpack.c.bf16 %v4351, %v4351
        %v4359 = vlaneseq
        %v4360 = vshrl.u32 %v4359, 7
        %v4361 = vsub.s32 0, %v4360
        %v4362 = vrot.slane %v4356, %v4361
        %v4368 = vunpack.c.l.b16 %v4352
        %v4369 = vunpack.c.l.b16 %v4353
        %v4370 = vunpack.c.l.b16 %v4354
        %v4371 = vunpack.c.l.b16 %v4355
        %v4372 = vpack.c.b16 %v4369, %v4368
        %v4373 = vpack.c.b16 %v4371, %v4370
        %v4377 = vsel %vm1229, %v4357, 0
        %4379 = vmatprep.subr.bf16.mxu0 0
        %4380 = vmatpush1.bf16.msra.mxu0 0
        %4381 = vmatprep.subr.bf16.mxu0 0
        %4382 = vmatpush1.bf16.msra.mxu0 0
        %4383 = vmatprep.subr.bf16.mxu0 0
        %4384 = vmatpush1.bf16.msra.mxu0 0
        %4385 = vmatprep.subr.bf16.mxu0 0
        %4386 = vmatpush1.bf16.msra.mxu0 0
        %4387 = vmatprep.subr.bf16.mxu0 0
        %4388 = vmatpush1.bf16.msra.mxu0 0
        %4389 = vmatprep.subr.bf16.mxu0 0
        %4390 = vmatpush1.bf16.msra.mxu0 0
        %4391 = vmatprep.subr.bf16.mxu0 0
        %4392 = vmatpush1.bf16.msra.mxu0 %v4373
        %4393 = vmatprep.subr.bf16.mxu0 0
        %4394 = vmatpush1.bf16.msra.mxu0 %v4372
        %4395 = vmatprep.subr.bf16.mxu0 0
        %4396 = vmatpush2.bf16.msra.mxu0 0
        %4397 = vmatprep.subr.bf16.mxu0 0
        %4398 = vmatpush2.bf16.msra.mxu0 0
        %4399 = vmatprep.subr.bf16.mxu0 0
        %4400 = vmatpush2.bf16.msra.mxu0 0
        %4401 = vmatprep.subr.bf16.mxu0 0
        %4402 = vmatpush2.bf16.msra.mxu0 0
        %4403 = vmatprep.subr.bf16.mxu0 0
        %4404 = vmatpush2.bf16.msra.mxu0 0
        %4405 = vmatprep.subr.bf16.mxu0 0
        %4406 = vmatpush2.bf16.msra.mxu0 0
        %4407 = vmatprep.subr.bf16.mxu0 0
        %4408 = vmatpush2.bf16.msra.mxu0 0
        %4409 = vmatprep.subr.bf16.mxu0 0
        %4410 = vmatpush2.bf16.msra.mxu0 0
        %4411 = vmatprep.mubr.bf16.mxu0 0
        %4412 = vmatmul.mubr.bf16.gmra.mxu0 %v4377
        %v4413 = vpop.f32.mrf.mxu0
        %v4414 = vadd.f32 %v4362, %v4413
        %v4415 = vpop.f32.mrf.mxu0
        %v4416 = vpop.f32.mrf.mxu0
        %v4417 = vpop.f32.mrf.mxu0
        %4418 = vdwg.mxu0
        %v4419 = vmul.f32 %v4414, 0.5
        %v4420 = vmul.f32 %v4414, 0.70710677
        %v4421 = verf.f32.pop %v4420
        %v4422 = vadd.f32 %v4421, 1.0
        %v4423 = vmul.f32 %v4419, %v4422
        %v4424 = vld [vmem:[%s69] sm:$0xf]
        %v4425 = vld [vmem:[%s69 + $0x4] sm:$0xf]
        %v4426 = vld [vmem:[%s69 + $0x8] sm:$0xf]
        %v4427 = vld [vmem:[%s69 + $0xc] sm:$0xf]
        %v4428 = vld [vmem:[%s69 + $0x10] sm:$0xf]
        %v4429 = vld [vmem:[%s69 + $0x14] sm:$0xf]
        %v4430 = vld [vmem:[%s69 + $0x18] sm:$0xf]
        %v4431 = vld [vmem:[%s69 + $0x1c] sm:$0xf]
        %v4432 = vld [vmem:[%s71] sm:$0x1]
        %v4433 = vpack.c.bf16 %v4423, %v4423
        %v4435 = vlaneseq
        %v4436 = vshrl.u32 %v4435, 7
        %v4437 = vsub.s32 0, %v4436
        %v4438 = vrot.slane %v4432, %v4437
        %v4448 = vunpack.c.l.b16 %v4424
        %v4449 = vunpack.c.l.b16 %v4425
        %v4450 = vunpack.c.l.b16 %v4426
        %v4451 = vunpack.c.l.b16 %v4427
        %v4452 = vunpack.c.l.b16 %v4428
        %v4453 = vunpack.c.l.b16 %v4429
        %v4454 = vunpack.c.l.b16 %v4430
        %v4455 = vunpack.c.l.b16 %v4431
        %v4456 = vpack.c.b16 %v4449, %v4448
        %v4457 = vpack.c.b16 %v4451, %v4450
        %v4458 = vpack.c.b16 %v4453, %v4452
        %v4459 = vpack.c.b16 %v4455, %v4454
        %v4465 = vsel %vm2829, %v4433, 0
        %4467 = vmatprep.subr.bf16.mxu0 0
        %4468 = vmatpush1.bf16.msra.mxu0 0
        %4469 = vmatprep.subr.bf16.mxu0 0
        %4470 = vmatpush1.bf16.msra.mxu0 0
        %4471 = vmatprep.subr.bf16.mxu0 0
        %4472 = vmatpush1.bf16.msra.mxu0 0
        %4473 = vmatprep.subr.bf16.mxu0 0
        %4474 = vmatpush1.bf16.msra.mxu0 0
        %4475 = vmatprep.subr.bf16.mxu0 0
        %4476 = vmatpush1.bf16.msra.mxu0 %v4459
        %4477 = vmatprep.subr.bf16.mxu0 0
        %4478 = vmatpush1.bf16.msra.mxu0 %v4458
        %4479 = vmatprep.subr.bf16.mxu0 0
        %4480 = vmatpush1.bf16.msra.mxu0 %v4457
        %4481 = vmatprep.subr.bf16.mxu0 0
        %4482 = vmatpush1.bf16.msra.mxu0 %v4456
        %4483 = vmatprep.subr.bf16.mxu0 0
        %4484 = vmatpush2.bf16.msra.mxu0 0
        %4485 = vmatprep.subr.bf16.mxu0 0
        %4486 = vmatpush2.bf16.msra.mxu0 0
        %4487 = vmatprep.subr.bf16.mxu0 0
        %4488 = vmatpush2.bf16.msra.mxu0 0
        %4489 = vmatprep.subr.bf16.mxu0 0
        %4490 = vmatpush2.bf16.msra.mxu0 0
        %4491 = vmatprep.subr.bf16.mxu0 0
        %4492 = vmatpush2.bf16.msra.mxu0 0
        %4493 = vmatprep.subr.bf16.mxu0 0
        %4494 = vmatpush2.bf16.msra.mxu0 0
        %4495 = vmatprep.subr.bf16.mxu0 0
        %4496 = vmatpush2.bf16.msra.mxu0 0
        %4497 = vmatprep.subr.bf16.mxu0 0
        %4498 = vmatpush2.bf16.msra.mxu0 0
        %4499 = vmatprep.mubr.bf16.mxu0 0
        %4500 = vmatmul.mubr.bf16.gmra.mxu0 %v4465
        %v4501 = vpop.f32.mrf.mxu0
        %v4502 = vadd.f32 %v4438, %v4501
        %v4503 = vpop.f32.mrf.mxu0
        %v4504 = vpop.f32.mrf.mxu0
        %v4505 = vpop.f32.mrf.mxu0
        %4506 = vdwg.mxu0
        %v4507 = vadd.f32 %v4351, %v4502
        %v4508 = vld [vmem:[%s73] sm:$0x1]
        %v4509 = vld [vmem:[%s75] sm:$0x1]
        %v4510 = vsel %vm1229, %v4507, 0.0
        %4511 = vadd.xlane.f32.xlu0 %v4510
        %v4512 = vpop.xlane.xlu0 %4511
        %v4513 = vmul.f32 %v4512, %v1233
        %v4514 = vsub.f32 %v4507, %v4513
        %v4515 = vmul.f32 %v4514, %v4514
        %v4516 = vsel %vm1229, %v4515, 0.0
        %4517 = vadd.xlane.f32.xlu0 %v4516
        %v4518 = vpop.xlane.xlu0 %4517
        %v4519 = vmul.f32 %v4518, %v1233
        %v4520 = vadd.f32 %v4519, 1e-12
        %v4521 = vrsqrt.pop %v4520
        %v4522 = vmul.f32 %v4514, %v4521
        %v4524 = vlaneseq
        %v4525 = vshrl.u32 %v4524, 7
        %v4526 = vsub.s32 0, %v4525
        %v4527 = vrot.slane %v4508, %v4526
        %v4529 = vmul.f32 %v4522, %v4527
        %v4531 = vlaneseq
        %v4532 = vshrl.u32 %v4531, 7
        %v4533 = vsub.s32 0, %v4532
        %v4534 = vrot.slane %v4509, %v4533
        %v4536 = vadd.f32 %v4529, %v4534
        %v4537 = vld [vmem:[%s77] sm:$0xf]
        %v4538 = vld [vmem:[%s77 + $0x4] sm:$0xf]
        %v4539 = vld [vmem:[%s77 + $0x8] sm:$0xf]
        %v4540 = vld [vmem:[%s77 + $0xc] sm:$0xf]
        %v4541 = vld [vmem:[%s79] sm:$0x1]
        %v4542 = vpack.c.bf16 %v4536, %v4536
        %v4547 = vunpack.c.l.b16 %v4537
        %v4548 = vunpack.c.l.b16 %v4538
        %v4549 = vunpack.c.l.b16 %v4539
        %v4550 = vunpack.c.l.b16 %v4540
        %v4551 = vpack.c.b16 %v4548, %v4547
        %v4552 = vpack.c.b16 %v4550, %v4549
        %v4556 = vsel %vm1229, %v4542, 0
        %4558 = vmatprep.subr.bf16.mxu0 0
        %4559 = vmatpush1.bf16.msra.mxu0 0
        %4560 = vmatprep.subr.bf16.mxu0 0
        %4561 = vmatpush1.bf16.msra.mxu0 0
        %4562 = vmatprep.subr.bf16.mxu0 0
        %4563 = vmatpush1.bf16.msra.mxu0 0
        %4564 = vmatprep.subr.bf16.mxu0 0
        %4565 = vmatpush1.bf16.msra.mxu0 0
        %4566 = vmatprep.subr.bf16.mxu0 0
        %4567 = vmatpush1.bf16.msra.mxu0 0
        %4568 = vmatprep.subr.bf16.mxu0 0
        %4569 = vmatpush1.bf16.msra.mxu0 0
        %4570 = vmatprep.subr.bf16.mxu0 0
        %4571 = vmatpush1.bf16.msra.mxu0 %v4552
        %4572 = vmatprep.subr.bf16.mxu0 0
        %4573 = vmatpush1.bf16.msra.mxu0 %v4551
        %4574 = vmatprep.subr.bf16.mxu0 0
        %4575 = vmatpush2.bf16.msra.mxu0 0
        %4576 = vmatprep.subr.bf16.mxu0 0
        %4577 = vmatpush2.bf16.msra.mxu0 0
        %4578 = vmatprep.subr.bf16.mxu0 0
        %4579 = vmatpush2.bf16.msra.mxu0 0
        %4580 = vmatprep.subr.bf16.mxu0 0
        %4581 = vmatpush2.bf16.msra.mxu0 0
        %4582 = vmatprep.subr.bf16.mxu0 0
        %4583 = vmatpush2.bf16.msra.mxu0 0
        %4584 = vmatprep.subr.bf16.mxu0 0
        %4585 = vmatpush2.bf16.msra.mxu0 0
        %4586 = vmatprep.subr.bf16.mxu0 0
        %4587 = vmatpush2.bf16.msra.mxu0 0
        %4588 = vmatprep.subr.bf16.mxu0 0
        %4589 = vmatpush2.bf16.msra.mxu0 0
        %4590 = vmatprep.mubr.bf16.mxu0 0
        %4591 = vmatmul.mubr.bf16.gmra.mxu0 %v4556
        %v4592 = vpop.f32.mrf.mxu0
        %v4593 = vadd.f32 %v4541, %v4592
        %v4594 = vpop.f32.mrf.mxu0
        %v4595 = vpop.f32.mrf.mxu0
        %v4596 = vpop.f32.mrf.mxu0
        %4597 = vdwg.mxu0
        %vm4598 = vcmask 24576
        %4599 = vst.msk [vmem:[%s1178] sm:$0x1] %vm4598, %v4593
        %s4600 = sand.u32 %s933, 1
        %s4601 = scalar_lea.sflag [#allocation6], %s4600
        %s4602 = sand.u32 %s933, 1
        %s4603 = scalar_lea.vmem [#allocation5], %s4602
        // Predicated region
        $region177: #{tpu_custom_call.1} parent=175 // pred_check
          %p4604 = pneg %p943
        $region178: #{tpu_custom_call.1} parent=175 // pred_check_branch
          %4606 = sbr.rel (%p4604) target = $region180
        $region179: #{tpu_custom_call.1} parent=175 // pred_region
          %s4608 = ssub.s32 16, 16
          %4609 = vsyncadd %s4601, %s4608
          %s4610 = smul.addr %s101, 16
          %s4611 = scalar_lea.hbm %s81, %s4610
          %s4613 = sshll.u32 %s4603, 4
          %s4614 = int_to_ptr.vmem [resolvable:$true] %s4613
          %4616 = dma.vmem_to_hbm [thread:$0]  %s4614, 16, %s4611, %s4601
        $region180: #{tpu_custom_call.1} parent=175 // pred_fallthru
          _
      $region176: #{tpu_custom_call.1} parent=5 // pred_fallthru
        _
      %p4617 = scmp.le.s32.totalorder 2, %s96
      // Predicated region
      $region181: #{tpu_custom_call.1} parent=5 // pred_check
        %p4618 = pneg %p4617
      $region182: #{tpu_custom_call.1} parent=5 // pred_check_branch
        %4620 = sbr.rel (%p4618) target = $region184
      $region183: #{tpu_custom_call.1} parent=5 // pred_region
        %s4621 = ssub.s32 %s96, 2
        // Predicated region
        $region185: #{tpu_custom_call.1} parent=183 // pred_check
          %p4622 = pneg %p949
        $region186: #{tpu_custom_call.1} parent=183 // pred_check_branch
          %4624 = sbr.rel (%p4622) target = $region188
        $region187: #{tpu_custom_call.1} parent=183 // pred_region
          %s4625 = sand.u32 %s934, 1
          %s4626 = scalar_lea.sflag [#allocation6], %s4625
          %s4627 = sand.u32 %s934, 1
          %s4628 = scalar_lea.vmem [#allocation5], %s4627
          %4629 = dma.done %s4626, 16
        $region188: #{tpu_custom_call.1} parent=183 // pred_fallthru
          _
      $region184: #{tpu_custom_call.1} parent=5 // pred_fallthru
        _
    $region6: #{tpu_custom_call.1} parent=1 // loop_footer
      %s100 = sadd.s32 1, %s96
    $region7: #{tpu_custom_call.1} parent=1 // loop_footer_branch
      %95 = sbr.rel target = $region3
    $region8: #{tpu_custom_call.1} parent=1 // loop_exit
      _
    %4630 = vsyncpa [#allocation6], 1
    %s4631 = scalar_lea.sflag [#allocation6], 1
    %4632 = vsyncpa %s4631, 1

</llo_original>
